<compile_context>
chip_gen: v5e
topology: v5e:2x2
jax: 0.10.0
libtpu: 0.0.40
codegen_flags: <defaults>
</compile_context>

<pallas_src>
import math

import jax
import jax.numpy as jnp
from jax.experimental import pallas as pl
from jax.experimental.pallas import tpu as pltpu

# ----------------------------- configuration -----------------------------
B = 2              # batch
IN_CH = 4          # cfg.in_channels
IMG = 16           # cfg.image_size
PATCH = 4          # cfg.patch_size
EMBED = 32         # cfg.hidden_channels
OUT_DIM = 8        # cfg.embed_dim (out_proj output dim)
NUM_HEADS = 4
HEAD_DIM = EMBED // NUM_HEADS
MID = 64           # cfg.mid_dim
NUM_LAYERS = 2
SAMPLE_STEP = 4    # cfg.sample_step == cfg.num_extra_token
THETA_BASE = 10000.0

NUM_H_PATCH = IMG // PATCH
NUM_W_PATCH = IMG // PATCH
NUM_PATCH = NUM_H_PATCH * NUM_W_PATCH      # 16
SEQ = NUM_PATCH + SAMPLE_STEP              # 20
NTOT = B * SEQ                             # 40 (batch-flattened sequence)
NPAT = B * NUM_PATCH                       # 32 (patch rows; tokens are the last 8 rows)
PATCH_DIM = IN_CH * PATCH * PATCH          # 64

DTYPE = jnp.float32          # activations / LN / softmax / residual stream
WDTYPE = jnp.bfloat16        # MXU operands (weights + casted activations)
VEC_W = 128                  # packed bias/LN row width (one lane tile)
NEG_INF = -1e30


# ----------------------------- kernel helpers -----------------------------
def _layernorm(x, w, b, eps=1e-5):
    mu = jnp.mean(x, axis=-1, keepdims=True)
    xc = x - mu
    var = jnp.mean(xc * xc, axis=-1, keepdims=True)
    return xc * jax.lax.rsqrt(var + eps) * w + b


def _softmax_last(x):
    m = jnp.max(x, axis=-1, keepdims=True)
    e = jnp.exp(x - m)
    return e * pl.reciprocal(jnp.sum(e, axis=-1, keepdims=True), approx=True)


# ----------------------------- fused Pallas kernel -----------------------------
def _encoder_kernel(patches_ref, base_ref, mask_ref, w_pe_ref, w_big_ref, w3_ref,
                    vec_ref, w_out_ref, fin_ref, o_ref):
    D, hd = EMBED, HEAD_DIM
    bf16 = jnp.bfloat16
    neg_mask = mask_ref[...]        # (NTOT, NTOT) precomputed cross-batch mask

    # --- patch embed on the zero-padded (NTOT, PATCH_DIM) slab.  Token rows of
    #     `patches` are zero; `base` carries conv-bias + sin-cos APE on the patch
    #     rows and extra_token + APE on the token rows (token_first=False, 'concat').
    x = jnp.dot(patches_ref[...], w_pe_ref[...],
                preferred_element_type=jnp.float32) + base_ref[...]    # (NTOT, D) f32

    for l in range(NUM_LAYERS):                 # static unroll, weights resident in VMEM
        wl = w_big_ref[l]                       # (D, 256) bf16: [wqkv(Q pre-scaled)|wo|w1|w2]
        vl = vec_ref[l]                         # (4, 128) f32 : LN params + biases

        # ---------- token mixer: pre-norm multi-head softmax attention ----------
        h = _layernorm(x, vl[0:1, 0:D], vl[0:1, D:2 * D])
        qkv = jnp.dot(h.astype(bf16), wl[:, 0:3 * D],
                      preferred_element_type=jnp.float32) + vl[1:2, 0:3 * D]

        heads = []
        for hh in range(NUM_HEADS):             # per-head (NTOT,NTOT) score/softmax/PV
            c0 = hh * hd
            qh = qkv[:, c0:c0 + hd].astype(bf16)              # scale already folded in
            kh = qkv[:, D + c0:D + c0 + hd].astype(bf16)
            vh = qkv[:, 2 * D + c0:2 * D + c0 + hd].astype(bf16)   # static lane slice
            s = jax.lax.dot_general(qh, kh, (((1,), (1,)), ((), ())),
                                    preferred_element_type=jnp.float32)
            p = _softmax_last(s + neg_mask)
            heads.append(jnp.dot(p.astype(bf16), vh,          # (NTOT, hd)
                                 preferred_element_type=jnp.float32))
        pv = jnp.concatenate(heads, axis=-1)                  # (NTOT, D), head lane blocks

        attn = jnp.dot(pv.astype(bf16), wl[:, 3 * D:4 * D],   # fused out_proj
                       preferred_element_type=jnp.float32) + vl[1:2, 3 * D:4 * D]
        x = x + attn

        # ---------- channel mixer: pre-norm GLU  w3(silu(w1 x) * w2 x) ----------
        h = _layernorm(x, vl[0:1, 2 * D:3 * D], vl[0:1, 3 * D:4 * D])
        ug = jnp.dot(h.astype(bf16), wl[:, 4 * D:4 * D + 2 * MID],     # fused w1|w2
                     preferred_element_type=jnp.float32) + vl[2:3, 0:2 * MID]
        glu = jax.nn.silu(ug[:, 0:MID]) * ug[:, MID:2 * MID]
        x = x + jnp.dot(glu.astype(bf16), w3_ref[l],
                        preferred_element_type=jnp.float32) + vl[3:4, 0:D]

    # --- epilogue: only the 8 extra-token rows (sublane-aligned tail slice),
    #     then final norm + out_proj, one aligned store.
    xt = x[NPAT:NTOT, :]                                       # (B*SAMPLE_STEP, D)
    fv = fin_ref[...]
    h = _layernorm(xt, fv[:, 0:D], fv[:, D:2 * D])
    out = jnp.dot(h.astype(bf16), w_out_ref[...],
                  preferred_element_type=jnp.float32) + fv[:, 2 * D:2 * D + OUT_DIM]
    o_ref[...] = out.astype(o_ref.dtype)


def _full_spec(shape):
    nd = len(shape)
    return pl.BlockSpec(shape, lambda i, _nd=nd: (0,) * _nd)


def _encoder_fused(patches_full, base_full, neg_mask, w_pe, w_big, w3s, vecs,
                   w_out, fin):
    ins = (patches_full, base_full, neg_mask, w_pe, w_big, w3s, vecs, w_out, fin)
    return pl.pallas_call(
        _encoder_kernel,
        out_shape=jax.ShapeDtypeStruct((B * SAMPLE_STEP, OUT_DIM), DTYPE),
        grid=(1,),
        in_specs=[_full_spec(a.shape) for a in ins],
        out_specs=pl.BlockSpec((B * SAMPLE_STEP, OUT_DIM), lambda i: (0, 0)),
        compiler_params=pltpu.CompilerParams(dimension_semantics=("arbitrary",)),
    )(*ins)


# ----------------------------- params -----------------------------
def sincos_pe(seq_len, dim, base):
    """SinCosPe over a 1D shape (seq_len,): [sin(pos*theta), cos(pos*theta)]."""
    pos = jnp.arange(seq_len, dtype=jnp.float32)[:, None]
    idx = jnp.arange(dim // 2, dtype=jnp.float32)[None, :]
    theta = base ** (-2.0 * idx / dim)
    ang = pos * theta
    return jnp.concatenate([jnp.sin(ang), jnp.cos(ang)], axis=-1)   # (n, d)


def init_params(key):
    std = 0.02
    rescale = 1.0 / math.sqrt(2 * NUM_LAYERS)   # use_rescale on out_proj / w3

    def nrm(k, shape, s=std):
        return (jax.random.normal(k, shape, jnp.float32) * s).astype(DTYPE)

    keys = iter(jax.random.split(key, 3 + 5 * NUM_LAYERS))
    params = {
        "w_pe": nrm(next(keys), (PATCH_DIM, EMBED)),
        "b_pe": jnp.zeros((1, EMBED), DTYPE),
        "extra_token": nrm(next(keys), (SAMPLE_STEP, EMBED), EMBED ** -0.5),
        "final_ln_w": jnp.ones((EMBED,), DTYPE),
        "final_ln_b": jnp.zeros((EMBED,), DTYPE),
        "w_out": nrm(next(keys), (EMBED, OUT_DIM)),
        "b_out": jnp.zeros((OUT_DIM,), DTYPE),
        "layers": [],
    }
    for _ in range(NUM_LAYERS):
        lp = {
            "ln1_w": jnp.ones((EMBED,), DTYPE), "ln1_b": jnp.zeros((EMBED,), DTYPE),
            "wqkv": nrm(next(keys), (EMBED, 3 * EMBED)),
            "bqkv": jnp.zeros((3 * EMBED,), DTYPE),
            "wo": nrm(next(keys), (EMBED, EMBED)) * rescale,
            "bo": jnp.zeros((EMBED,), DTYPE),
            "ln2_w": jnp.ones((EMBED,), DTYPE), "ln2_b": jnp.zeros((EMBED,), DTYPE),
            "w1": nrm(next(keys), (EMBED, MID)), "b1": jnp.zeros((MID,), DTYPE),
            "w2": nrm(next(keys), (EMBED, MID)), "b2": jnp.zeros((MID,), DTYPE),
            "w3": nrm(next(keys), (MID, EMBED)) * rescale,
            "b3": jnp.zeros((EMBED,), DTYPE),
        }
        params["layers"].append(lp)
    return params


# ----------------------------- one-time packing (hoisted out of per-call path) ----
def prepare(params):
    """Pack weights into VMEM-friendly slabs and precompute per-position base +
    cross-batch attention mask.  Runs ONCE; the jitted forward only consumes it."""
    scale = HEAD_DIM ** -0.5
    wb, w3s, vecs = [], [], []
    for lp in params["layers"]:
        wqkv = lp["wqkv"].at[:, :EMBED].multiply(scale)     # fold attn scale into Q
        bqkv = lp["bqkv"].at[:EMBED].multiply(scale)
        wb.append(jnp.concatenate([wqkv, lp["wo"], lp["w1"], lp["w2"]], axis=1))
        w3s.append(lp["w3"])
        row0 = jnp.concatenate([lp["ln1_w"], lp["ln1_b"], lp["ln2_w"], lp["ln2_b"]])
        row1 = jnp.concatenate([bqkv, lp["bo"]])
        row2 = jnp.concatenate([lp["b1"], lp["b2"]])
        row3 = jnp.concatenate([lp["b3"], jnp.zeros((VEC_W - EMBED,), DTYPE)])
        vecs.append(jnp.stack([row0, row1, row2, row3]))
    fin = jnp.concatenate(
        [params["final_ln_w"], params["final_ln_b"], params["b_out"],
         jnp.zeros((VEC_W - 2 * EMBED - OUT_DIM,), DTYPE)])[None, :]

    # Per-position additive term in the reordered layout
    # [all patch rows (B*16) | all extra-token rows (B*4)].
    pe = sincos_pe(SEQ, EMBED, THETA_BASE)
    base_patch = pe[:NUM_PATCH] + params["b_pe"]                 # (16, D)
    base_token = pe[NUM_PATCH:] + params["extra_token"]          # (4, D)
    base_full = jnp.concatenate(
        [jnp.tile(base_patch, (B, 1)), jnp.tile(base_token, (B, 1))], axis=0
    ).astype(DTYPE)                                              # (NTOT, D)

    # Cross-batch additive mask (attention is block-wise per batch element).
    batch_id = jnp.concatenate([jnp.repeat(jnp.arange(B), NUM_PATCH),
                                jnp.repeat(jnp.arange(B), SAMPLE_STEP)])
    neg_mask = jnp.where(batch_id[:, None] == batch_id[None, :],
                         0.0, NEG_INF).astype(jnp.float32)       # (NTOT, NTOT)

    return {
        "w_pe": params["w_pe"].astype(WDTYPE),        # (PATCH_DIM, EMBED)  bf16
        "w_big": jnp.stack(wb).astype(WDTYPE),        # (L, EMBED, 256)     bf16
        "w3": jnp.stack(w3s).astype(WDTYPE),          # (L, MID, EMBED)     bf16
        "vecs": jnp.stack(vecs).astype(DTYPE),        # (L, 4, 128)         f32
        "w_out": params["w_out"].astype(WDTYPE),      # (EMBED, OUT_DIM)    bf16
        "fin": fin.astype(DTYPE),                     # (1, 128)            f32
        "base": base_full,                            # (NTOT, EMBED)       f32
        "neg_mask": neg_mask,                         # (NTOT, NTOT)        f32
    }


# ----------------------------- forward (jitted per-call path) -----------------------------
def forward(packed, x):
    """x: (B, C, H, W) NCHW -> (B, SAMPLE_STEP, OUT_DIM). Eval-mode forward."""
    Bq, C, H, W = x.shape
    p = PATCH
    nh, nw = H // p, W // p

    # Patchify (layout only; Conv2d k=s=p becomes a matmul on flattened patches),
    # then zero-pad the token rows so the patch-embed matmul runs on the full
    # (NTOT, PATCH_DIM) slab inside the kernel (token rows contribute 0).
    patches = (x.reshape(Bq, C, nh, p, nw, p)
               .transpose(0, 2, 4, 1, 3, 5)
               .reshape(Bq * nh * nw, C * p * p))
    patches_full = jnp.concatenate(
        [patches, jnp.zeros((Bq * SAMPLE_STEP, PATCH_DIM), patches.dtype)],
        axis=0).astype(WDTYPE)

    out = _encoder_fused(patches_full, packed["base"], packed["neg_mask"],
                         packed["w_pe"], packed["w_big"], packed["w3"],
                         packed["vecs"], packed["w_out"], packed["fin"])
    return out.reshape(Bq, SAMPLE_STEP, OUT_DIM)


# TODO(synk): training-mode random_masking (mask_ratio > 0) is not implemented;
# this is the eval-mode forward path.

if __name__ == "__main__":
    key = jax.random.PRNGKey(0)
    pkey, xkey = jax.random.split(key)
    params = init_params(pkey)
    packed = prepare(params)                      # one-time packing, outside jit
    x = jax.random.normal(xkey, (B, IN_CH, IMG, IMG), dtype=DTYPE)
    fwd = jax.jit(forward)
    out = fwd(packed, x)
    jax.block_until_ready(out)
    assert out.shape == (B, SAMPLE_STEP, OUT_DIM), out.shape
    assert bool(jnp.all(jnp.isfinite(out)))
    print("KERNEL_OK")
</pallas_src>

<mosaic_0001>
module attributes {stable_mosaic.version = 11 : i64} {
  func.func @_encoder_kernel(%arg0: i32, %arg1: memref<40x64xbf16, #tpu.memory_space<vmem>>, %arg2: memref<40x32xf32, #tpu.memory_space<vmem>>, %arg3: memref<40x40xf32, #tpu.memory_space<vmem>>, %arg4: memref<64x32xbf16, #tpu.memory_space<vmem>>, %arg5: memref<2x32x256xbf16, #tpu.memory_space<vmem>>, %arg6: memref<2x64x32xbf16, #tpu.memory_space<vmem>>, %arg7: memref<2x4x128xf32, #tpu.memory_space<vmem>>, %arg8: memref<32x8xbf16, #tpu.memory_space<vmem>>, %arg9: memref<1x128xf32, #tpu.memory_space<vmem>>, %arg10: memref<8x8xf32, #tpu.memory_space<vmem>>) attributes {dimension_semantics = [#tpu.dimension_semantics<arbitrary>], iteration_bounds = array<i64: 1>, scalar_prefetch = 0 : i64, scratch_operands = 0 : i64, tpu.core_type = #tpu.core_type<tc>, window_params = [{pipeline_mode = #tpu.pipeline_mode<synchronous>, transform_indices = @transform_0, window_bounds = array<i64: 40, 64>}, {pipeline_mode = #tpu.pipeline_mode<synchronous>, transform_indices = @transform_1, window_bounds = array<i64: 40, 32>}, {pipeline_mode = #tpu.pipeline_mode<synchronous>, transform_indices = @transform_2, window_bounds = array<i64: 40, 40>}, {pipeline_mode = #tpu.pipeline_mode<synchronous>, transform_indices = @transform_3, window_bounds = array<i64: 64, 32>}, {pipeline_mode = #tpu.pipeline_mode<synchronous>, transform_indices = @transform_4, window_bounds = array<i64: 2, 32, 256>}, {pipeline_mode = #tpu.pipeline_mode<synchronous>, transform_indices = @transform_5, window_bounds = array<i64: 2, 64, 32>}, {pipeline_mode = #tpu.pipeline_mode<synchronous>, transform_indices = @transform_6, window_bounds = array<i64: 2, 4, 128>}, {pipeline_mode = #tpu.pipeline_mode<synchronous>, transform_indices = @transform_7, window_bounds = array<i64: 32, 8>}, {pipeline_mode = #tpu.pipeline_mode<synchronous>, transform_indices = @transform_8, window_bounds = array<i64: 1, 128>}, {pipeline_mode = #tpu.pipeline_mode<synchronous>, transform_indices = @transform_9, window_bounds = array<i64: 8, 8>}]} {
    %c0 = arith.constant 0 : index
    %c0_0 = arith.constant 0 : index
    %0 = vector.load %arg3[%c0, %c0_0] : memref<40x40xf32, #tpu.memory_space<vmem>>, vector<40x40xf32>
    %c0_1 = arith.constant 0 : index
    %c0_2 = arith.constant 0 : index
    %1 = vector.load %arg1[%c0_1, %c0_2] : memref<40x64xbf16, #tpu.memory_space<vmem>>, vector<40x64xbf16>
    %c0_3 = arith.constant 0 : index
    %c0_4 = arith.constant 0 : index
    %2 = vector.load %arg4[%c0_3, %c0_4] : memref<64x32xbf16, #tpu.memory_space<vmem>>, vector<64x32xbf16>
    %cst = arith.constant dense<0.000000e+00> : vector<40x32xf32>
    %3 = tpu.matmul %1, %2, %cst {dimension_numbers = #tpu.dot_dimension_numbers<[1], [0], [0], [1], [0, 0, 1, 1], [], []>} : vector<40x64xbf16>, vector<64x32xbf16>, vector<40x32xf32> -> vector<40x32xf32>
    %c0_5 = arith.constant 0 : index
    %c0_6 = arith.constant 0 : index
    %4 = vector.load %arg2[%c0_5, %c0_6] : memref<40x32xf32, #tpu.memory_space<vmem>>, vector<40x32xf32>
    %5 = arith.addf %3, %4 : vector<40x32xf32>
    %c0_7 = arith.constant 0 : index
    %c0_8 = arith.constant 0 : index
    %c0_9 = arith.constant 0 : index
    %6 = vector.load %arg5[%c0_7, %c0_8, %c0_9] : memref<2x32x256xbf16, #tpu.memory_space<vmem>>, vector<1x32x256xbf16>
    %7 = vector.shape_cast %6 : vector<1x32x256xbf16> to vector<32x256xbf16>
    %c0_10 = arith.constant 0 : index
    %c0_11 = arith.constant 0 : index
    %c0_12 = arith.constant 0 : index
    %8 = vector.load %arg7[%c0_10, %c0_11, %c0_12] : memref<2x4x128xf32, #tpu.memory_space<vmem>>, vector<1x4x128xf32>
    %9 = vector.shape_cast %8 : vector<1x4x128xf32> to vector<4x128xf32>
    %10 = vector.extract_strided_slice %9 {offsets = [0, 0], sizes = [1, 32], strides = [1, 1]} : vector<4x128xf32> to vector<1x32xf32>
    %11 = vector.extract_strided_slice %9 {offsets = [0, 32], sizes = [1, 32], strides = [1, 1]} : vector<4x128xf32> to vector<1x32xf32>
    %cst_13 = arith.constant dense<0.000000e+00> : vector<40xf32>
    %12 = vector.multi_reduction <add>, %5, %cst_13 [1] : vector<40x32xf32> to vector<40xf32>
    %13 = vector.shape_cast %12 : vector<40xf32> to vector<40x1xf32>
    %cst_14 = arith.constant 3.200000e+01 : f32
    %14 = vector.broadcast %cst_14 : f32 to vector<40x1xf32>
    %15 = arith.divf %13, %14 : vector<40x1xf32>
    %16 = vector.broadcast %15 : vector<40x1xf32> to vector<40x32xf32>
    %17 = arith.subf %5, %16 : vector<40x32xf32>
    %18 = arith.mulf %17, %17 : vector<40x32xf32>
    %cst_15 = arith.constant dense<0.000000e+00> : vector<40xf32>
    %19 = vector.multi_reduction <add>, %18, %cst_15 [1] : vector<40x32xf32> to vector<40xf32>
    %20 = vector.shape_cast %19 : vector<40xf32> to vector<40x1xf32>
    %cst_16 = arith.constant 3.200000e+01 : f32
    %21 = vector.broadcast %cst_16 : f32 to vector<40x1xf32>
    %22 = arith.divf %20, %21 : vector<40x1xf32>
    %cst_17 = arith.constant 9.99999974E-6 : f32
    %23 = vector.broadcast %cst_17 : f32 to vector<40x1xf32>
    %24 = arith.addf %22, %23 : vector<40x1xf32>
    %25 = math.rsqrt %24 : vector<40x1xf32>
    %26 = vector.broadcast %25 : vector<40x1xf32> to vector<40x32xf32>
    %27 = arith.mulf %17, %26 : vector<40x32xf32>
    %28 = vector.broadcast %10 : vector<1x32xf32> to vector<40x32xf32>
    %29 = arith.mulf %27, %28 : vector<40x32xf32>
    %30 = vector.broadcast %11 : vector<1x32xf32> to vector<40x32xf32>
    %31 = arith.addf %29, %30 : vector<40x32xf32>
    %32 = arith.truncf %31 : vector<40x32xf32> to vector<40x32xbf16>
    %33 = vector.extract_strided_slice %7 {offsets = [0, 0], sizes = [32, 96], strides = [1, 1]} : vector<32x256xbf16> to vector<32x96xbf16>
    %cst_18 = arith.constant dense<0.000000e+00> : vector<40x96xf32>
    %34 = tpu.matmul %32, %33, %cst_18 {dimension_numbers = #tpu.dot_dimension_numbers<[1], [0], [0], [1], [0, 0, 1, 1], [], []>} : vector<40x32xbf16>, vector<32x96xbf16>, vector<40x96xf32> -> vector<40x96xf32>
    %35 = vector.extract_strided_slice %9 {offsets = [1, 0], sizes = [1, 96], strides = [1, 1]} : vector<4x128xf32> to vector<1x96xf32>
    %36 = vector.broadcast %35 : vector<1x96xf32> to vector<40x96xf32>
    %37 = arith.addf %34, %36 : vector<40x96xf32>
    %38 = vector.extract_strided_slice %37 {offsets = [0, 0], sizes = [40, 8], strides = [1, 1]} : vector<40x96xf32> to vector<40x8xf32>
    %39 = arith.truncf %38 : vector<40x8xf32> to vector<40x8xbf16>
    %40 = vector.extract_strided_slice %37 {offsets = [0, 32], sizes = [40, 8], strides = [1, 1]} : vector<40x96xf32> to vector<40x8xf32>
    %41 = arith.truncf %40 : vector<40x8xf32> to vector<40x8xbf16>
    %42 = vector.extract_strided_slice %37 {offsets = [0, 64], sizes = [40, 8], strides = [1, 1]} : vector<40x96xf32> to vector<40x8xf32>
    %43 = arith.truncf %42 : vector<40x8xf32> to vector<40x8xbf16>
    %cst_19 = arith.constant dense<0.000000e+00> : vector<40x40xf32>
    %44 = tpu.matmul %39, %41, %cst_19 {dimension_numbers = #tpu.dot_dimension_numbers<[1], [1], [0], [0], [0, 0, 1, 0], [], []>} : vector<40x8xbf16>, vector<40x8xbf16>, vector<40x40xf32> -> vector<40x40xf32>
    %45 = arith.addf %44, %0 : vector<40x40xf32>
    %cst_20 = arith.constant dense<0xFF800000> : vector<40xf32>
    %46 = vector.multi_reduction <maximumf>, %45, %cst_20 [1] : vector<40x40xf32> to vector<40xf32>
    %47 = vector.shape_cast %46 : vector<40xf32> to vector<40x1xf32>
    %48 = vector.broadcast %47 : vector<40x1xf32> to vector<40x40xf32>
    %49 = arith.subf %45, %48 : vector<40x40xf32>
    %50 = math.exp %49 : vector<40x40xf32>
    %cst_21 = arith.constant dense<0.000000e+00> : vector<40xf32>
    %51 = vector.multi_reduction <add>, %50, %cst_21 [1] : vector<40x40xf32> to vector<40xf32>
    %52 = vector.shape_cast %51 : vector<40xf32> to vector<40x1xf32>
    %53 = tpu.reciprocal %52 {approx = true} : vector<40x1xf32> -> vector<40x1xf32>
    %54 = vector.broadcast %53 : vector<40x1xf32> to vector<40x40xf32>
    %55 = arith.mulf %50, %54 : vector<40x40xf32>
    %56 = arith.truncf %55 : vector<40x40xf32> to vector<40x40xbf16>
    %cst_22 = arith.constant dense<0.000000e+00> : vector<40x8xf32>
    %57 = tpu.matmul %56, %43, %cst_22 {dimension_numbers = #tpu.dot_dimension_numbers<[1], [0], [0], [1], [0, 0, 1, 1], [], []>} : vector<40x40xbf16>, vector<40x8xbf16>, vector<40x8xf32> -> vector<40x8xf32>
    %58 = vector.extract_strided_slice %37 {offsets = [0, 8], sizes = [40, 8], strides = [1, 1]} : vector<40x96xf32> to vector<40x8xf32>
    %59 = arith.truncf %58 : vector<40x8xf32> to vector<40x8xbf16>
    %60 = vector.extract_strided_slice %37 {offsets = [0, 40], sizes = [40, 8], strides = [1, 1]} : vector<40x96xf32> to vector<40x8xf32>
    %61 = arith.truncf %60 : vector<40x8xf32> to vector<40x8xbf16>
    %62 = vector.extract_strided_slice %37 {offsets = [0, 72], sizes = [40, 8], strides = [1, 1]} : vector<40x96xf32> to vector<40x8xf32>
    %63 = arith.truncf %62 : vector<40x8xf32> to vector<40x8xbf16>
    %cst_23 = arith.constant dense<0.000000e+00> : vector<40x40xf32>
    %64 = tpu.matmul %59, %61, %cst_23 {dimension_numbers = #tpu.dot_dimension_numbers<[1], [1], [0], [0], [0, 0, 1, 0], [], []>} : vector<40x8xbf16>, vector<40x8xbf16>, vector<40x40xf32> -> vector<40x40xf32>
    %65 = arith.addf %64, %0 : vector<40x40xf32>
    %cst_24 = arith.constant dense<0xFF800000> : vector<40xf32>
    %66 = vector.multi_reduction <maximumf>, %65, %cst_24 [1] : vector<40x40xf32> to vector<40xf32>
    %67 = vector.shape_cast %66 : vector<40xf32> to vector<40x1xf32>
    %68 = vector.broadcast %67 : vector<40x1xf32> to vector<40x40xf32>
    %69 = arith.subf %65, %68 : vector<40x40xf32>
    %70 = math.exp %69 : vector<40x40xf32>
    %cst_25 = arith.constant dense<0.000000e+00> : vector<40xf32>
    %71 = vector.multi_reduction <add>, %70, %cst_25 [1] : vector<40x40xf32> to vector<40xf32>
    %72 = vector.shape_cast %71 : vector<40xf32> to vector<40x1xf32>
    %73 = tpu.reciprocal %72 {approx = true} : vector<40x1xf32> -> vector<40x1xf32>
    %74 = vector.broadcast %73 : vector<40x1xf32> to vector<40x40xf32>
    %75 = arith.mulf %70, %74 : vector<40x40xf32>
    %76 = arith.truncf %75 : vector<40x40xf32> to vector<40x40xbf16>
    %cst_26 = arith.constant dense<0.000000e+00> : vector<40x8xf32>
    %77 = tpu.matmul %76, %63, %cst_26 {dimension_numbers = #tpu.dot_dimension_numbers<[1], [0], [0], [1], [0, 0, 1, 1], [], []>} : vector<40x40xbf16>, vector<40x8xbf16>, vector<40x8xf32> -> vector<40x8xf32>
    %78 = vector.extract_strided_slice %37 {offsets = [0, 16], sizes = [40, 8], strides = [1, 1]} : vector<40x96xf32> to vector<40x8xf32>
    %79 = arith.truncf %78 : vector<40x8xf32> to vector<40x8xbf16>
    %80 = vector.extract_strided_slice %37 {offsets = [0, 48], sizes = [40, 8], strides = [1, 1]} : vector<40x96xf32> to vector<40x8xf32>
    %81 = arith.truncf %80 : vector<40x8xf32> to vector<40x8xbf16>
    %82 = vector.extract_strided_slice %37 {offsets = [0, 80], sizes = [40, 8], strides = [1, 1]} : vector<40x96xf32> to vector<40x8xf32>
    %83 = arith.truncf %82 : vector<40x8xf32> to vector<40x8xbf16>
    %cst_27 = arith.constant dense<0.000000e+00> : vector<40x40xf32>
    %84 = tpu.matmul %79, %81, %cst_27 {dimension_numbers = #tpu.dot_dimension_numbers<[1], [1], [0], [0], [0, 0, 1, 0], [], []>} : vector<40x8xbf16>, vector<40x8xbf16>, vector<40x40xf32> -> vector<40x40xf32>
    %85 = arith.addf %84, %0 : vector<40x40xf32>
    %cst_28 = arith.constant dense<0xFF800000> : vector<40xf32>
    %86 = vector.multi_reduction <maximumf>, %85, %cst_28 [1] : vector<40x40xf32> to vector<40xf32>
    %87 = vector.shape_cast %86 : vector<40xf32> to vector<40x1xf32>
    %88 = vector.broadcast %87 : vector<40x1xf32> to vector<40x40xf32>
    %89 = arith.subf %85, %88 : vector<40x40xf32>
    %90 = math.exp %89 : vector<40x40xf32>
    %cst_29 = arith.constant dense<0.000000e+00> : vector<40xf32>
    %91 = vector.multi_reduction <add>, %90, %cst_29 [1] : vector<40x40xf32> to vector<40xf32>
    %92 = vector.shape_cast %91 : vector<40xf32> to vector<40x1xf32>
    %93 = tpu.reciprocal %92 {approx = true} : vector<40x1xf32> -> vector<40x1xf32>
    %94 = vector.broadcast %93 : vector<40x1xf32> to vector<40x40xf32>
    %95 = arith.mulf %90, %94 : vector<40x40xf32>
    %96 = arith.truncf %95 : vector<40x40xf32> to vector<40x40xbf16>
    %cst_30 = arith.constant dense<0.000000e+00> : vector<40x8xf32>
    %97 = tpu.matmul %96, %83, %cst_30 {dimension_numbers = #tpu.dot_dimension_numbers<[1], [0], [0], [1], [0, 0, 1, 1], [], []>} : vector<40x40xbf16>, vector<40x8xbf16>, vector<40x8xf32> -> vector<40x8xf32>
    %98 = vector.extract_strided_slice %37 {offsets = [0, 24], sizes = [40, 8], strides = [1, 1]} : vector<40x96xf32> to vector<40x8xf32>
    %99 = arith.truncf %98 : vector<40x8xf32> to vector<40x8xbf16>
    %100 = vector.extract_strided_slice %37 {offsets = [0, 56], sizes = [40, 8], strides = [1, 1]} : vector<40x96xf32> to vector<40x8xf32>
    %101 = arith.truncf %100 : vector<40x8xf32> to vector<40x8xbf16>
    %102 = vector.extract_strided_slice %37 {offsets = [0, 88], sizes = [40, 8], strides = [1, 1]} : vector<40x96xf32> to vector<40x8xf32>
    %103 = arith.truncf %102 : vector<40x8xf32> to vector<40x8xbf16>
    %cst_31 = arith.constant dense<0.000000e+00> : vector<40x40xf32>
    %104 = tpu.matmul %99, %101, %cst_31 {dimension_numbers = #tpu.dot_dimension_numbers<[1], [1], [0], [0], [0, 0, 1, 0], [], []>} : vector<40x8xbf16>, vector<40x8xbf16>, vector<40x40xf32> -> vector<40x40xf32>
    %105 = arith.addf %104, %0 : vector<40x40xf32>
    %cst_32 = arith.constant dense<0xFF800000> : vector<40xf32>
    %106 = vector.multi_reduction <maximumf>, %105, %cst_32 [1] : vector<40x40xf32> to vector<40xf32>
    %107 = vector.shape_cast %106 : vector<40xf32> to vector<40x1xf32>
    %108 = vector.broadcast %107 : vector<40x1xf32> to vector<40x40xf32>
    %109 = arith.subf %105, %108 : vector<40x40xf32>
    %110 = math.exp %109 : vector<40x40xf32>
    %cst_33 = arith.constant dense<0.000000e+00> : vector<40xf32>
    %111 = vector.multi_reduction <add>, %110, %cst_33 [1] : vector<40x40xf32> to vector<40xf32>
    %112 = vector.shape_cast %111 : vector<40xf32> to vector<40x1xf32>
    %113 = tpu.reciprocal %112 {approx = true} : vector<40x1xf32> -> vector<40x1xf32>
    %114 = vector.broadcast %113 : vector<40x1xf32> to vector<40x40xf32>
    %115 = arith.mulf %110, %114 : vector<40x40xf32>
    %116 = arith.truncf %115 : vector<40x40xf32> to vector<40x40xbf16>
    %cst_34 = arith.constant dense<0.000000e+00> : vector<40x8xf32>
    %117 = tpu.matmul %116, %103, %cst_34 {dimension_numbers = #tpu.dot_dimension_numbers<[1], [0], [0], [1], [0, 0, 1, 1], [], []>} : vector<40x40xbf16>, vector<40x8xbf16>, vector<40x8xf32> -> vector<40x8xf32>
    %118 = tpu.concatenate %57, %77, %97, %117 in 1 : vector<40x8xf32>, vector<40x8xf32>, vector<40x8xf32>, vector<40x8xf32> -> vector<40x32xf32>
    %119 = arith.truncf %118 : vector<40x32xf32> to vector<40x32xbf16>
    %120 = vector.extract_strided_slice %7 {offsets = [0, 96], sizes = [32, 32], strides = [1, 1]} : vector<32x256xbf16> to vector<32x32xbf16>
    %cst_35 = arith.constant dense<0.000000e+00> : vector<40x32xf32>
    %121 = tpu.matmul %119, %120, %cst_35 {dimension_numbers = #tpu.dot_dimension_numbers<[1], [0], [0], [1], [0, 0, 1, 1], [], []>} : vector<40x32xbf16>, vector<32x32xbf16>, vector<40x32xf32> -> vector<40x32xf32>
    %122 = vector.extract_strided_slice %9 {offsets = [1, 96], sizes = [1, 32], strides = [1, 1]} : vector<4x128xf32> to vector<1x32xf32>
    %123 = vector.broadcast %122 : vector<1x32xf32> to vector<40x32xf32>
    %124 = arith.addf %121, %123 : vector<40x32xf32>
    %125 = arith.addf %5, %124 : vector<40x32xf32>
    %126 = vector.extract_strided_slice %9 {offsets = [0, 64], sizes = [1, 32], strides = [1, 1]} : vector<4x128xf32> to vector<1x32xf32>
    %127 = vector.extract_strided_slice %9 {offsets = [0, 96], sizes = [1, 32], strides = [1, 1]} : vector<4x128xf32> to vector<1x32xf32>
    %cst_36 = arith.constant dense<0.000000e+00> : vector<40xf32>
    %128 = vector.multi_reduction <add>, %125, %cst_36 [1] : vector<40x32xf32> to vector<40xf32>
    %129 = vector.shape_cast %128 : vector<40xf32> to vector<40x1xf32>
    %cst_37 = arith.constant 3.200000e+01 : f32
    %130 = vector.broadcast %cst_37 : f32 to vector<40x1xf32>
    %131 = arith.divf %129, %130 : vector<40x1xf32>
    %132 = vector.broadcast %131 : vector<40x1xf32> to vector<40x32xf32>
    %133 = arith.subf %125, %132 : vector<40x32xf32>
    %134 = arith.mulf %133, %133 : vector<40x32xf32>
    %cst_38 = arith.constant dense<0.000000e+00> : vector<40xf32>
    %135 = vector.multi_reduction <add>, %134, %cst_38 [1] : vector<40x32xf32> to vector<40xf32>
    %136 = vector.shape_cast %135 : vector<40xf32> to vector<40x1xf32>
    %cst_39 = arith.constant 3.200000e+01 : f32
    %137 = vector.broadcast %cst_39 : f32 to vector<40x1xf32>
    %138 = arith.divf %136, %137 : vector<40x1xf32>
    %cst_40 = arith.constant 9.99999974E-6 : f32
    %139 = vector.broadcast %cst_40 : f32 to vector<40x1xf32>
    %140 = arith.addf %138, %139 : vector<40x1xf32>
    %141 = math.rsqrt %140 : vector<40x1xf32>
    %142 = vector.broadcast %141 : vector<40x1xf32> to vector<40x32xf32>
    %143 = arith.mulf %133, %142 : vector<40x32xf32>
    %144 = vector.broadcast %126 : vector<1x32xf32> to vector<40x32xf32>
    %145 = arith.mulf %143, %144 : vector<40x32xf32>
    %146 = vector.broadcast %127 : vector<1x32xf32> to vector<40x32xf32>
    %147 = arith.addf %145, %146 : vector<40x32xf32>
    %148 = arith.truncf %147 : vector<40x32xf32> to vector<40x32xbf16>
    %149 = vector.extract_strided_slice %7 {offsets = [0, 128], sizes = [32, 128], strides = [1, 1]} : vector<32x256xbf16> to vector<32x128xbf16>
    %cst_41 = arith.constant dense<0.000000e+00> : vector<40x128xf32>
    %150 = tpu.matmul %148, %149, %cst_41 {dimension_numbers = #tpu.dot_dimension_numbers<[1], [0], [0], [1], [0, 0, 1, 1], [], []>} : vector<40x32xbf16>, vector<32x128xbf16>, vector<40x128xf32> -> vector<40x128xf32>
    %151 = vector.extract_strided_slice %9 {offsets = [2, 0], sizes = [1, 128], strides = [1, 1]} : vector<4x128xf32> to vector<1x128xf32>
    %152 = vector.broadcast %151 : vector<1x128xf32> to vector<40x128xf32>
    %153 = arith.addf %150, %152 : vector<40x128xf32>
    %154 = vector.extract_strided_slice %153 {offsets = [0, 0], sizes = [40, 64], strides = [1, 1]} : vector<40x128xf32> to vector<40x64xf32>
    %155 = arith.negf %154 : vector<40x64xf32>
    %156 = math.exp %155 : vector<40x64xf32>
    %cst_42 = arith.constant 1.000000e+00 : f32
    %157 = vector.broadcast %cst_42 : f32 to vector<40x64xf32>
    %158 = arith.addf %157, %156 : vector<40x64xf32>
    %159 = arith.divf %157, %158 : vector<40x64xf32>
    %160 = arith.mulf %154, %159 : vector<40x64xf32>
    %161 = vector.extract_strided_slice %153 {offsets = [0, 64], sizes = [40, 64], strides = [1, 1]} : vector<40x128xf32> to vector<40x64xf32>
    %162 = arith.mulf %160, %161 : vector<40x64xf32>
    %163 = arith.truncf %162 : vector<40x64xf32> to vector<40x64xbf16>
    %c0_43 = arith.constant 0 : index
    %c0_44 = arith.constant 0 : index
    %c0_45 = arith.constant 0 : index
    %164 = vector.load %arg6[%c0_43, %c0_44, %c0_45] : memref<2x64x32xbf16, #tpu.memory_space<vmem>>, vector<1x64x32xbf16>
    %165 = vector.shape_cast %164 : vector<1x64x32xbf16> to vector<64x32xbf16>
    %cst_46 = arith.constant dense<0.000000e+00> : vector<40x32xf32>
    %166 = tpu.matmul %163, %165, %cst_46 {dimension_numbers = #tpu.dot_dimension_numbers<[1], [0], [0], [1], [0, 0, 1, 1], [], []>} : vector<40x64xbf16>, vector<64x32xbf16>, vector<40x32xf32> -> vector<40x32xf32>
    %167 = arith.addf %125, %166 : vector<40x32xf32>
    %168 = vector.extract_strided_slice %9 {offsets = [3, 0], sizes = [1, 32], strides = [1, 1]} : vector<4x128xf32> to vector<1x32xf32>
    %169 = vector.broadcast %168 : vector<1x32xf32> to vector<40x32xf32>
    %170 = arith.addf %167, %169 : vector<40x32xf32>
    %c1 = arith.constant 1 : index
    %c0_47 = arith.constant 0 : index
    %c0_48 = arith.constant 0 : index
    %171 = vector.load %arg5[%c1, %c0_47, %c0_48] : memref<2x32x256xbf16, #tpu.memory_space<vmem>>, vector<1x32x256xbf16>
    %172 = vector.shape_cast %171 : vector<1x32x256xbf16> to vector<32x256xbf16>
    %c1_49 = arith.constant 1 : index
    %c0_50 = arith.constant 0 : index
    %c0_51 = arith.constant 0 : index
    %173 = vector.load %arg7[%c1_49, %c0_50, %c0_51] : memref<2x4x128xf32, #tpu.memory_space<vmem>>, vector<1x4x128xf32>
    %174 = vector.shape_cast %173 : vector<1x4x128xf32> to vector<4x128xf32>
    %175 = vector.extract_strided_slice %174 {offsets = [0, 0], sizes = [1, 32], strides = [1, 1]} : vector<4x128xf32> to vector<1x32xf32>
    %176 = vector.extract_strided_slice %174 {offsets = [0, 32], sizes = [1, 32], strides = [1, 1]} : vector<4x128xf32> to vector<1x32xf32>
    %cst_52 = arith.constant dense<0.000000e+00> : vector<40xf32>
    %177 = vector.multi_reduction <add>, %170, %cst_52 [1] : vector<40x32xf32> to vector<40xf32>
    %178 = vector.shape_cast %177 : vector<40xf32> to vector<40x1xf32>
    %cst_53 = arith.constant 3.200000e+01 : f32
    %179 = vector.broadcast %cst_53 : f32 to vector<40x1xf32>
    %180 = arith.divf %178, %179 : vector<40x1xf32>
    %181 = vector.broadcast %180 : vector<40x1xf32> to vector<40x32xf32>
    %182 = arith.subf %170, %181 : vector<40x32xf32>
    %183 = arith.mulf %182, %182 : vector<40x32xf32>
    %cst_54 = arith.constant dense<0.000000e+00> : vector<40xf32>
    %184 = vector.multi_reduction <add>, %183, %cst_54 [1] : vector<40x32xf32> to vector<40xf32>
    %185 = vector.shape_cast %184 : vector<40xf32> to vector<40x1xf32>
    %cst_55 = arith.constant 3.200000e+01 : f32
    %186 = vector.broadcast %cst_55 : f32 to vector<40x1xf32>
    %187 = arith.divf %185, %186 : vector<40x1xf32>
    %cst_56 = arith.constant 9.99999974E-6 : f32
    %188 = vector.broadcast %cst_56 : f32 to vector<40x1xf32>
    %189 = arith.addf %187, %188 : vector<40x1xf32>
    %190 = math.rsqrt %189 : vector<40x1xf32>
    %191 = vector.broadcast %190 : vector<40x1xf32> to vector<40x32xf32>
    %192 = arith.mulf %182, %191 : vector<40x32xf32>
    %193 = vector.broadcast %175 : vector<1x32xf32> to vector<40x32xf32>
    %194 = arith.mulf %192, %193 : vector<40x32xf32>
    %195 = vector.broadcast %176 : vector<1x32xf32> to vector<40x32xf32>
    %196 = arith.addf %194, %195 : vector<40x32xf32>
    %197 = arith.truncf %196 : vector<40x32xf32> to vector<40x32xbf16>
    %198 = vector.extract_strided_slice %172 {offsets = [0, 0], sizes = [32, 96], strides = [1, 1]} : vector<32x256xbf16> to vector<32x96xbf16>
    %cst_57 = arith.constant dense<0.000000e+00> : vector<40x96xf32>
    %199 = tpu.matmul %197, %198, %cst_57 {dimension_numbers = #tpu.dot_dimension_numbers<[1], [0], [0], [1], [0, 0, 1, 1], [], []>} : vector<40x32xbf16>, vector<32x96xbf16>, vector<40x96xf32> -> vector<40x96xf32>
    %200 = vector.extract_strided_slice %174 {offsets = [1, 0], sizes = [1, 96], strides = [1, 1]} : vector<4x128xf32> to vector<1x96xf32>
    %201 = vector.broadcast %200 : vector<1x96xf32> to vector<40x96xf32>
    %202 = arith.addf %199, %201 : vector<40x96xf32>
    %203 = vector.extract_strided_slice %202 {offsets = [0, 0], sizes = [40, 8], strides = [1, 1]} : vector<40x96xf32> to vector<40x8xf32>
    %204 = arith.truncf %203 : vector<40x8xf32> to vector<40x8xbf16>
    %205 = vector.extract_strided_slice %202 {offsets = [0, 32], sizes = [40, 8], strides = [1, 1]} : vector<40x96xf32> to vector<40x8xf32>
    %206 = arith.truncf %205 : vector<40x8xf32> to vector<40x8xbf16>
    %207 = vector.extract_strided_slice %202 {offsets = [0, 64], sizes = [40, 8], strides = [1, 1]} : vector<40x96xf32> to vector<40x8xf32>
    %208 = arith.truncf %207 : vector<40x8xf32> to vector<40x8xbf16>
    %cst_58 = arith.constant dense<0.000000e+00> : vector<40x40xf32>
    %209 = tpu.matmul %204, %206, %cst_58 {dimension_numbers = #tpu.dot_dimension_numbers<[1], [1], [0], [0], [0, 0, 1, 0], [], []>} : vector<40x8xbf16>, vector<40x8xbf16>, vector<40x40xf32> -> vector<40x40xf32>
    %210 = arith.addf %209, %0 : vector<40x40xf32>
    %cst_59 = arith.constant dense<0xFF800000> : vector<40xf32>
    %211 = vector.multi_reduction <maximumf>, %210, %cst_59 [1] : vector<40x40xf32> to vector<40xf32>
    %212 = vector.shape_cast %211 : vector<40xf32> to vector<40x1xf32>
    %213 = vector.broadcast %212 : vector<40x1xf32> to vector<40x40xf32>
    %214 = arith.subf %210, %213 : vector<40x40xf32>
    %215 = math.exp %214 : vector<40x40xf32>
    %cst_60 = arith.constant dense<0.000000e+00> : vector<40xf32>
    %216 = vector.multi_reduction <add>, %215, %cst_60 [1] : vector<40x40xf32> to vector<40xf32>
    %217 = vector.shape_cast %216 : vector<40xf32> to vector<40x1xf32>
    %218 = tpu.reciprocal %217 {approx = true} : vector<40x1xf32> -> vector<40x1xf32>
    %219 = vector.broadcast %218 : vector<40x1xf32> to vector<40x40xf32>
    %220 = arith.mulf %215, %219 : vector<40x40xf32>
    %221 = arith.truncf %220 : vector<40x40xf32> to vector<40x40xbf16>
    %cst_61 = arith.constant dense<0.000000e+00> : vector<40x8xf32>
    %222 = tpu.matmul %221, %208, %cst_61 {dimension_numbers = #tpu.dot_dimension_numbers<[1], [0], [0], [1], [0, 0, 1, 1], [], []>} : vector<40x40xbf16>, vector<40x8xbf16>, vector<40x8xf32> -> vector<40x8xf32>
    %223 = vector.extract_strided_slice %202 {offsets = [0, 8], sizes = [40, 8], strides = [1, 1]} : vector<40x96xf32> to vector<40x8xf32>
    %224 = arith.truncf %223 : vector<40x8xf32> to vector<40x8xbf16>
    %225 = vector.extract_strided_slice %202 {offsets = [0, 40], sizes = [40, 8], strides = [1, 1]} : vector<40x96xf32> to vector<40x8xf32>
    %226 = arith.truncf %225 : vector<40x8xf32> to vector<40x8xbf16>
    %227 = vector.extract_strided_slice %202 {offsets = [0, 72], sizes = [40, 8], strides = [1, 1]} : vector<40x96xf32> to vector<40x8xf32>
    %228 = arith.truncf %227 : vector<40x8xf32> to vector<40x8xbf16>
    %cst_62 = arith.constant dense<0.000000e+00> : vector<40x40xf32>
    %229 = tpu.matmul %224, %226, %cst_62 {dimension_numbers = #tpu.dot_dimension_numbers<[1], [1], [0], [0], [0, 0, 1, 0], [], []>} : vector<40x8xbf16>, vector<40x8xbf16>, vector<40x40xf32> -> vector<40x40xf32>
    %230 = arith.addf %229, %0 : vector<40x40xf32>
    %cst_63 = arith.constant dense<0xFF800000> : vector<40xf32>
    %231 = vector.multi_reduction <maximumf>, %230, %cst_63 [1] : vector<40x40xf32> to vector<40xf32>
    %232 = vector.shape_cast %231 : vector<40xf32> to vector<40x1xf32>
    %233 = vector.broadcast %232 : vector<40x1xf32> to vector<40x40xf32>
    %234 = arith.subf %230, %233 : vector<40x40xf32>
    %235 = math.exp %234 : vector<40x40xf32>
    %cst_64 = arith.constant dense<0.000000e+00> : vector<40xf32>
    %236 = vector.multi_reduction <add>, %235, %cst_64 [1] : vector<40x40xf32> to vector<40xf32>
    %237 = vector.shape_cast %236 : vector<40xf32> to vector<40x1xf32>
    %238 = tpu.reciprocal %237 {approx = true} : vector<40x1xf32> -> vector<40x1xf32>
    %239 = vector.broadcast %238 : vector<40x1xf32> to vector<40x40xf32>
    %240 = arith.mulf %235, %239 : vector<40x40xf32>
    %241 = arith.truncf %240 : vector<40x40xf32> to vector<40x40xbf16>
    %cst_65 = arith.constant dense<0.000000e+00> : vector<40x8xf32>
    %242 = tpu.matmul %241, %228, %cst_65 {dimension_numbers = #tpu.dot_dimension_numbers<[1], [0], [0], [1], [0, 0, 1, 1], [], []>} : vector<40x40xbf16>, vector<40x8xbf16>, vector<40x8xf32> -> vector<40x8xf32>
    %243 = vector.extract_strided_slice %202 {offsets = [0, 16], sizes = [40, 8], strides = [1, 1]} : vector<40x96xf32> to vector<40x8xf32>
    %244 = arith.truncf %243 : vector<40x8xf32> to vector<40x8xbf16>
    %245 = vector.extract_strided_slice %202 {offsets = [0, 48], sizes = [40, 8], strides = [1, 1]} : vector<40x96xf32> to vector<40x8xf32>
    %246 = arith.truncf %245 : vector<40x8xf32> to vector<40x8xbf16>
    %247 = vector.extract_strided_slice %202 {offsets = [0, 80], sizes = [40, 8], strides = [1, 1]} : vector<40x96xf32> to vector<40x8xf32>
    %248 = arith.truncf %247 : vector<40x8xf32> to vector<40x8xbf16>
    %cst_66 = arith.constant dense<0.000000e+00> : vector<40x40xf32>
    %249 = tpu.matmul %244, %246, %cst_66 {dimension_numbers = #tpu.dot_dimension_numbers<[1], [1], [0], [0], [0, 0, 1, 0], [], []>} : vector<40x8xbf16>, vector<40x8xbf16>, vector<40x40xf32> -> vector<40x40xf32>
    %250 = arith.addf %249, %0 : vector<40x40xf32>
    %cst_67 = arith.constant dense<0xFF800000> : vector<40xf32>
    %251 = vector.multi_reduction <maximumf>, %250, %cst_67 [1] : vector<40x40xf32> to vector<40xf32>
    %252 = vector.shape_cast %251 : vector<40xf32> to vector<40x1xf32>
    %253 = vector.broadcast %252 : vector<40x1xf32> to vector<40x40xf32>
    %254 = arith.subf %250, %253 : vector<40x40xf32>
    %255 = math.exp %254 : vector<40x40xf32>
    %cst_68 = arith.constant dense<0.000000e+00> : vector<40xf32>
    %256 = vector.multi_reduction <add>, %255, %cst_68 [1] : vector<40x40xf32> to vector<40xf32>
    %257 = vector.shape_cast %256 : vector<40xf32> to vector<40x1xf32>
    %258 = tpu.reciprocal %257 {approx = true} : vector<40x1xf32> -> vector<40x1xf32>
    %259 = vector.broadcast %258 : vector<40x1xf32> to vector<40x40xf32>
    %260 = arith.mulf %255, %259 : vector<40x40xf32>
    %261 = arith.truncf %260 : vector<40x40xf32> to vector<40x40xbf16>
    %cst_69 = arith.constant dense<0.000000e+00> : vector<40x8xf32>
    %262 = tpu.matmul %261, %248, %cst_69 {dimension_numbers = #tpu.dot_dimension_numbers<[1], [0], [0], [1], [0, 0, 1, 1], [], []>} : vector<40x40xbf16>, vector<40x8xbf16>, vector<40x8xf32> -> vector<40x8xf32>
    %263 = vector.extract_strided_slice %202 {offsets = [0, 24], sizes = [40, 8], strides = [1, 1]} : vector<40x96xf32> to vector<40x8xf32>
    %264 = arith.truncf %263 : vector<40x8xf32> to vector<40x8xbf16>
    %265 = vector.extract_strided_slice %202 {offsets = [0, 56], sizes = [40, 8], strides = [1, 1]} : vector<40x96xf32> to vector<40x8xf32>
    %266 = arith.truncf %265 : vector<40x8xf32> to vector<40x8xbf16>
    %267 = vector.extract_strided_slice %202 {offsets = [0, 88], sizes = [40, 8], strides = [1, 1]} : vector<40x96xf32> to vector<40x8xf32>
    %268 = arith.truncf %267 : vector<40x8xf32> to vector<40x8xbf16>
    %cst_70 = arith.constant dense<0.000000e+00> : vector<40x40xf32>
    %269 = tpu.matmul %264, %266, %cst_70 {dimension_numbers = #tpu.dot_dimension_numbers<[1], [1], [0], [0], [0, 0, 1, 0], [], []>} : vector<40x8xbf16>, vector<40x8xbf16>, vector<40x40xf32> -> vector<40x40xf32>
    %270 = arith.addf %269, %0 : vector<40x40xf32>
    %cst_71 = arith.constant dense<0xFF800000> : vector<40xf32>
    %271 = vector.multi_reduction <maximumf>, %270, %cst_71 [1] : vector<40x40xf32> to vector<40xf32>
    %272 = vector.shape_cast %271 : vector<40xf32> to vector<40x1xf32>
    %273 = vector.broadcast %272 : vector<40x1xf32> to vector<40x40xf32>
    %274 = arith.subf %270, %273 : vector<40x40xf32>
    %275 = math.exp %274 : vector<40x40xf32>
    %cst_72 = arith.constant dense<0.000000e+00> : vector<40xf32>
    %276 = vector.multi_reduction <add>, %275, %cst_72 [1] : vector<40x40xf32> to vector<40xf32>
    %277 = vector.shape_cast %276 : vector<40xf32> to vector<40x1xf32>
    %278 = tpu.reciprocal %277 {approx = true} : vector<40x1xf32> -> vector<40x1xf32>
    %279 = vector.broadcast %278 : vector<40x1xf32> to vector<40x40xf32>
    %280 = arith.mulf %275, %279 : vector<40x40xf32>
    %281 = arith.truncf %280 : vector<40x40xf32> to vector<40x40xbf16>
    %cst_73 = arith.constant dense<0.000000e+00> : vector<40x8xf32>
    %282 = tpu.matmul %281, %268, %cst_73 {dimension_numbers = #tpu.dot_dimension_numbers<[1], [0], [0], [1], [0, 0, 1, 1], [], []>} : vector<40x40xbf16>, vector<40x8xbf16>, vector<40x8xf32> -> vector<40x8xf32>
    %283 = tpu.concatenate %222, %242, %262, %282 in 1 : vector<40x8xf32>, vector<40x8xf32>, vector<40x8xf32>, vector<40x8xf32> -> vector<40x32xf32>
    %284 = arith.truncf %283 : vector<40x32xf32> to vector<40x32xbf16>
    %285 = vector.extract_strided_slice %172 {offsets = [0, 96], sizes = [32, 32], strides = [1, 1]} : vector<32x256xbf16> to vector<32x32xbf16>
    %cst_74 = arith.constant dense<0.000000e+00> : vector<40x32xf32>
    %286 = tpu.matmul %284, %285, %cst_74 {dimension_numbers = #tpu.dot_dimension_numbers<[1], [0], [0], [1], [0, 0, 1, 1], [], []>} : vector<40x32xbf16>, vector<32x32xbf16>, vector<40x32xf32> -> vector<40x32xf32>
    %287 = vector.extract_strided_slice %174 {offsets = [1, 96], sizes = [1, 32], strides = [1, 1]} : vector<4x128xf32> to vector<1x32xf32>
    %288 = vector.broadcast %287 : vector<1x32xf32> to vector<40x32xf32>
    %289 = arith.addf %286, %288 : vector<40x32xf32>
    %290 = arith.addf %170, %289 : vector<40x32xf32>
    %291 = vector.extract_strided_slice %174 {offsets = [0, 64], sizes = [1, 32], strides = [1, 1]} : vector<4x128xf32> to vector<1x32xf32>
    %292 = vector.extract_strided_slice %174 {offsets = [0, 96], sizes = [1, 32], strides = [1, 1]} : vector<4x128xf32> to vector<1x32xf32>
    %cst_75 = arith.constant dense<0.000000e+00> : vector<40xf32>
    %293 = vector.multi_reduction <add>, %290, %cst_75 [1] : vector<40x32xf32> to vector<40xf32>
    %294 = vector.shape_cast %293 : vector<40xf32> to vector<40x1xf32>
    %cst_76 = arith.constant 3.200000e+01 : f32
    %295 = vector.broadcast %cst_76 : f32 to vector<40x1xf32>
    %296 = arith.divf %294, %295 : vector<40x1xf32>
    %297 = vector.broadcast %296 : vector<40x1xf32> to vector<40x32xf32>
    %298 = arith.subf %290, %297 : vector<40x32xf32>
    %299 = arith.mulf %298, %298 : vector<40x32xf32>
    %cst_77 = arith.constant dense<0.000000e+00> : vector<40xf32>
    %300 = vector.multi_reduction <add>, %299, %cst_77 [1] : vector<40x32xf32> to vector<40xf32>
    %301 = vector.shape_cast %300 : vector<40xf32> to vector<40x1xf32>
    %cst_78 = arith.constant 3.200000e+01 : f32
    %302 = vector.broadcast %cst_78 : f32 to vector<40x1xf32>
    %303 = arith.divf %301, %302 : vector<40x1xf32>
    %cst_79 = arith.constant 9.99999974E-6 : f32
    %304 = vector.broadcast %cst_79 : f32 to vector<40x1xf32>
    %305 = arith.addf %303, %304 : vector<40x1xf32>
    %306 = math.rsqrt %305 : vector<40x1xf32>
    %307 = vector.broadcast %306 : vector<40x1xf32> to vector<40x32xf32>
    %308 = arith.mulf %298, %307 : vector<40x32xf32>
    %309 = vector.broadcast %291 : vector<1x32xf32> to vector<40x32xf32>
    %310 = arith.mulf %308, %309 : vector<40x32xf32>
    %311 = vector.broadcast %292 : vector<1x32xf32> to vector<40x32xf32>
    %312 = arith.addf %310, %311 : vector<40x32xf32>
    %313 = arith.truncf %312 : vector<40x32xf32> to vector<40x32xbf16>
    %314 = vector.extract_strided_slice %172 {offsets = [0, 128], sizes = [32, 128], strides = [1, 1]} : vector<32x256xbf16> to vector<32x128xbf16>
    %cst_80 = arith.constant dense<0.000000e+00> : vector<40x128xf32>
    %315 = tpu.matmul %313, %314, %cst_80 {dimension_numbers = #tpu.dot_dimension_numbers<[1], [0], [0], [1], [0, 0, 1, 1], [], []>} : vector<40x32xbf16>, vector<32x128xbf16>, vector<40x128xf32> -> vector<40x128xf32>
    %316 = vector.extract_strided_slice %174 {offsets = [2, 0], sizes = [1, 128], strides = [1, 1]} : vector<4x128xf32> to vector<1x128xf32>
    %317 = vector.broadcast %316 : vector<1x128xf32> to vector<40x128xf32>
    %318 = arith.addf %315, %317 : vector<40x128xf32>
    %319 = vector.extract_strided_slice %318 {offsets = [0, 0], sizes = [40, 64], strides = [1, 1]} : vector<40x128xf32> to vector<40x64xf32>
    %320 = arith.negf %319 : vector<40x64xf32>
    %321 = math.exp %320 : vector<40x64xf32>
    %cst_81 = arith.constant 1.000000e+00 : f32
    %322 = vector.broadcast %cst_81 : f32 to vector<40x64xf32>
    %323 = arith.addf %322, %321 : vector<40x64xf32>
    %324 = arith.divf %322, %323 : vector<40x64xf32>
    %325 = arith.mulf %319, %324 : vector<40x64xf32>
    %326 = vector.extract_strided_slice %318 {offsets = [0, 64], sizes = [40, 64], strides = [1, 1]} : vector<40x128xf32> to vector<40x64xf32>
    %327 = arith.mulf %325, %326 : vector<40x64xf32>
    %328 = arith.truncf %327 : vector<40x64xf32> to vector<40x64xbf16>
    %c1_82 = arith.constant 1 : index
    %c0_83 = arith.constant 0 : index
    %c0_84 = arith.constant 0 : index
    %329 = vector.load %arg6[%c1_82, %c0_83, %c0_84] : memref<2x64x32xbf16, #tpu.memory_space<vmem>>, vector<1x64x32xbf16>
    %330 = vector.shape_cast %329 : vector<1x64x32xbf16> to vector<64x32xbf16>
    %cst_85 = arith.constant dense<0.000000e+00> : vector<40x32xf32>
    %331 = tpu.matmul %328, %330, %cst_85 {dimension_numbers = #tpu.dot_dimension_numbers<[1], [0], [0], [1], [0, 0, 1, 1], [], []>} : vector<40x64xbf16>, vector<64x32xbf16>, vector<40x32xf32> -> vector<40x32xf32>
    %332 = arith.addf %290, %331 : vector<40x32xf32>
    %333 = vector.extract_strided_slice %174 {offsets = [3, 0], sizes = [1, 32], strides = [1, 1]} : vector<4x128xf32> to vector<1x32xf32>
    %334 = vector.broadcast %333 : vector<1x32xf32> to vector<40x32xf32>
    %335 = arith.addf %332, %334 : vector<40x32xf32>
    %336 = vector.extract_strided_slice %335 {offsets = [32, 0], sizes = [8, 32], strides = [1, 1]} : vector<40x32xf32> to vector<8x32xf32>
    %c0_86 = arith.constant 0 : index
    %c0_87 = arith.constant 0 : index
    %337 = vector.load %arg9[%c0_86, %c0_87] : memref<1x128xf32, #tpu.memory_space<vmem>>, vector<1x128xf32>
    %338 = vector.extract_strided_slice %337 {offsets = [0, 0], sizes = [1, 32], strides = [1, 1]} : vector<1x128xf32> to vector<1x32xf32>
    %339 = vector.extract_strided_slice %337 {offsets = [0, 32], sizes = [1, 32], strides = [1, 1]} : vector<1x128xf32> to vector<1x32xf32>
    %cst_88 = arith.constant dense<0.000000e+00> : vector<8xf32>
    %340 = vector.multi_reduction <add>, %336, %cst_88 [1] : vector<8x32xf32> to vector<8xf32>
    %341 = vector.shape_cast %340 : vector<8xf32> to vector<8x1xf32>
    %cst_89 = arith.constant 3.200000e+01 : f32
    %342 = vector.broadcast %cst_89 : f32 to vector<8x1xf32>
    %343 = arith.divf %341, %342 : vector<8x1xf32>
    %344 = vector.broadcast %343 : vector<8x1xf32> to vector<8x32xf32>
    %345 = arith.subf %336, %344 : vector<8x32xf32>
    %346 = arith.mulf %345, %345 : vector<8x32xf32>
    %cst_90 = arith.constant dense<0.000000e+00> : vector<8xf32>
    %347 = vector.multi_reduction <add>, %346, %cst_90 [1] : vector<8x32xf32> to vector<8xf32>
    %348 = vector.shape_cast %347 : vector<8xf32> to vector<8x1xf32>
    %cst_91 = arith.constant 3.200000e+01 : f32
    %349 = vector.broadcast %cst_91 : f32 to vector<8x1xf32>
    %350 = arith.divf %348, %349 : vector<8x1xf32>
    %cst_92 = arith.constant 9.99999974E-6 : f32
    %351 = vector.broadcast %cst_92 : f32 to vector<8x1xf32>
    %352 = arith.addf %350, %351 : vector<8x1xf32>
    %353 = math.rsqrt %352 : vector<8x1xf32>
    %354 = vector.broadcast %353 : vector<8x1xf32> to vector<8x32xf32>
    %355 = arith.mulf %345, %354 : vector<8x32xf32>
    %356 = vector.broadcast %338 : vector<1x32xf32> to vector<8x32xf32>
    %357 = arith.mulf %355, %356 : vector<8x32xf32>
    %358 = vector.broadcast %339 : vector<1x32xf32> to vector<8x32xf32>
    %359 = arith.addf %357, %358 : vector<8x32xf32>
    %360 = arith.truncf %359 : vector<8x32xf32> to vector<8x32xbf16>
    %c0_93 = arith.constant 0 : index
    %c0_94 = arith.constant 0 : index
    %361 = vector.load %arg8[%c0_93, %c0_94] : memref<32x8xbf16, #tpu.memory_space<vmem>>, vector<32x8xbf16>
    %cst_95 = arith.constant dense<0.000000e+00> : vector<8x8xf32>
    %362 = tpu.matmul %360, %361, %cst_95 {dimension_numbers = #tpu.dot_dimension_numbers<[1], [0], [0], [1], [0, 0, 1, 1], [], []>} : vector<8x32xbf16>, vector<32x8xbf16>, vector<8x8xf32> -> vector<8x8xf32>
    %363 = vector.extract_strided_slice %337 {offsets = [0, 64], sizes = [1, 8], strides = [1, 1]} : vector<1x128xf32> to vector<1x8xf32>
    %364 = vector.broadcast %363 : vector<1x8xf32> to vector<8x8xf32>
    %365 = arith.addf %362, %364 : vector<8x8xf32>
    %c0_96 = arith.constant 0 : index
    %c0_97 = arith.constant 0 : index
    %366 = vector.load %arg10[%c0_96, %c0_97] : memref<8x8xf32, #tpu.memory_space<vmem>>, vector<8x8xf32>
    tpu.vector_store %arg10[%c0_96, %c0_97], %365 {strides = array<i32>} : memref<8x8xf32, #tpu.memory_space<vmem>>, vector<8x8xf32>,
    return
  }
  func.func @transform_0(%arg0: i32) -> (i32, i32) {
    %c0_i32 = arith.constant 0 : i32
    %c0_i32_0 = arith.constant 0 : i32
    %c0_i32_1 = arith.constant 0 : i32
    return %c0_i32, %c0_i32_0 : i32, i32
  }
  func.func @transform_1(%arg0: i32) -> (i32, i32) {
    %c0_i32 = arith.constant 0 : i32
    %c0_i32_0 = arith.constant 0 : i32
    %c0_i32_1 = arith.constant 0 : i32
    return %c0_i32, %c0_i32_0 : i32, i32
  }
  func.func @transform_2(%arg0: i32) -> (i32, i32) {
    %c0_i32 = arith.constant 0 : i32
    %c0_i32_0 = arith.constant 0 : i32
    %c0_i32_1 = arith.constant 0 : i32
    return %c0_i32, %c0_i32_0 : i32, i32
  }
  func.func @transform_3(%arg0: i32) -> (i32, i32) {
    %c0_i32 = arith.constant 0 : i32
    %c0_i32_0 = arith.constant 0 : i32
    %c0_i32_1 = arith.constant 0 : i32
    return %c0_i32, %c0_i32_0 : i32, i32
  }
  func.func @transform_4(%arg0: i32) -> (i32, i32, i32) {
    %c0_i32 = arith.constant 0 : i32
    %c0_i32_0 = arith.constant 0 : i32
    %c0_i32_1 = arith.constant 0 : i32
    %c0_i32_2 = arith.constant 0 : i32
    return %c0_i32, %c0_i32_0, %c0_i32_1 : i32, i32, i32
  }
  func.func @transform_5(%arg0: i32) -> (i32, i32, i32) {
    %c0_i32 = arith.constant 0 : i32
    %c0_i32_0 = arith.constant 0 : i32
    %c0_i32_1 = arith.constant 0 : i32
    %c0_i32_2 = arith.constant 0 : i32
    return %c0_i32, %c0_i32_0, %c0_i32_1 : i32, i32, i32
  }
  func.func @transform_6(%arg0: i32) -> (i32, i32, i32) {
    %c0_i32 = arith.constant 0 : i32
    %c0_i32_0 = arith.constant 0 : i32
    %c0_i32_1 = arith.constant 0 : i32
    %c0_i32_2 = arith.constant 0 : i32
    return %c0_i32, %c0_i32_0, %c0_i32_1 : i32, i32, i32
  }
  func.func @transform_7(%arg0: i32) -> (i32, i32) {
    %c0_i32 = arith.constant 0 : i32
    %c0_i32_0 = arith.constant 0 : i32
    %c0_i32_1 = arith.constant 0 : i32
    return %c0_i32, %c0_i32_0 : i32, i32
  }
  func.func @transform_8(%arg0: i32) -> (i32, i32) {
    %c0_i32 = arith.constant 0 : i32
    %c0_i32_0 = arith.constant 0 : i32
    %c0_i32_1 = arith.constant 0 : i32
    return %c0_i32, %c0_i32_0 : i32, i32
  }
  func.func @transform_9(%arg0: i32) -> (i32, i32) {
    %c0_i32 = arith.constant 0 : i32
    %c0_i32_0 = arith.constant 0 : i32
    %c0_i32_1 = arith.constant 0 : i32
    return %c0_i32, %c0_i32_0 : i32, i32
  }
}

</mosaic_0001>

<llo_original>
// kernel: forward.1
$region0: #{forward.1}
  #allocation0 [shape = 'u32[]', space=smem, size = 0x4, offset = 0x4, fixed_abs, tag = 'smem constant byte address 0x4 - core index']
  #allocation1 [shape = 'u32[72,128]{1,0:T(1,128)}', space=vmem, size = 0x9000, scoped, tag = 'internal scratch']
  %s0 = inlined_call_operand.vmem [shape: bf16[40,64], index: 0, kind: input, shape index: {}]
  %s1 = inlined_call_operand.vmem [shape: f32[40,32], index: 1, kind: input, shape index: {}]
  %s2 = inlined_call_operand.vmem [shape: f32[40,40], index: 2, kind: input, shape index: {}]
  %s3 = inlined_call_operand.vmem [shape: bf16[64,32], index: 3, kind: input, shape index: {}]
  %s4 = inlined_call_operand.vmem [shape: bf16[2,32,256], index: 4, kind: input, shape index: {}]
  %s5 = inlined_call_operand.vmem [shape: bf16[2,64,32], index: 5, kind: input, shape index: {}]
  %s6 = inlined_call_operand.vmem [shape: f32[2,4,128], index: 6, kind: input, shape index: {}]
  %s7 = inlined_call_operand.vmem [shape: bf16[32,8], index: 7, kind: input, shape index: {}]
  %s8 = inlined_call_operand.vmem [shape: f32[1,128], index: 8, kind: input, shape index: {}]
  %s9 = inlined_call_operand.hbm [shape: f32[8,8], index: 9, kind: output, shape index: {}]
  %s10 = sld [smem:[#allocation0]]
  $region46: #{forward.1} parent=0
    _
  %s12 = ssub.s32 1, %s10
  %s13 = scalar_select 0, %s12, %s10
  $region1: #{forward.1} parent=0
    #allocation2 [shape = 'u8[4096]{0}', space=vmem, size = 0x1000, scoped, tag = 'output window, operand 0, single buffered']
    #allocation3 [shape = 's32[1]{0}', space=sflag, size = 0x4, scoped, tag = 'scoped memory for forward.1']
    %14 = vsyncpa [#allocation3], 0
    // Predicated region
    $region2: #{forward.1} parent=1 // pred_check
      _
    $region3: #{forward.1} parent=1 // pred_check_branch
      %16 = sbr.rel (0) target = $region5
    $region4: #{forward.1} parent=1 // pred_region
      _
    $region5: #{forward.1} parent=1 // pred_fallthru
      _
    // Predicated region
    $region6: #{forward.1} parent=1 // pred_check
      _
    $region7: #{forward.1} parent=1 // pred_check_branch
      %18 = sbr.rel (0) target = $region9
    $region8: #{forward.1} parent=1 // pred_region
      _
    $region9: #{forward.1} parent=1 // pred_fallthru
      _
    // Predicated region
    $region10: #{forward.1} parent=1 // pred_check
      _
    $region11: #{forward.1} parent=1 // pred_check_branch
      %20 = sbr.rel (0) target = $region13
    $region12: #{forward.1} parent=1 // pred_region
      _
    $region13: #{forward.1} parent=1 // pred_fallthru
      _
    // Predicated region
    $region14: #{forward.1} parent=1 // pred_check
      _
    $region15: #{forward.1} parent=1 // pred_check_branch
      %22 = sbr.rel (0) target = $region17
    $region16: #{forward.1} parent=1 // pred_region
      _
    $region17: #{forward.1} parent=1 // pred_fallthru
      _
    // Predicated region
    $region18: #{forward.1} parent=1 // pred_check
      _
    $region19: #{forward.1} parent=1 // pred_check_branch
      %24 = sbr.rel (0) target = $region21
    $region20: #{forward.1} parent=1 // pred_region
      _
    $region21: #{forward.1} parent=1 // pred_fallthru
      _
    // Predicated region
    $region22: #{forward.1} parent=1 // pred_check
      _
    $region23: #{forward.1} parent=1 // pred_check_branch
      %26 = sbr.rel (0) target = $region25
    $region24: #{forward.1} parent=1 // pred_region
      _
    $region25: #{forward.1} parent=1 // pred_fallthru
      _
    // Predicated region
    $region26: #{forward.1} parent=1 // pred_check
      _
    $region27: #{forward.1} parent=1 // pred_check_branch
      %28 = sbr.rel (0) target = $region29
    $region28: #{forward.1} parent=1 // pred_region
      _
    $region29: #{forward.1} parent=1 // pred_fallthru
      _
    // Predicated region
    $region30: #{forward.1} parent=1 // pred_check
      _
    $region31: #{forward.1} parent=1 // pred_check_branch
      %30 = sbr.rel (0) target = $region33
    $region32: #{forward.1} parent=1 // pred_region
      _
    $region33: #{forward.1} parent=1 // pred_fallthru
      _
    // Predicated region
    $region34: #{forward.1} parent=1 // pred_check
      _
    $region35: #{forward.1} parent=1 // pred_check_branch
      %32 = sbr.rel (0) target = $region37
    $region36: #{forward.1} parent=1 // pred_region
      _
    $region37: #{forward.1} parent=1 // pred_fallthru
      _
    %v34 = vld [vmem:[%s2] sm:$0xff]
    %v35 = vld [vmem:[%s2 + $0x8] sm:$0xff]
    %v36 = vld [vmem:[%s2 + $0x10] sm:$0xff]
    %v37 = vld [vmem:[%s2 + $0x18] sm:$0xff]
    %v38 = vld [vmem:[%s2 + $0x20] sm:$0xff]
    %v39 = vld [vmem:[%s0] sm:$0xf]
    %v40 = vld [vmem:[%s0 + $0x4] sm:$0xf]
    %v41 = vld [vmem:[%s0 + $0x8] sm:$0xf]
    %v42 = vld [vmem:[%s0 + $0xc] sm:$0xf]
    %v43 = vld [vmem:[%s0 + $0x10] sm:$0xf]
    %v44 = vld [vmem:[%s3] sm:$0xf]
    %v45 = vld [vmem:[%s3 + $0x4] sm:$0xf]
    %v46 = vld [vmem:[%s3 + $0x8] sm:$0xf]
    %v47 = vld [vmem:[%s3 + $0xc] sm:$0xf]
    %v48 = vld [vmem:[%s3 + $0x10] sm:$0xf]
    %v49 = vld [vmem:[%s3 + $0x14] sm:$0xf]
    %v50 = vld [vmem:[%s3 + $0x18] sm:$0xf]
    %v51 = vld [vmem:[%s3 + $0x1c] sm:$0xf]
    %v52 = vld [vmem:[%s1] sm:$0xff]
    %v53 = vld [vmem:[%s1 + $0x8] sm:$0xff]
    %v54 = vld [vmem:[%s1 + $0x10] sm:$0xff]
    %v55 = vld [vmem:[%s1 + $0x18] sm:$0xff]
    %v56 = vld [vmem:[%s1 + $0x20] sm:$0xff]
    %v62 = vunpack.c.l.b16 %v39
    %v63 = vunpack.c.l.b16 %v40
    %v64 = vunpack.c.l.b16 %v41
    %v65 = vunpack.c.l.b16 %v42
    %v66 = vunpack.c.l.b16 %v43
    %v67 = vpack.c.b16 %v63, %v62
    %v68 = vpack.c.b16 %v65, %v64
    %v69 = vpack.c.b16 %v66, %v66
    %v78 = vunpack.c.l.b16 %v44
    %v79 = vunpack.c.l.b16 %v45
    %v80 = vunpack.c.l.b16 %v46
    %v81 = vunpack.c.l.b16 %v47
    %v82 = vunpack.c.l.b16 %v48
    %v83 = vunpack.c.l.b16 %v49
    %v84 = vunpack.c.l.b16 %v50
    %v85 = vunpack.c.l.b16 %v51
    %v86 = vpack.c.b16 %v79, %v78
    %v87 = vpack.c.b16 %v81, %v80
    %v88 = vpack.c.b16 %v83, %v82
    %v89 = vpack.c.b16 %v85, %v84
    %vm94 = vcmask 523264
    %v96 = vsel %vm94, %v67, 0
    %v99 = vsel %vm94, %v68, 0
    %v102 = vsel %vm94, %v69, 0
    %104 = vmatpush.bf16.msra.mxu0 0
    %105 = vmatpush.bf16.msra.mxu0 0
    %106 = vmatpush.bf16.msra.mxu0 0
    %107 = vmatpush.bf16.msra.mxu0 0
    %108 = vmatpush.bf16.msra.mxu0 %v89
    %109 = vmatpush.bf16.msra.mxu0 %v88
    %110 = vmatpush.bf16.msra.mxu0 %v87
    %111 = vmatpush.bf16.msra.mxu0 %v86
    %112 = vmatmul.bf16.gmra.mxu0 %v96
    %v113 = vpop.f32.mrf.mxu0
    %v114 = vadd.f32 %v52, %v113
    %v115 = vpop.f32.mrf.mxu0
    %v116 = vadd.f32 %v53, %v115
    %117 = vmatmul.bf16.gmra.mxu0 %v99
    %v118 = vpop.f32.mrf.mxu0
    %v119 = vadd.f32 %v54, %v118
    %v120 = vpop.f32.mrf.mxu0
    %v121 = vadd.f32 %v55, %v120
    %122 = vmatmul.bf16.gmra.mxu0 %v102
    %v123 = vpop.f32.mrf.mxu0
    %v124 = vadd.f32 %v56, %v123
    %v125 = vpop.f32.mrf.mxu0
    %126 = vdwg.mxu0
    %v127 = vld [vmem:[%s4] sm:$0xff]
    %v128 = vld [vmem:[%s4 + $0x8] sm:$0xff]
    %v129 = vld [vmem:[%s4 + $0x10] sm:$0xff]
    %v130 = vld [vmem:[%s4 + $0x18] sm:$0xff]
    %v131 = vld [vmem:[%s6] sm:$0xf]
    %vm132 = vcmask 261120
    %v133 = vsel %vm132, %v114, 0.0
    %134 = vadd.xlane.f32.xlu0 %v133
    %v135 = vpop.xlane.xlu0 %134
    %v136 = vsel %vm132, %v116, 0.0
    %137 = vadd.xlane.f32.xlu0 %v136
    %v138 = vpop.xlane.xlu0 %137
    %v139 = vsel %vm132, %v119, 0.0
    %140 = vadd.xlane.f32.xlu0 %v139
    %v141 = vpop.xlane.xlu0 %140
    %v142 = vsel %vm132, %v121, 0.0
    %143 = vadd.xlane.f32.xlu0 %v142
    %v144 = vpop.xlane.xlu0 %143
    %v145 = vsel %vm132, %v124, 0.0
    %146 = vadd.xlane.f32.xlu0 %v145
    %v147 = vpop.xlane.xlu0 %146
    %v148 = vrcp.pop 32.0
    %v149 = vmul.f32 32.0, %v148
    %v150 = vsub.f32 1.0, %v149
    %v151 = vmul.f32 %v148, %v150
    %v152 = vadd.f32 %v148, %v151
    %vm153 = vweird.f32 %v148
    %v154 = vsel %vm153, %v148, %v152
    %v155 = vmul.f32 %v135, %v154
    %v156 = vmul.f32 %v138, %v154
    %v157 = vmul.f32 %v141, %v154
    %v158 = vmul.f32 %v144, %v154
    %v159 = vmul.f32 %v147, %v154
    %v160 = vsub.f32 %v114, %v155
    %v161 = vsub.f32 %v116, %v156
    %v162 = vsub.f32 %v119, %v157
    %v163 = vsub.f32 %v121, %v158
    %v164 = vsub.f32 %v124, %v159
    %v165 = vmul.f32 %v160, %v160
    %v166 = vmul.f32 %v161, %v161
    %v167 = vmul.f32 %v162, %v162
    %v168 = vmul.f32 %v163, %v163
    %v169 = vmul.f32 %v164, %v164
    %v170 = vsel %vm132, %v165, 0.0
    %171 = vadd.xlane.f32.xlu0 %v170
    %v172 = vpop.xlane.xlu0 %171
    %v173 = vsel %vm132, %v166, 0.0
    %174 = vadd.xlane.f32.xlu0 %v173
    %v175 = vpop.xlane.xlu0 %174
    %v176 = vsel %vm132, %v167, 0.0
    %177 = vadd.xlane.f32.xlu0 %v176
    %v178 = vpop.xlane.xlu0 %177
    %v179 = vsel %vm132, %v168, 0.0
    %180 = vadd.xlane.f32.xlu0 %v179
    %v181 = vpop.xlane.xlu0 %180
    %v182 = vsel %vm132, %v169, 0.0
    %183 = vadd.xlane.f32.xlu0 %v182
    %v184 = vpop.xlane.xlu0 %183
    %v185 = vmul.f32 %v172, %v154
    %v186 = vmul.f32 %v175, %v154
    %v187 = vmul.f32 %v178, %v154
    %v188 = vmul.f32 %v181, %v154
    %v189 = vmul.f32 %v184, %v154
    %v190 = vadd.f32 %v185, 1e-05
    %v191 = vadd.f32 %v186, 1e-05
    %v192 = vadd.f32 %v187, 1e-05
    %v193 = vadd.f32 %v188, 1e-05
    %v194 = vadd.f32 %v189, 1e-05
    %v195 = vrsqrt.pop %v190
    %v196 = vmul.f32 %v195, %v190
    %v197 = vmul.f32 %v196, %v195
    %v198 = vmul.f32 0.5, %v197
    %v199 = vsub.f32 1.5, %v198
    %v200 = vmul.f32 %v195, %v199
    %vm201 = vweird.f32 %v190
    %vm202 = vweird.f32 %v195
    %vm203 = vmor %vm201, %vm202
    %v204 = vsel %vm203, %v195, %v200
    %v205 = vrsqrt.pop %v191
    %v206 = vmul.f32 %v205, %v191
    %v207 = vmul.f32 %v206, %v205
    %v208 = vmul.f32 0.5, %v207
    %v209 = vsub.f32 1.5, %v208
    %v210 = vmul.f32 %v205, %v209
    %vm211 = vweird.f32 %v191
    %vm212 = vweird.f32 %v205
    %vm213 = vmor %vm211, %vm212
    %v214 = vsel %vm213, %v205, %v210
    %v215 = vrsqrt.pop %v192
    %v216 = vmul.f32 %v215, %v192
    %v217 = vmul.f32 %v216, %v215
    %v218 = vmul.f32 0.5, %v217
    %v219 = vsub.f32 1.5, %v218
    %v220 = vmul.f32 %v215, %v219
    %vm221 = vweird.f32 %v192
    %vm222 = vweird.f32 %v215
    %vm223 = vmor %vm221, %vm222
    %v224 = vsel %vm223, %v215, %v220
    %v225 = vrsqrt.pop %v193
    %v226 = vmul.f32 %v225, %v193
    %v227 = vmul.f32 %v226, %v225
    %v228 = vmul.f32 0.5, %v227
    %v229 = vsub.f32 1.5, %v228
    %v230 = vmul.f32 %v225, %v229
    %vm231 = vweird.f32 %v193
    %vm232 = vweird.f32 %v225
    %vm233 = vmor %vm231, %vm232
    %v234 = vsel %vm233, %v225, %v230
    %v235 = vrsqrt.pop %v194
    %v236 = vmul.f32 %v235, %v194
    %v237 = vmul.f32 %v236, %v235
    %v238 = vmul.f32 0.5, %v237
    %v239 = vsub.f32 1.5, %v238
    %v240 = vmul.f32 %v235, %v239
    %vm241 = vweird.f32 %v194
    %vm242 = vweird.f32 %v235
    %vm243 = vmor %vm241, %vm242
    %v244 = vsel %vm243, %v235, %v240
    %v245 = vmul.f32 %v160, %v204
    %v246 = vmul.f32 %v161, %v214
    %v247 = vmul.f32 %v162, %v224
    %v248 = vmul.f32 %v163, %v234
    %v249 = vmul.f32 %v164, %v244
    %v250 = vperm.slane %v131, 0
    %v251 = vmul.f32 %v245, %v250
    %v252 = vmul.f32 %v246, %v250
    %v253 = vmul.f32 %v247, %v250
    %v254 = vmul.f32 %v248, %v250
    %v255 = vmul.f32 %v249, %v250
    %257 = vrot.lane.b32.xlu0 %v250, 96
    %v258 = vpop.permute.xlu0 %257
    %v260 = vadd.f32 %v251, %v258
    %v261 = vadd.f32 %v252, %v258
    %v262 = vadd.f32 %v253, %v258
    %v263 = vadd.f32 %v254, %v258
    %v264 = vadd.f32 %v255, %v258
    %v265 = vpack.c.bf16 %v261, %v260
    %v266 = vpack.c.bf16 %v263, %v262
    %v267 = vpack.c.bf16 %v264, %v264
    %v268 = vperm.slane %v131, 1
    %v273 = vunpack.c.l.b16 %v127
    %v274 = vunpack.c.l.b16 %v128
    %v275 = vunpack.c.l.b16 %v129
    %v276 = vunpack.c.l.b16 %v130
    %v277 = vpack.c.b16 %v274, %v273
    %v278 = vpack.c.b16 %v276, %v275
    %v282 = vsel %vm132, %v265, 0
    %v285 = vsel %vm132, %v266, 0
    %v288 = vsel %vm132, %v267, 0
    %290 = vmatpush.bf16.msra.mxu0 0
    %291 = vmatpush.bf16.msra.mxu0 0
    %292 = vmatpush.bf16.msra.mxu0 0
    %293 = vmatpush.bf16.msra.mxu0 0
    %294 = vmatpush.bf16.msra.mxu0 0
    %295 = vmatpush.bf16.msra.mxu0 0
    %296 = vmatpush.bf16.msra.mxu0 %v278
    %297 = vmatpush.bf16.msra.mxu0 %v277
    %298 = vmatmul.bf16.gmra.mxu0 %v282
    %v299 = vpop.f32.mrf.mxu0
    %v300 = vadd.f32 %v268, %v299
    %v301 = vpop.f32.mrf.mxu0
    %v302 = vadd.f32 %v268, %v301
    %303 = vmatmul.bf16.gmra.mxu0 %v285
    %v304 = vpop.f32.mrf.mxu0
    %v305 = vadd.f32 %v268, %v304
    %v306 = vpop.f32.mrf.mxu0
    %v307 = vadd.f32 %v268, %v306
    %308 = vmatmul.bf16.gmra.mxu0 %v288
    %v309 = vpop.f32.mrf.mxu0
    %v310 = vadd.f32 %v268, %v309
    %v311 = vpop.f32.mrf.mxu0
    %312 = vdwg.mxu0
    %v313 = vpack.c.bf16 %v302, %v300
    %v314 = vpack.c.bf16 %v307, %v305
    %v315 = vpack.c.bf16 %v310, %v310
    %319 = vrot.lane.b32.xlu0 %v313, 96
    %v320 = vpop.permute.xlu0 %319
    %321 = vrot.lane.b32.xlu0 %v314, 96
    %v322 = vpop.permute.xlu0 %321
    %323 = vrot.lane.b32.xlu0 %v315, 96
    %v324 = vpop.permute.xlu0 %323
    %vm325 = vcmask 64512
    %v327 = vsel %vm325, %v313, 0
    %v330 = vsel %vm325, %v314, 0
    %v333 = vsel %vm325, %v315, 0
    %v336 = vsel %vm325, %v320, 0
    %v339 = vsel %vm325, %v322, 0
    %v342 = vsel %vm325, %v324, 0
    %344 = vmatpush.bf16.xpose.msra.mxu0 0
    %345 = vmatpush.bf16.xpose.msra.mxu0 0
    %346 = vmatpush.bf16.xpose.msra.mxu0 0
    %347 = vmatpush.bf16.xpose.msra.mxu0 0
    %348 = vmatpush.bf16.xpose.msra.mxu0 0
    %349 = vmatpush.bf16.xpose.msra.mxu0 %v342
    %350 = vmatpush.bf16.xpose.msra.mxu0 %v339
    %351 = vmatpush.bf16.xpose.msra.mxu0 %v336
    %352 = vmatmul.bf16.gmra.mxu0 %v327
    %v353 = vpop.f32.mrf.mxu0
    %v354 = vadd.f32 %v34, %v353
    %v355 = vpop.f32.mrf.mxu0
    %v356 = vadd.f32 %v35, %v355
    %357 = vmatmul.bf16.gmra.mxu0 %v330
    %v358 = vpop.f32.mrf.mxu0
    %v359 = vadd.f32 %v36, %v358
    %v360 = vpop.f32.mrf.mxu0
    %v361 = vadd.f32 %v37, %v360
    %362 = vmatmul.bf16.gmra.mxu0 %v333
    %v363 = vpop.f32.mrf.mxu0
    %v364 = vadd.f32 %v38, %v363
    %v365 = vpop.f32.mrf.mxu0
    %366 = vdwg.mxu0
    %vm367 = vcmask 326656
    %v368 = vsel %vm367, %v354, -inf
    %369 = vmax.xlane.f32.xlu0 %v368
    %v370 = vpop.xlane.xlu0 %369
    %v371 = vsel %vm367, %v356, -inf
    %372 = vmax.xlane.f32.xlu0 %v371
    %v373 = vpop.xlane.xlu0 %372
    %v374 = vsel %vm367, %v359, -inf
    %375 = vmax.xlane.f32.xlu0 %v374
    %v376 = vpop.xlane.xlu0 %375
    %v377 = vsel %vm367, %v361, -inf
    %378 = vmax.xlane.f32.xlu0 %v377
    %v379 = vpop.xlane.xlu0 %378
    %v380 = vsel %vm367, %v364, -inf
    %381 = vmax.xlane.f32.xlu0 %v380
    %v382 = vpop.xlane.xlu0 %381
    %v383 = vsub.f32 %v354, %v370
    %v384 = vsub.f32 %v356, %v373
    %v385 = vsub.f32 %v359, %v376
    %v386 = vsub.f32 %v361, %v379
    %v387 = vsub.f32 %v364, %v382
    %v388 = vmul.f32 %v383, 1.442695
    %v389 = vpow.pop %v388
    %v390 = vmul.f32 %v384, 1.442695
    %v391 = vpow.pop %v390
    %v392 = vmul.f32 %v385, 1.442695
    %v393 = vpow.pop %v392
    %v394 = vmul.f32 %v386, 1.442695
    %v395 = vpow.pop %v394
    %v396 = vmul.f32 %v387, 1.442695
    %v397 = vpow.pop %v396
    %v398 = vsel %vm367, %v389, 0.0
    %399 = vadd.xlane.f32.xlu0 %v398
    %v400 = vpop.xlane.xlu0 %399
    %v401 = vsel %vm367, %v391, 0.0
    %402 = vadd.xlane.f32.xlu0 %v401
    %v403 = vpop.xlane.xlu0 %402
    %v404 = vsel %vm367, %v393, 0.0
    %405 = vadd.xlane.f32.xlu0 %v404
    %v406 = vpop.xlane.xlu0 %405
    %v407 = vsel %vm367, %v395, 0.0
    %408 = vadd.xlane.f32.xlu0 %v407
    %v409 = vpop.xlane.xlu0 %408
    %v410 = vsel %vm367, %v397, 0.0
    %411 = vadd.xlane.f32.xlu0 %v410
    %v412 = vpop.xlane.xlu0 %411
    %v413 = vrcp.pop %v400
    %v414 = vrcp.pop %v403
    %v415 = vrcp.pop %v406
    %v416 = vrcp.pop %v409
    %v417 = vrcp.pop %v412
    %v418 = vmul.f32 %v389, %v413
    %v419 = vmul.f32 %v391, %v414
    %v420 = vmul.f32 %v393, %v415
    %v421 = vmul.f32 %v395, %v416
    %v422 = vmul.f32 %v397, %v417
    %v423 = vpack.c.bf16 %v419, %v418
    %v424 = vpack.c.bf16 %v421, %v420
    %v425 = vpack.c.bf16 %v422, %v422
    %426 = vrot.lane.b32.xlu0 %v313, 64
    %v427 = vpop.permute.xlu0 %426
    %428 = vrot.lane.b32.xlu0 %v314, 64
    %v429 = vpop.permute.xlu0 %428
    %430 = vrot.lane.b32.xlu0 %v315, 64
    %v431 = vpop.permute.xlu0 %430
    %v435 = vsel %vm367, %v423, 0
    %v438 = vsel %vm367, %v424, 0
    %v441 = vsel %vm367, %v425, 0
    %vm443 = vcmask 1043456
    %v445 = vsel %vm443, %v431, 0
    %447 = vmatpush.bf16.msra.mxu0 0
    %448 = vmatpush.bf16.msra.mxu0 0
    %449 = vmatpush.bf16.msra.mxu0 0
    %450 = vmatpush.bf16.msra.mxu0 0
    %451 = vmatpush.bf16.msra.mxu0 0
    %452 = vmatpush.bf16.msra.mxu0 %v445
    %453 = vmatpush.bf16.msra.mxu0 %v429
    %454 = vmatpush.bf16.msra.mxu0 %v427
    %455 = vmatmul.bf16.gmra.mxu0 %v435
    %v456 = vpop.f32.mrf.mxu0
    %v457 = vadd.f32 0.0, %v456
    %v458 = vpop.f32.mrf.mxu0
    %v459 = vadd.f32 0.0, %v458
    %460 = vmatmul.bf16.gmra.mxu0 %v438
    %v461 = vpop.f32.mrf.mxu0
    %v462 = vadd.f32 0.0, %v461
    %v463 = vpop.f32.mrf.mxu0
    %v464 = vadd.f32 0.0, %v463
    %465 = vmatmul.bf16.gmra.mxu0 %v441
    %v466 = vpop.f32.mrf.mxu0
    %v467 = vadd.f32 0.0, %v466
    %v468 = vpop.f32.mrf.mxu0
    %469 = vdwg.mxu0
    %470 = vrot.lane.b32.xlu0 %v313, 120
    %v471 = vpop.permute.xlu0 %470
    %472 = vrot.lane.b32.xlu0 %v314, 120
    %v473 = vpop.permute.xlu0 %472
    %474 = vrot.lane.b32.xlu0 %v315, 120
    %v475 = vpop.permute.xlu0 %474
    %476 = vrot.lane.b32.xlu0 %v313, 88
    %v477 = vpop.permute.xlu0 %476
    %478 = vrot.lane.b32.xlu0 %v314, 88
    %v479 = vpop.permute.xlu0 %478
    %480 = vrot.lane.b32.xlu0 %v315, 88
    %v481 = vpop.permute.xlu0 %480
    %v483 = vsel %vm325, %v471, 0
    %v486 = vsel %vm325, %v473, 0
    %v489 = vsel %vm325, %v475, 0
    %v492 = vsel %vm325, %v477, 0
    %v495 = vsel %vm325, %v479, 0
    %v498 = vsel %vm325, %v481, 0
    %500 = vmatpush.bf16.xpose.msra.mxu0 0
    %501 = vmatpush.bf16.xpose.msra.mxu0 0
    %502 = vmatpush.bf16.xpose.msra.mxu0 0
    %503 = vmatpush.bf16.xpose.msra.mxu0 0
    %504 = vmatpush.bf16.xpose.msra.mxu0 0
    %505 = vmatpush.bf16.xpose.msra.mxu0 %v498
    %506 = vmatpush.bf16.xpose.msra.mxu0 %v495
    %507 = vmatpush.bf16.xpose.msra.mxu0 %v492
    %508 = vmatmul.bf16.gmra.mxu0 %v483
    %v509 = vpop.f32.mrf.mxu0
    %v510 = vadd.f32 %v34, %v509
    %v511 = vpop.f32.mrf.mxu0
    %v512 = vadd.f32 %v35, %v511
    %513 = vmatmul.bf16.gmra.mxu0 %v486
    %v514 = vpop.f32.mrf.mxu0
    %v515 = vadd.f32 %v36, %v514
    %v516 = vpop.f32.mrf.mxu0
    %v517 = vadd.f32 %v37, %v516
    %518 = vmatmul.bf16.gmra.mxu0 %v489
    %v519 = vpop.f32.mrf.mxu0
    %v520 = vadd.f32 %v38, %v519
    %v521 = vpop.f32.mrf.mxu0
    %522 = vdwg.mxu0
    %v523 = vsel %vm367, %v510, -inf
    %524 = vmax.xlane.f32.xlu0 %v523
    %v525 = vpop.xlane.xlu0 %524
    %v526 = vsel %vm367, %v512, -inf
    %527 = vmax.xlane.f32.xlu0 %v526
    %v528 = vpop.xlane.xlu0 %527
    %v529 = vsel %vm367, %v515, -inf
    %530 = vmax.xlane.f32.xlu0 %v529
    %v531 = vpop.xlane.xlu0 %530
    %v532 = vsel %vm367, %v517, -inf
    %533 = vmax.xlane.f32.xlu0 %v532
    %v534 = vpop.xlane.xlu0 %533
    %v535 = vsel %vm367, %v520, -inf
    %536 = vmax.xlane.f32.xlu0 %v535
    %v537 = vpop.xlane.xlu0 %536
    %v538 = vsub.f32 %v510, %v525
    %v539 = vsub.f32 %v512, %v528
    %v540 = vsub.f32 %v515, %v531
    %v541 = vsub.f32 %v517, %v534
    %v542 = vsub.f32 %v520, %v537
    %v543 = vmul.f32 %v538, 1.442695
    %v544 = vpow.pop %v543
    %v545 = vmul.f32 %v539, 1.442695
    %v546 = vpow.pop %v545
    %v547 = vmul.f32 %v540, 1.442695
    %v548 = vpow.pop %v547
    %v549 = vmul.f32 %v541, 1.442695
    %v550 = vpow.pop %v549
    %v551 = vmul.f32 %v542, 1.442695
    %v552 = vpow.pop %v551
    %v553 = vsel %vm367, %v544, 0.0
    %554 = vadd.xlane.f32.xlu0 %v553
    %v555 = vpop.xlane.xlu0 %554
    %v556 = vsel %vm367, %v546, 0.0
    %557 = vadd.xlane.f32.xlu0 %v556
    %v558 = vpop.xlane.xlu0 %557
    %v559 = vsel %vm367, %v548, 0.0
    %560 = vadd.xlane.f32.xlu0 %v559
    %v561 = vpop.xlane.xlu0 %560
    %v562 = vsel %vm367, %v550, 0.0
    %563 = vadd.xlane.f32.xlu0 %v562
    %v564 = vpop.xlane.xlu0 %563
    %v565 = vsel %vm367, %v552, 0.0
    %566 = vadd.xlane.f32.xlu0 %v565
    %v567 = vpop.xlane.xlu0 %566
    %v568 = vrcp.pop %v555
    %v569 = vrcp.pop %v558
    %v570 = vrcp.pop %v561
    %v571 = vrcp.pop %v564
    %v572 = vrcp.pop %v567
    %v573 = vmul.f32 %v544, %v568
    %v574 = vmul.f32 %v546, %v569
    %v575 = vmul.f32 %v548, %v570
    %v576 = vmul.f32 %v550, %v571
    %v577 = vmul.f32 %v552, %v572
    %v578 = vpack.c.bf16 %v574, %v573
    %v579 = vpack.c.bf16 %v576, %v575
    %v580 = vpack.c.bf16 %v577, %v577
    %581 = vrot.lane.b32.xlu0 %v313, 56
    %v582 = vpop.permute.xlu0 %581
    %583 = vrot.lane.b32.xlu0 %v314, 56
    %v584 = vpop.permute.xlu0 %583
    %585 = vrot.lane.b32.xlu0 %v315, 56
    %v586 = vpop.permute.xlu0 %585
    %v590 = vsel %vm367, %v578, 0
    %v593 = vsel %vm367, %v579, 0
    %v596 = vsel %vm367, %v580, 0
    %v599 = vsel %vm443, %v586, 0
    %601 = vmatpush.bf16.msra.mxu0 0
    %602 = vmatpush.bf16.msra.mxu0 0
    %603 = vmatpush.bf16.msra.mxu0 0
    %604 = vmatpush.bf16.msra.mxu0 0
    %605 = vmatpush.bf16.msra.mxu0 0
    %606 = vmatpush.bf16.msra.mxu0 %v599
    %607 = vmatpush.bf16.msra.mxu0 %v584
    %608 = vmatpush.bf16.msra.mxu0 %v582
    %609 = vmatmul.bf16.gmra.mxu0 %v590
    %v610 = vpop.f32.mrf.mxu0
    %v611 = vadd.f32 0.0, %v610
    %v612 = vpop.f32.mrf.mxu0
    %v613 = vadd.f32 0.0, %v612
    %614 = vmatmul.bf16.gmra.mxu0 %v593
    %v615 = vpop.f32.mrf.mxu0
    %v616 = vadd.f32 0.0, %v615
    %v617 = vpop.f32.mrf.mxu0
    %v618 = vadd.f32 0.0, %v617
    %619 = vmatmul.bf16.gmra.mxu0 %v596
    %v620 = vpop.f32.mrf.mxu0
    %v621 = vadd.f32 0.0, %v620
    %v622 = vpop.f32.mrf.mxu0
    %623 = vdwg.mxu0
    %624 = vrot.lane.b32.xlu0 %v313, 112
    %v625 = vpop.permute.xlu0 %624
    %626 = vrot.lane.b32.xlu0 %v314, 112
    %v627 = vpop.permute.xlu0 %626
    %628 = vrot.lane.b32.xlu0 %v315, 112
    %v629 = vpop.permute.xlu0 %628
    %630 = vrot.lane.b32.xlu0 %v313, 80
    %v631 = vpop.permute.xlu0 %630
    %632 = vrot.lane.b32.xlu0 %v314, 80
    %v633 = vpop.permute.xlu0 %632
    %634 = vrot.lane.b32.xlu0 %v315, 80
    %v635 = vpop.permute.xlu0 %634
    %v637 = vsel %vm325, %v625, 0
    %v640 = vsel %vm325, %v627, 0
    %v643 = vsel %vm325, %v629, 0
    %v646 = vsel %vm325, %v631, 0
    %v649 = vsel %vm325, %v633, 0
    %v652 = vsel %vm325, %v635, 0
    %654 = vmatpush.bf16.xpose.msra.mxu0 0
    %655 = vmatpush.bf16.xpose.msra.mxu0 0
    %656 = vmatpush.bf16.xpose.msra.mxu0 0
    %657 = vmatpush.bf16.xpose.msra.mxu0 0
    %658 = vmatpush.bf16.xpose.msra.mxu0 0
    %659 = vmatpush.bf16.xpose.msra.mxu0 %v652
    %660 = vmatpush.bf16.xpose.msra.mxu0 %v649
    %661 = vmatpush.bf16.xpose.msra.mxu0 %v646
    %662 = vmatmul.bf16.gmra.mxu0 %v637
    %v663 = vpop.f32.mrf.mxu0
    %v664 = vadd.f32 %v34, %v663
    %v665 = vpop.f32.mrf.mxu0
    %v666 = vadd.f32 %v35, %v665
    %667 = vmatmul.bf16.gmra.mxu0 %v640
    %v668 = vpop.f32.mrf.mxu0
    %v669 = vadd.f32 %v36, %v668
    %v670 = vpop.f32.mrf.mxu0
    %v671 = vadd.f32 %v37, %v670
    %672 = vmatmul.bf16.gmra.mxu0 %v643
    %v673 = vpop.f32.mrf.mxu0
    %v674 = vadd.f32 %v38, %v673
    %v675 = vpop.f32.mrf.mxu0
    %676 = vdwg.mxu0
    %v677 = vsel %vm367, %v664, -inf
    %678 = vmax.xlane.f32.xlu0 %v677
    %v679 = vpop.xlane.xlu0 %678
    %v680 = vsel %vm367, %v666, -inf
    %681 = vmax.xlane.f32.xlu0 %v680
    %v682 = vpop.xlane.xlu0 %681
    %v683 = vsel %vm367, %v669, -inf
    %684 = vmax.xlane.f32.xlu0 %v683
    %v685 = vpop.xlane.xlu0 %684
    %v686 = vsel %vm367, %v671, -inf
    %687 = vmax.xlane.f32.xlu0 %v686
    %v688 = vpop.xlane.xlu0 %687
    %v689 = vsel %vm367, %v674, -inf
    %690 = vmax.xlane.f32.xlu0 %v689
    %v691 = vpop.xlane.xlu0 %690
    %v692 = vsub.f32 %v664, %v679
    %v693 = vsub.f32 %v666, %v682
    %v694 = vsub.f32 %v669, %v685
    %v695 = vsub.f32 %v671, %v688
    %v696 = vsub.f32 %v674, %v691
    %v697 = vmul.f32 %v692, 1.442695
    %v698 = vpow.pop %v697
    %v699 = vmul.f32 %v693, 1.442695
    %v700 = vpow.pop %v699
    %v701 = vmul.f32 %v694, 1.442695
    %v702 = vpow.pop %v701
    %v703 = vmul.f32 %v695, 1.442695
    %v704 = vpow.pop %v703
    %v705 = vmul.f32 %v696, 1.442695
    %v706 = vpow.pop %v705
    %v707 = vsel %vm367, %v698, 0.0
    %708 = vadd.xlane.f32.xlu0 %v707
    %v709 = vpop.xlane.xlu0 %708
    %v710 = vsel %vm367, %v700, 0.0
    %711 = vadd.xlane.f32.xlu0 %v710
    %v712 = vpop.xlane.xlu0 %711
    %v713 = vsel %vm367, %v702, 0.0
    %714 = vadd.xlane.f32.xlu0 %v713
    %v715 = vpop.xlane.xlu0 %714
    %v716 = vsel %vm367, %v704, 0.0
    %717 = vadd.xlane.f32.xlu0 %v716
    %v718 = vpop.xlane.xlu0 %717
    %v719 = vsel %vm367, %v706, 0.0
    %720 = vadd.xlane.f32.xlu0 %v719
    %v721 = vpop.xlane.xlu0 %720
    %v722 = vrcp.pop %v709
    %v723 = vrcp.pop %v712
    %v724 = vrcp.pop %v715
    %v725 = vrcp.pop %v718
    %v726 = vrcp.pop %v721
    %v727 = vmul.f32 %v698, %v722
    %v728 = vmul.f32 %v700, %v723
    %v729 = vmul.f32 %v702, %v724
    %v730 = vmul.f32 %v704, %v725
    %v731 = vmul.f32 %v706, %v726
    %v732 = vpack.c.bf16 %v728, %v727
    %v733 = vpack.c.bf16 %v730, %v729
    %v734 = vpack.c.bf16 %v731, %v731
    %735 = vrot.lane.b32.xlu0 %v313, 48
    %v736 = vpop.permute.xlu0 %735
    %737 = vrot.lane.b32.xlu0 %v314, 48
    %v738 = vpop.permute.xlu0 %737
    %739 = vrot.lane.b32.xlu0 %v315, 48
    %v740 = vpop.permute.xlu0 %739
    %v744 = vsel %vm367, %v732, 0
    %v747 = vsel %vm367, %v733, 0
    %v750 = vsel %vm367, %v734, 0
    %v753 = vsel %vm443, %v740, 0
    %755 = vmatpush.bf16.msra.mxu0 0
    %756 = vmatpush.bf16.msra.mxu0 0
    %757 = vmatpush.bf16.msra.mxu0 0
    %758 = vmatpush.bf16.msra.mxu0 0
    %759 = vmatpush.bf16.msra.mxu0 0
    %760 = vmatpush.bf16.msra.mxu0 %v753
    %761 = vmatpush.bf16.msra.mxu0 %v738
    %762 = vmatpush.bf16.msra.mxu0 %v736
    %763 = vmatmul.bf16.gmra.mxu0 %v744
    %v764 = vpop.f32.mrf.mxu0
    %v765 = vadd.f32 0.0, %v764
    %v766 = vpop.f32.mrf.mxu0
    %v767 = vadd.f32 0.0, %v766
    %768 = vmatmul.bf16.gmra.mxu0 %v747
    %v769 = vpop.f32.mrf.mxu0
    %v770 = vadd.f32 0.0, %v769
    %v771 = vpop.f32.mrf.mxu0
    %v772 = vadd.f32 0.0, %v771
    %773 = vmatmul.bf16.gmra.mxu0 %v750
    %v774 = vpop.f32.mrf.mxu0
    %v775 = vadd.f32 0.0, %v774
    %v776 = vpop.f32.mrf.mxu0
    %777 = vdwg.mxu0
    %778 = vrot.lane.b32.xlu0 %v313, 104
    %v779 = vpop.permute.xlu0 %778
    %780 = vrot.lane.b32.xlu0 %v314, 104
    %v781 = vpop.permute.xlu0 %780
    %782 = vrot.lane.b32.xlu0 %v315, 104
    %v783 = vpop.permute.xlu0 %782
    %784 = vrot.lane.b32.xlu0 %v313, 72
    %v785 = vpop.permute.xlu0 %784
    %786 = vrot.lane.b32.xlu0 %v314, 72
    %v787 = vpop.permute.xlu0 %786
    %788 = vrot.lane.b32.xlu0 %v315, 72
    %v789 = vpop.permute.xlu0 %788
    %v791 = vsel %vm325, %v779, 0
    %v794 = vsel %vm325, %v781, 0
    %v797 = vsel %vm325, %v783, 0
    %v800 = vsel %vm325, %v785, 0
    %v803 = vsel %vm325, %v787, 0
    %v806 = vsel %vm325, %v789, 0
    %808 = vmatpush.bf16.xpose.msra.mxu0 0
    %809 = vmatpush.bf16.xpose.msra.mxu0 0
    %810 = vmatpush.bf16.xpose.msra.mxu0 0
    %811 = vmatpush.bf16.xpose.msra.mxu0 0
    %812 = vmatpush.bf16.xpose.msra.mxu0 0
    %813 = vmatpush.bf16.xpose.msra.mxu0 %v806
    %814 = vmatpush.bf16.xpose.msra.mxu0 %v803
    %815 = vmatpush.bf16.xpose.msra.mxu0 %v800
    %816 = vmatmul.bf16.gmra.mxu0 %v791
    %v817 = vpop.f32.mrf.mxu0
    %v818 = vadd.f32 %v34, %v817
    %v819 = vpop.f32.mrf.mxu0
    %v820 = vadd.f32 %v35, %v819
    %821 = vmatmul.bf16.gmra.mxu0 %v794
    %v822 = vpop.f32.mrf.mxu0
    %v823 = vadd.f32 %v36, %v822
    %v824 = vpop.f32.mrf.mxu0
    %v825 = vadd.f32 %v37, %v824
    %826 = vmatmul.bf16.gmra.mxu0 %v797
    %v827 = vpop.f32.mrf.mxu0
    %v828 = vadd.f32 %v38, %v827
    %v829 = vpop.f32.mrf.mxu0
    %830 = vdwg.mxu0
    %v831 = vsel %vm367, %v818, -inf
    %832 = vmax.xlane.f32.xlu0 %v831
    %v833 = vpop.xlane.xlu0 %832
    %v834 = vsel %vm367, %v820, -inf
    %835 = vmax.xlane.f32.xlu0 %v834
    %v836 = vpop.xlane.xlu0 %835
    %v837 = vsel %vm367, %v823, -inf
    %838 = vmax.xlane.f32.xlu0 %v837
    %v839 = vpop.xlane.xlu0 %838
    %v840 = vsel %vm367, %v825, -inf
    %841 = vmax.xlane.f32.xlu0 %v840
    %v842 = vpop.xlane.xlu0 %841
    %v843 = vsel %vm367, %v828, -inf
    %844 = vmax.xlane.f32.xlu0 %v843
    %v845 = vpop.xlane.xlu0 %844
    %v846 = vsub.f32 %v818, %v833
    %v847 = vsub.f32 %v820, %v836
    %v848 = vsub.f32 %v823, %v839
    %v849 = vsub.f32 %v825, %v842
    %v850 = vsub.f32 %v828, %v845
    %v851 = vmul.f32 %v846, 1.442695
    %v852 = vpow.pop %v851
    %v853 = vmul.f32 %v847, 1.442695
    %v854 = vpow.pop %v853
    %v855 = vmul.f32 %v848, 1.442695
    %v856 = vpow.pop %v855
    %v857 = vmul.f32 %v849, 1.442695
    %v858 = vpow.pop %v857
    %v859 = vmul.f32 %v850, 1.442695
    %v860 = vpow.pop %v859
    %v861 = vsel %vm367, %v852, 0.0
    %862 = vadd.xlane.f32.xlu0 %v861
    %v863 = vpop.xlane.xlu0 %862
    %v864 = vsel %vm367, %v854, 0.0
    %865 = vadd.xlane.f32.xlu0 %v864
    %v866 = vpop.xlane.xlu0 %865
    %v867 = vsel %vm367, %v856, 0.0
    %868 = vadd.xlane.f32.xlu0 %v867
    %v869 = vpop.xlane.xlu0 %868
    %v870 = vsel %vm367, %v858, 0.0
    %871 = vadd.xlane.f32.xlu0 %v870
    %v872 = vpop.xlane.xlu0 %871
    %v873 = vsel %vm367, %v860, 0.0
    %874 = vadd.xlane.f32.xlu0 %v873
    %v875 = vpop.xlane.xlu0 %874
    %v876 = vrcp.pop %v863
    %v877 = vrcp.pop %v866
    %v878 = vrcp.pop %v869
    %v879 = vrcp.pop %v872
    %v880 = vrcp.pop %v875
    %v881 = vmul.f32 %v852, %v876
    %v882 = vmul.f32 %v854, %v877
    %v883 = vmul.f32 %v856, %v878
    %v884 = vmul.f32 %v858, %v879
    %v885 = vmul.f32 %v860, %v880
    %v886 = vpack.c.bf16 %v882, %v881
    %v887 = vpack.c.bf16 %v884, %v883
    %v888 = vpack.c.bf16 %v885, %v885
    %889 = vrot.lane.b32.xlu0 %v313, 40
    %v890 = vpop.permute.xlu0 %889
    %891 = vrot.lane.b32.xlu0 %v314, 40
    %v892 = vpop.permute.xlu0 %891
    %893 = vrot.lane.b32.xlu0 %v315, 40
    %v894 = vpop.permute.xlu0 %893
    %v898 = vsel %vm367, %v886, 0
    %v901 = vsel %vm367, %v887, 0
    %v904 = vsel %vm367, %v888, 0
    %v907 = vsel %vm443, %v894, 0
    %909 = vmatpush.bf16.msra.mxu0 0
    %910 = vmatpush.bf16.msra.mxu0 0
    %911 = vmatpush.bf16.msra.mxu0 0
    %912 = vmatpush.bf16.msra.mxu0 0
    %913 = vmatpush.bf16.msra.mxu0 0
    %914 = vmatpush.bf16.msra.mxu0 %v907
    %915 = vmatpush.bf16.msra.mxu0 %v892
    %916 = vmatpush.bf16.msra.mxu0 %v890
    %917 = vmatmul.bf16.gmra.mxu0 %v898
    %v918 = vpop.f32.mrf.mxu0
    %v919 = vadd.f32 0.0, %v918
    %v920 = vpop.f32.mrf.mxu0
    %v921 = vadd.f32 0.0, %v920
    %922 = vmatmul.bf16.gmra.mxu0 %v901
    %v923 = vpop.f32.mrf.mxu0
    %v924 = vadd.f32 0.0, %v923
    %v925 = vpop.f32.mrf.mxu0
    %v926 = vadd.f32 0.0, %v925
    %927 = vmatmul.bf16.gmra.mxu0 %v904
    %v928 = vpop.f32.mrf.mxu0
    %v929 = vadd.f32 0.0, %v928
    %v930 = vpop.f32.mrf.mxu0
    %931 = vdwg.mxu0
    %937 = vrot.lane.b32.xlu0 %v611, 8
    %v938 = vpop.permute.xlu0 %937
    %939 = vrot.lane.b32.xlu0 %v613, 8
    %v940 = vpop.permute.xlu0 %939
    %941 = vrot.lane.b32.xlu0 %v616, 8
    %v942 = vpop.permute.xlu0 %941
    %943 = vrot.lane.b32.xlu0 %v618, 8
    %v944 = vpop.permute.xlu0 %943
    %945 = vrot.lane.b32.xlu0 %v621, 8
    %v946 = vpop.permute.xlu0 %945
    %957 = vrot.lane.b32.xlu0 %v765, 16
    %v958 = vpop.permute.xlu0 %957
    %959 = vrot.lane.b32.xlu0 %v767, 16
    %v960 = vpop.permute.xlu0 %959
    %961 = vrot.lane.b32.xlu0 %v770, 16
    %v962 = vpop.permute.xlu0 %961
    %963 = vrot.lane.b32.xlu0 %v772, 16
    %v964 = vpop.permute.xlu0 %963
    %965 = vrot.lane.b32.xlu0 %v775, 16
    %v966 = vpop.permute.xlu0 %965
    %977 = vrot.lane.b32.xlu0 %v919, 24
    %v978 = vpop.permute.xlu0 %977
    %979 = vrot.lane.b32.xlu0 %v921, 24
    %v980 = vpop.permute.xlu0 %979
    %981 = vrot.lane.b32.xlu0 %v924, 24
    %v982 = vpop.permute.xlu0 %981
    %983 = vrot.lane.b32.xlu0 %v926, 24
    %v984 = vpop.permute.xlu0 %983
    %985 = vrot.lane.b32.xlu0 %v929, 24
    %v986 = vpop.permute.xlu0 %985
    %v992 = vsel %vm325, %v457, %v938
    %v993 = vsel %vm325, %v459, %v940
    %v994 = vsel %vm325, %v462, %v942
    %v995 = vsel %vm325, %v464, %v944
    %v996 = vsel %vm325, %v467, %v946
    %vm997 = vcmask 130048
    %v998 = vsel %vm997, %v992, %v958
    %v999 = vsel %vm997, %v993, %v960
    %v1000 = vsel %vm997, %v994, %v962
    %v1001 = vsel %vm997, %v995, %v964
    %v1002 = vsel %vm997, %v996, %v966
    %vm1003 = vcmask 195584
    %v1004 = vsel %vm1003, %v998, %v978
    %v1005 = vsel %vm1003, %v999, %v980
    %v1006 = vsel %vm1003, %v1000, %v982
    %v1007 = vsel %vm1003, %v1001, %v984
    %v1008 = vsel %vm1003, %v1002, %v986
    %v1009 = vpack.c.bf16 %v1005, %v1004
    %v1010 = vpack.c.bf16 %v1007, %v1006
    %v1011 = vpack.c.bf16 %v1008, %v1008
    %1012 = vrot.lane.b32.xlu0 %v277, 32
    %v1013 = vpop.permute.xlu0 %1012
    %1014 = vrot.lane.b32.xlu0 %v278, 32
    %v1015 = vpop.permute.xlu0 %1014
    %1019 = vrot.lane.b32.xlu0 %v268, 32
    %v1020 = vpop.permute.xlu0 %1019
    %v1023 = vsel %vm132, %v1009, 0
    %v1026 = vsel %vm132, %v1010, 0
    %v1029 = vsel %vm132, %v1011, 0
    %1031 = vmatpush.bf16.msra.mxu0 0
    %1032 = vmatpush.bf16.msra.mxu0 0
    %1033 = vmatpush.bf16.msra.mxu0 0
    %1034 = vmatpush.bf16.msra.mxu0 0
    %1035 = vmatpush.bf16.msra.mxu0 0
    %1036 = vmatpush.bf16.msra.mxu0 0
    %1037 = vmatpush.bf16.msra.mxu0 %v1015
    %1038 = vmatpush.bf16.msra.mxu0 %v1013
    %1039 = vmatmul.bf16.gmra.mxu0 %v1023
    %v1040 = vpop.f32.mrf.mxu0
    %v1041 = vadd.f32 %v1020, %v1040
    %v1042 = vpop.f32.mrf.mxu0
    %v1043 = vadd.f32 %v1020, %v1042
    %1044 = vmatmul.bf16.gmra.mxu0 %v1026
    %v1045 = vpop.f32.mrf.mxu0
    %v1046 = vadd.f32 %v1020, %v1045
    %v1047 = vpop.f32.mrf.mxu0
    %v1048 = vadd.f32 %v1020, %v1047
    %1049 = vmatmul.bf16.gmra.mxu0 %v1029
    %v1050 = vpop.f32.mrf.mxu0
    %v1051 = vadd.f32 %v1020, %v1050
    %v1052 = vpop.f32.mrf.mxu0
    %1053 = vdwg.mxu0
    %v1054 = vadd.f32 %v114, %v1041
    %v1055 = vadd.f32 %v116, %v1043
    %v1056 = vadd.f32 %v119, %v1046
    %v1057 = vadd.f32 %v121, %v1048
    %v1058 = vadd.f32 %v124, %v1051
    %v1059 = vsel %vm132, %v1054, 0.0
    %1060 = vadd.xlane.f32.xlu0 %v1059
    %v1061 = vpop.xlane.xlu0 %1060
    %v1062 = vsel %vm132, %v1055, 0.0
    %1063 = vadd.xlane.f32.xlu0 %v1062
    %v1064 = vpop.xlane.xlu0 %1063
    %v1065 = vsel %vm132, %v1056, 0.0
    %1066 = vadd.xlane.f32.xlu0 %v1065
    %v1067 = vpop.xlane.xlu0 %1066
    %v1068 = vsel %vm132, %v1057, 0.0
    %1069 = vadd.xlane.f32.xlu0 %v1068
    %v1070 = vpop.xlane.xlu0 %1069
    %v1071 = vsel %vm132, %v1058, 0.0
    %1072 = vadd.xlane.f32.xlu0 %v1071
    %v1073 = vpop.xlane.xlu0 %1072
    %v1074 = vmul.f32 %v1061, %v154
    %v1075 = vmul.f32 %v1064, %v154
    %v1076 = vmul.f32 %v1067, %v154
    %v1077 = vmul.f32 %v1070, %v154
    %v1078 = vmul.f32 %v1073, %v154
    %v1079 = vsub.f32 %v1054, %v1074
    %v1080 = vsub.f32 %v1055, %v1075
    %v1081 = vsub.f32 %v1056, %v1076
    %v1082 = vsub.f32 %v1057, %v1077
    %v1083 = vsub.f32 %v1058, %v1078
    %v1084 = vmul.f32 %v1079, %v1079
    %v1085 = vmul.f32 %v1080, %v1080
    %v1086 = vmul.f32 %v1081, %v1081
    %v1087 = vmul.f32 %v1082, %v1082
    %v1088 = vmul.f32 %v1083, %v1083
    %v1089 = vsel %vm132, %v1084, 0.0
    %1090 = vadd.xlane.f32.xlu0 %v1089
    %v1091 = vpop.xlane.xlu0 %1090
    %v1092 = vsel %vm132, %v1085, 0.0
    %1093 = vadd.xlane.f32.xlu0 %v1092
    %v1094 = vpop.xlane.xlu0 %1093
    %v1095 = vsel %vm132, %v1086, 0.0
    %1096 = vadd.xlane.f32.xlu0 %v1095
    %v1097 = vpop.xlane.xlu0 %1096
    %v1098 = vsel %vm132, %v1087, 0.0
    %1099 = vadd.xlane.f32.xlu0 %v1098
    %v1100 = vpop.xlane.xlu0 %1099
    %v1101 = vsel %vm132, %v1088, 0.0
    %1102 = vadd.xlane.f32.xlu0 %v1101
    %v1103 = vpop.xlane.xlu0 %1102
    %v1104 = vmul.f32 %v1091, %v154
    %v1105 = vmul.f32 %v1094, %v154
    %v1106 = vmul.f32 %v1097, %v154
    %v1107 = vmul.f32 %v1100, %v154
    %v1108 = vmul.f32 %v1103, %v154
    %v1109 = vadd.f32 %v1104, 1e-05
    %v1110 = vadd.f32 %v1105, 1e-05
    %v1111 = vadd.f32 %v1106, 1e-05
    %v1112 = vadd.f32 %v1107, 1e-05
    %v1113 = vadd.f32 %v1108, 1e-05
    %v1114 = vrsqrt.pop %v1109
    %v1115 = vmul.f32 %v1114, %v1109
    %v1116 = vmul.f32 %v1115, %v1114
    %v1117 = vmul.f32 0.5, %v1116
    %v1118 = vsub.f32 1.5, %v1117
    %v1119 = vmul.f32 %v1114, %v1118
    %vm1120 = vweird.f32 %v1109
    %vm1121 = vweird.f32 %v1114
    %vm1122 = vmor %vm1120, %vm1121
    %v1123 = vsel %vm1122, %v1114, %v1119
    %v1124 = vrsqrt.pop %v1110
    %v1125 = vmul.f32 %v1124, %v1110
    %v1126 = vmul.f32 %v1125, %v1124
    %v1127 = vmul.f32 0.5, %v1126
    %v1128 = vsub.f32 1.5, %v1127
    %v1129 = vmul.f32 %v1124, %v1128
    %vm1130 = vweird.f32 %v1110
    %vm1131 = vweird.f32 %v1124
    %vm1132 = vmor %vm1130, %vm1131
    %v1133 = vsel %vm1132, %v1124, %v1129
    %v1134 = vrsqrt.pop %v1111
    %v1135 = vmul.f32 %v1134, %v1111
    %v1136 = vmul.f32 %v1135, %v1134
    %v1137 = vmul.f32 0.5, %v1136
    %v1138 = vsub.f32 1.5, %v1137
    %v1139 = vmul.f32 %v1134, %v1138
    %vm1140 = vweird.f32 %v1111
    %vm1141 = vweird.f32 %v1134
    %vm1142 = vmor %vm1140, %vm1141
    %v1143 = vsel %vm1142, %v1134, %v1139
    %v1144 = vrsqrt.pop %v1112
    %v1145 = vmul.f32 %v1144, %v1112
    %v1146 = vmul.f32 %v1145, %v1144
    %v1147 = vmul.f32 0.5, %v1146
    %v1148 = vsub.f32 1.5, %v1147
    %v1149 = vmul.f32 %v1144, %v1148
    %vm1150 = vweird.f32 %v1112
    %vm1151 = vweird.f32 %v1144
    %vm1152 = vmor %vm1150, %vm1151
    %v1153 = vsel %vm1152, %v1144, %v1149
    %v1154 = vrsqrt.pop %v1113
    %v1155 = vmul.f32 %v1154, %v1113
    %v1156 = vmul.f32 %v1155, %v1154
    %v1157 = vmul.f32 0.5, %v1156
    %v1158 = vsub.f32 1.5, %v1157
    %v1159 = vmul.f32 %v1154, %v1158
    %vm1160 = vweird.f32 %v1113
    %vm1161 = vweird.f32 %v1154
    %vm1162 = vmor %vm1160, %vm1161
    %v1163 = vsel %vm1162, %v1154, %v1159
    %v1164 = vmul.f32 %v1079, %v1123
    %v1165 = vmul.f32 %v1080, %v1133
    %v1166 = vmul.f32 %v1081, %v1143
    %v1167 = vmul.f32 %v1082, %v1153
    %v1168 = vmul.f32 %v1083, %v1163
    %1169 = vrot.lane.b32.xlu0 %v250, 64
    %v1170 = vpop.permute.xlu0 %1169
    %v1172 = vmul.f32 %v1164, %v1170
    %v1173 = vmul.f32 %v1165, %v1170
    %v1174 = vmul.f32 %v1166, %v1170
    %v1175 = vmul.f32 %v1167, %v1170
    %v1176 = vmul.f32 %v1168, %v1170
    %1177 = vrot.lane.b32.xlu0 %v250, 32
    %v1178 = vpop.permute.xlu0 %1177
    %v1180 = vadd.f32 %v1172, %v1178
    %v1181 = vadd.f32 %v1173, %v1178
    %v1182 = vadd.f32 %v1174, %v1178
    %v1183 = vadd.f32 %v1175, %v1178
    %v1184 = vadd.f32 %v1176, %v1178
    %v1185 = vpack.c.bf16 %v1181, %v1180
    %v1186 = vpack.c.bf16 %v1183, %v1182
    %v1187 = vpack.c.bf16 %v1184, %v1184
    %v1188 = vperm.slane %v131, 2
    %v1189 = vunpack.c.h.b16 %v127
    %v1190 = vunpack.c.h.b16 %v128
    %v1191 = vunpack.c.h.b16 %v129
    %v1192 = vunpack.c.h.b16 %v130
    %v1193 = vpack.c.b16 %v1190, %v1189
    %v1194 = vpack.c.b16 %v1192, %v1191
    %v1198 = vsel %vm132, %v1185, 0
    %v1201 = vsel %vm132, %v1186, 0
    %v1204 = vsel %vm132, %v1187, 0
    %1206 = vmatpush.bf16.msra.mxu0 0
    %1207 = vmatpush.bf16.msra.mxu0 0
    %1208 = vmatpush.bf16.msra.mxu0 0
    %1209 = vmatpush.bf16.msra.mxu0 0
    %1210 = vmatpush.bf16.msra.mxu0 0
    %1211 = vmatpush.bf16.msra.mxu0 0
    %1212 = vmatpush.bf16.msra.mxu0 %v1194
    %1213 = vmatpush.bf16.msra.mxu0 %v1193
    %1214 = vmatmul.bf16.gmra.mxu0 %v1198
    %v1215 = vpop.f32.mrf.mxu0
    %v1216 = vadd.f32 %v1188, %v1215
    %v1217 = vpop.f32.mrf.mxu0
    %v1218 = vadd.f32 %v1188, %v1217
    %1219 = vmatmul.bf16.gmra.mxu0 %v1201
    %v1220 = vpop.f32.mrf.mxu0
    %v1221 = vadd.f32 %v1188, %v1220
    %v1222 = vpop.f32.mrf.mxu0
    %v1223 = vadd.f32 %v1188, %v1222
    %1224 = vmatmul.bf16.gmra.mxu0 %v1204
    %v1225 = vpop.f32.mrf.mxu0
    %v1226 = vadd.f32 %v1188, %v1225
    %v1227 = vpop.f32.mrf.mxu0
    %1228 = vdwg.mxu0
    %v1229 = vxor.u32 %v1216, 2147483648
    %v1230 = vxor.u32 %v1218, 2147483648
    %v1231 = vxor.u32 %v1221, 2147483648
    %v1232 = vxor.u32 %v1223, 2147483648
    %v1233 = vxor.u32 %v1226, 2147483648
    %v1234 = vmul.f32 %v1229, 1.442695
    %v1235 = vpow.pop %v1234
    %v1236 = vmul.f32 %v1230, 1.442695
    %v1237 = vpow.pop %v1236
    %v1238 = vmul.f32 %v1231, 1.442695
    %v1239 = vpow.pop %v1238
    %v1240 = vmul.f32 %v1232, 1.442695
    %v1241 = vpow.pop %v1240
    %v1242 = vmul.f32 %v1233, 1.442695
    %v1243 = vpow.pop %v1242
    %v1244 = vadd.f32 %v1235, 1.0
    %v1245 = vadd.f32 %v1237, 1.0
    %v1246 = vadd.f32 %v1239, 1.0
    %v1247 = vadd.f32 %v1241, 1.0
    %v1248 = vadd.f32 %v1243, 1.0
    %v1249 = vrcp.pop %v1244
    %v1250 = vmul.f32 %v1244, %v1249
    %v1251 = vsub.f32 1.0, %v1250
    %v1252 = vmul.f32 %v1249, %v1251
    %v1253 = vadd.f32 %v1249, %v1252
    %vm1254 = vweird.f32 %v1244
    %vm1255 = vweird.f32 %v1249
    %vm1256 = vmor %vm1254, %vm1255
    %v1257 = vsel %vm1256, %v1249, %v1253
    %v1258 = vand.u32 2147483647, %v1244
    %vm1259 = vcmp.eq.f32.partialorder %v1258, 8.507059e+37
    %v1260 = vand.u32 %v1244, 2147483648
    %v1261 = vor.u32 1.1754944e-38, %v1260
    %v1262 = vsel %vm1259, %v1261, %v1257
    %v1263 = vmul.f32 1.0, %v1262
    %v1264 = vrcp.pop %v1245
    %v1265 = vmul.f32 %v1245, %v1264
    %v1266 = vsub.f32 1.0, %v1265
    %v1267 = vmul.f32 %v1264, %v1266
    %v1268 = vadd.f32 %v1264, %v1267
    %vm1269 = vweird.f32 %v1245
    %vm1270 = vweird.f32 %v1264
    %vm1271 = vmor %vm1269, %vm1270
    %v1272 = vsel %vm1271, %v1264, %v1268
    %v1273 = vand.u32 2147483647, %v1245
    %vm1274 = vcmp.eq.f32.partialorder %v1273, 8.507059e+37
    %v1275 = vand.u32 %v1245, 2147483648
    %v1276 = vor.u32 1.1754944e-38, %v1275
    %v1277 = vsel %vm1274, %v1276, %v1272
    %v1278 = vmul.f32 1.0, %v1277
    %v1279 = vrcp.pop %v1246
    %v1280 = vmul.f32 %v1246, %v1279
    %v1281 = vsub.f32 1.0, %v1280
    %v1282 = vmul.f32 %v1279, %v1281
    %v1283 = vadd.f32 %v1279, %v1282
    %vm1284 = vweird.f32 %v1246
    %vm1285 = vweird.f32 %v1279
    %vm1286 = vmor %vm1284, %vm1285
    %v1287 = vsel %vm1286, %v1279, %v1283
    %v1288 = vand.u32 2147483647, %v1246
    %vm1289 = vcmp.eq.f32.partialorder %v1288, 8.507059e+37
    %v1290 = vand.u32 %v1246, 2147483648
    %v1291 = vor.u32 1.1754944e-38, %v1290
    %v1292 = vsel %vm1289, %v1291, %v1287
    %v1293 = vmul.f32 1.0, %v1292
    %v1294 = vrcp.pop %v1247
    %v1295 = vmul.f32 %v1247, %v1294
    %v1296 = vsub.f32 1.0, %v1295
    %v1297 = vmul.f32 %v1294, %v1296
    %v1298 = vadd.f32 %v1294, %v1297
    %vm1299 = vweird.f32 %v1247
    %vm1300 = vweird.f32 %v1294
    %vm1301 = vmor %vm1299, %vm1300
    %v1302 = vsel %vm1301, %v1294, %v1298
    %v1303 = vand.u32 2147483647, %v1247
    %vm1304 = vcmp.eq.f32.partialorder %v1303, 8.507059e+37
    %v1305 = vand.u32 %v1247, 2147483648
    %v1306 = vor.u32 1.1754944e-38, %v1305
    %v1307 = vsel %vm1304, %v1306, %v1302
    %v1308 = vmul.f32 1.0, %v1307
    %v1309 = vrcp.pop %v1248
    %v1310 = vmul.f32 %v1248, %v1309
    %v1311 = vsub.f32 1.0, %v1310
    %v1312 = vmul.f32 %v1309, %v1311
    %v1313 = vadd.f32 %v1309, %v1312
    %vm1314 = vweird.f32 %v1248
    %vm1315 = vweird.f32 %v1309
    %vm1316 = vmor %vm1314, %vm1315
    %v1317 = vsel %vm1316, %v1309, %v1313
    %v1318 = vand.u32 2147483647, %v1248
    %vm1319 = vcmp.eq.f32.partialorder %v1318, 8.507059e+37
    %v1320 = vand.u32 %v1248, 2147483648
    %v1321 = vor.u32 1.1754944e-38, %v1320
    %v1322 = vsel %vm1319, %v1321, %v1317
    %v1323 = vmul.f32 1.0, %v1322
    %v1324 = vmul.f32 %v1216, %v1263
    %v1325 = vmul.f32 %v1218, %v1278
    %v1326 = vmul.f32 %v1221, %v1293
    %v1327 = vmul.f32 %v1223, %v1308
    %v1328 = vmul.f32 %v1226, %v1323
    %1334 = vrot.lane.b32.xlu0 %v1216, 64
    %v1335 = vpop.permute.xlu0 %1334
    %1336 = vrot.lane.b32.xlu0 %v1218, 64
    %v1337 = vpop.permute.xlu0 %1336
    %1338 = vrot.lane.b32.xlu0 %v1221, 64
    %v1339 = vpop.permute.xlu0 %1338
    %1340 = vrot.lane.b32.xlu0 %v1223, 64
    %v1341 = vpop.permute.xlu0 %1340
    %1342 = vrot.lane.b32.xlu0 %v1226, 64
    %v1343 = vpop.permute.xlu0 %1342
    %v1349 = vmul.f32 %v1324, %v1335
    %v1350 = vmul.f32 %v1325, %v1337
    %v1351 = vmul.f32 %v1326, %v1339
    %v1352 = vmul.f32 %v1327, %v1341
    %v1353 = vmul.f32 %v1328, %v1343
    %v1354 = vpack.c.bf16 %v1350, %v1349
    %v1355 = vpack.c.bf16 %v1352, %v1351
    %v1356 = vpack.c.bf16 %v1353, %v1353
    %v1357 = vld [vmem:[%s5] sm:$0xf]
    %v1358 = vld [vmem:[%s5 + $0x4] sm:$0xf]
    %v1359 = vld [vmem:[%s5 + $0x8] sm:$0xf]
    %v1360 = vld [vmem:[%s5 + $0xc] sm:$0xf]
    %v1361 = vld [vmem:[%s5 + $0x10] sm:$0xf]
    %v1362 = vld [vmem:[%s5 + $0x14] sm:$0xf]
    %v1363 = vld [vmem:[%s5 + $0x18] sm:$0xf]
    %v1364 = vld [vmem:[%s5 + $0x1c] sm:$0xf]
    %v1373 = vunpack.c.l.b16 %v1357
    %v1374 = vunpack.c.l.b16 %v1358
    %v1375 = vunpack.c.l.b16 %v1359
    %v1376 = vunpack.c.l.b16 %v1360
    %v1377 = vunpack.c.l.b16 %v1361
    %v1378 = vunpack.c.l.b16 %v1362
    %v1379 = vunpack.c.l.b16 %v1363
    %v1380 = vunpack.c.l.b16 %v1364
    %v1381 = vpack.c.b16 %v1374, %v1373
    %v1382 = vpack.c.b16 %v1376, %v1375
    %v1383 = vpack.c.b16 %v1378, %v1377
    %v1384 = vpack.c.b16 %v1380, %v1379
    %v1390 = vsel %vm94, %v1354, 0
    %v1393 = vsel %vm94, %v1355, 0
    %v1396 = vsel %vm94, %v1356, 0
    %1398 = vmatpush.bf16.msra.mxu0 0
    %1399 = vmatpush.bf16.msra.mxu0 0
    %1400 = vmatpush.bf16.msra.mxu0 0
    %1401 = vmatpush.bf16.msra.mxu0 0
    %1402 = vmatpush.bf16.msra.mxu0 %v1384
    %1403 = vmatpush.bf16.msra.mxu0 %v1383
    %1404 = vmatpush.bf16.msra.mxu0 %v1382
    %1405 = vmatpush.bf16.msra.mxu0 %v1381
    %1406 = vmatmul.bf16.gmra.mxu0 %v1390
    %v1407 = vpop.f32.mrf.mxu0
    %v1408 = vadd.f32 0.0, %v1407
    %v1409 = vpop.f32.mrf.mxu0
    %v1410 = vadd.f32 0.0, %v1409
    %1411 = vmatmul.bf16.gmra.mxu0 %v1393
    %v1412 = vpop.f32.mrf.mxu0
    %v1413 = vadd.f32 0.0, %v1412
    %v1414 = vpop.f32.mrf.mxu0
    %v1415 = vadd.f32 0.0, %v1414
    %1416 = vmatmul.bf16.gmra.mxu0 %v1396
    %v1417 = vpop.f32.mrf.mxu0
    %v1418 = vadd.f32 0.0, %v1417
    %v1419 = vpop.f32.mrf.mxu0
    %1420 = vdwg.mxu0
    %v1421 = vadd.f32 %v1054, %v1408
    %v1422 = vadd.f32 %v1055, %v1410
    %v1423 = vadd.f32 %v1056, %v1413
    %v1424 = vadd.f32 %v1057, %v1415
    %v1425 = vadd.f32 %v1058, %v1418
    %v1426 = vperm.slane %v131, 3
    %v1427 = vadd.f32 %v1421, %v1426
    %v1428 = vadd.f32 %v1422, %v1426
    %v1429 = vadd.f32 %v1423, %v1426
    %v1430 = vadd.f32 %v1424, %v1426
    %v1431 = vadd.f32 %v1425, %v1426
    %s1432 = scalar_lea.vmem %s4, 32
    %v1433 = vld [vmem:[%s1432] sm:$0xff]
    %v1434 = vld [vmem:[%s1432 + $0x8] sm:$0xff]
    %v1435 = vld [vmem:[%s1432 + $0x10] sm:$0xff]
    %v1436 = vld [vmem:[%s1432 + $0x18] sm:$0xff]
    %s1437 = scalar_lea.vmem %s6, 4
    %v1438 = vld [vmem:[%s1437] sm:$0xf]
    %v1439 = vsel %vm132, %v1427, 0.0
    %1440 = vadd.xlane.f32.xlu0 %v1439
    %v1441 = vpop.xlane.xlu0 %1440
    %v1442 = vsel %vm132, %v1428, 0.0
    %1443 = vadd.xlane.f32.xlu0 %v1442
    %v1444 = vpop.xlane.xlu0 %1443
    %v1445 = vsel %vm132, %v1429, 0.0
    %1446 = vadd.xlane.f32.xlu0 %v1445
    %v1447 = vpop.xlane.xlu0 %1446
    %v1448 = vsel %vm132, %v1430, 0.0
    %1449 = vadd.xlane.f32.xlu0 %v1448
    %v1450 = vpop.xlane.xlu0 %1449
    %v1451 = vsel %vm132, %v1431, 0.0
    %1452 = vadd.xlane.f32.xlu0 %v1451
    %v1453 = vpop.xlane.xlu0 %1452
    %v1454 = vmul.f32 %v1441, %v154
    %v1455 = vmul.f32 %v1444, %v154
    %v1456 = vmul.f32 %v1447, %v154
    %v1457 = vmul.f32 %v1450, %v154
    %v1458 = vmul.f32 %v1453, %v154
    %v1459 = vsub.f32 %v1427, %v1454
    %v1460 = vsub.f32 %v1428, %v1455
    %v1461 = vsub.f32 %v1429, %v1456
    %v1462 = vsub.f32 %v1430, %v1457
    %v1463 = vsub.f32 %v1431, %v1458
    %v1464 = vmul.f32 %v1459, %v1459
    %v1465 = vmul.f32 %v1460, %v1460
    %v1466 = vmul.f32 %v1461, %v1461
    %v1467 = vmul.f32 %v1462, %v1462
    %v1468 = vmul.f32 %v1463, %v1463
    %v1469 = vsel %vm132, %v1464, 0.0
    %1470 = vadd.xlane.f32.xlu0 %v1469
    %v1471 = vpop.xlane.xlu0 %1470
    %v1472 = vsel %vm132, %v1465, 0.0
    %1473 = vadd.xlane.f32.xlu0 %v1472
    %v1474 = vpop.xlane.xlu0 %1473
    %v1475 = vsel %vm132, %v1466, 0.0
    %1476 = vadd.xlane.f32.xlu0 %v1475
    %v1477 = vpop.xlane.xlu0 %1476
    %v1478 = vsel %vm132, %v1467, 0.0
    %1479 = vadd.xlane.f32.xlu0 %v1478
    %v1480 = vpop.xlane.xlu0 %1479
    %v1481 = vsel %vm132, %v1468, 0.0
    %1482 = vadd.xlane.f32.xlu0 %v1481
    %v1483 = vpop.xlane.xlu0 %1482
    %v1484 = vmul.f32 %v1471, %v154
    %v1485 = vmul.f32 %v1474, %v154
    %v1486 = vmul.f32 %v1477, %v154
    %v1487 = vmul.f32 %v1480, %v154
    %v1488 = vmul.f32 %v1483, %v154
    %v1489 = vadd.f32 %v1484, 1e-05
    %v1490 = vadd.f32 %v1485, 1e-05
    %v1491 = vadd.f32 %v1486, 1e-05
    %v1492 = vadd.f32 %v1487, 1e-05
    %v1493 = vadd.f32 %v1488, 1e-05
    %v1494 = vrsqrt.pop %v1489
    %v1495 = vmul.f32 %v1494, %v1489
    %v1496 = vmul.f32 %v1495, %v1494
    %v1497 = vmul.f32 0.5, %v1496
    %v1498 = vsub.f32 1.5, %v1497
    %v1499 = vmul.f32 %v1494, %v1498
    %vm1500 = vweird.f32 %v1489
    %vm1501 = vweird.f32 %v1494
    %vm1502 = vmor %vm1500, %vm1501
    %v1503 = vsel %vm1502, %v1494, %v1499
    %v1504 = vrsqrt.pop %v1490
    %v1505 = vmul.f32 %v1504, %v1490
    %v1506 = vmul.f32 %v1505, %v1504
    %v1507 = vmul.f32 0.5, %v1506
    %v1508 = vsub.f32 1.5, %v1507
    %v1509 = vmul.f32 %v1504, %v1508
    %vm1510 = vweird.f32 %v1490
    %vm1511 = vweird.f32 %v1504
    %vm1512 = vmor %vm1510, %vm1511
    %v1513 = vsel %vm1512, %v1504, %v1509
    %v1514 = vrsqrt.pop %v1491
    %v1515 = vmul.f32 %v1514, %v1491
    %v1516 = vmul.f32 %v1515, %v1514
    %v1517 = vmul.f32 0.5, %v1516
    %v1518 = vsub.f32 1.5, %v1517
    %v1519 = vmul.f32 %v1514, %v1518
    %vm1520 = vweird.f32 %v1491
    %vm1521 = vweird.f32 %v1514
    %vm1522 = vmor %vm1520, %vm1521
    %v1523 = vsel %vm1522, %v1514, %v1519
    %v1524 = vrsqrt.pop %v1492
    %v1525 = vmul.f32 %v1524, %v1492
    %v1526 = vmul.f32 %v1525, %v1524
    %v1527 = vmul.f32 0.5, %v1526
    %v1528 = vsub.f32 1.5, %v1527
    %v1529 = vmul.f32 %v1524, %v1528
    %vm1530 = vweird.f32 %v1492
    %vm1531 = vweird.f32 %v1524
    %vm1532 = vmor %vm1530, %vm1531
    %v1533 = vsel %vm1532, %v1524, %v1529
    %v1534 = vrsqrt.pop %v1493
    %v1535 = vmul.f32 %v1534, %v1493
    %v1536 = vmul.f32 %v1535, %v1534
    %v1537 = vmul.f32 0.5, %v1536
    %v1538 = vsub.f32 1.5, %v1537
    %v1539 = vmul.f32 %v1534, %v1538
    %vm1540 = vweird.f32 %v1493
    %vm1541 = vweird.f32 %v1534
    %vm1542 = vmor %vm1540, %vm1541
    %v1543 = vsel %vm1542, %v1534, %v1539
    %v1544 = vmul.f32 %v1459, %v1503
    %v1545 = vmul.f32 %v1460, %v1513
    %v1546 = vmul.f32 %v1461, %v1523
    %v1547 = vmul.f32 %v1462, %v1533
    %v1548 = vmul.f32 %v1463, %v1543
    %v1549 = vperm.slane %v1438, 0
    %v1550 = vmul.f32 %v1544, %v1549
    %v1551 = vmul.f32 %v1545, %v1549
    %v1552 = vmul.f32 %v1546, %v1549
    %v1553 = vmul.f32 %v1547, %v1549
    %v1554 = vmul.f32 %v1548, %v1549
    %1556 = vrot.lane.b32.xlu0 %v1549, 96
    %v1557 = vpop.permute.xlu0 %1556
    %v1559 = vadd.f32 %v1550, %v1557
    %v1560 = vadd.f32 %v1551, %v1557
    %v1561 = vadd.f32 %v1552, %v1557
    %v1562 = vadd.f32 %v1553, %v1557
    %v1563 = vadd.f32 %v1554, %v1557
    %v1564 = vpack.c.bf16 %v1560, %v1559
    %v1565 = vpack.c.bf16 %v1562, %v1561
    %v1566 = vpack.c.bf16 %v1563, %v1563
    %v1567 = vperm.slane %v1438, 1
    %v1572 = vunpack.c.l.b16 %v1433
    %v1573 = vunpack.c.l.b16 %v1434
    %v1574 = vunpack.c.l.b16 %v1435
    %v1575 = vunpack.c.l.b16 %v1436
    %v1576 = vpack.c.b16 %v1573, %v1572
    %v1577 = vpack.c.b16 %v1575, %v1574
    %v1581 = vsel %vm132, %v1564, 0
    %v1584 = vsel %vm132, %v1565, 0
    %v1587 = vsel %vm132, %v1566, 0
    %1589 = vmatpush.bf16.msra.mxu0 0
    %1590 = vmatpush.bf16.msra.mxu0 0
    %1591 = vmatpush.bf16.msra.mxu0 0
    %1592 = vmatpush.bf16.msra.mxu0 0
    %1593 = vmatpush.bf16.msra.mxu0 0
    %1594 = vmatpush.bf16.msra.mxu0 0
    %1595 = vmatpush.bf16.msra.mxu0 %v1577
    %1596 = vmatpush.bf16.msra.mxu0 %v1576
    %1597 = vmatmul.bf16.gmra.mxu0 %v1581
    %v1598 = vpop.f32.mrf.mxu0
    %v1599 = vadd.f32 %v1567, %v1598
    %v1600 = vpop.f32.mrf.mxu0
    %v1601 = vadd.f32 %v1567, %v1600
    %1602 = vmatmul.bf16.gmra.mxu0 %v1584
    %v1603 = vpop.f32.mrf.mxu0
    %v1604 = vadd.f32 %v1567, %v1603
    %v1605 = vpop.f32.mrf.mxu0
    %v1606 = vadd.f32 %v1567, %v1605
    %1607 = vmatmul.bf16.gmra.mxu0 %v1587
    %v1608 = vpop.f32.mrf.mxu0
    %v1609 = vadd.f32 %v1567, %v1608
    %v1610 = vpop.f32.mrf.mxu0
    %1611 = vdwg.mxu0
    %v1612 = vpack.c.bf16 %v1601, %v1599
    %v1613 = vpack.c.bf16 %v1606, %v1604
    %v1614 = vpack.c.bf16 %v1609, %v1609
    %1618 = vrot.lane.b32.xlu0 %v1612, 96
    %v1619 = vpop.permute.xlu0 %1618
    %1620 = vrot.lane.b32.xlu0 %v1613, 96
    %v1621 = vpop.permute.xlu0 %1620
    %1622 = vrot.lane.b32.xlu0 %v1614, 96
    %v1623 = vpop.permute.xlu0 %1622
    %v1625 = vsel %vm325, %v1612, 0
    %v1628 = vsel %vm325, %v1613, 0
    %v1631 = vsel %vm325, %v1614, 0
    %v1634 = vsel %vm325, %v1619, 0
    %v1637 = vsel %vm325, %v1621, 0
    %v1640 = vsel %vm325, %v1623, 0
    %1642 = vmatpush.bf16.xpose.msra.mxu0 0
    %1643 = vmatpush.bf16.xpose.msra.mxu0 0
    %1644 = vmatpush.bf16.xpose.msra.mxu0 0
    %1645 = vmatpush.bf16.xpose.msra.mxu0 0
    %1646 = vmatpush.bf16.xpose.msra.mxu0 0
    %1647 = vmatpush.bf16.xpose.msra.mxu0 %v1640
    %1648 = vmatpush.bf16.xpose.msra.mxu0 %v1637
    %1649 = vmatpush.bf16.xpose.msra.mxu0 %v1634
    %1650 = vmatmul.bf16.gmra.mxu0 %v1625
    %v1651 = vpop.f32.mrf.mxu0
    %v1652 = vadd.f32 %v34, %v1651
    %v1653 = vpop.f32.mrf.mxu0
    %v1654 = vadd.f32 %v35, %v1653
    %1655 = vmatmul.bf16.gmra.mxu0 %v1628
    %v1656 = vpop.f32.mrf.mxu0
    %v1657 = vadd.f32 %v36, %v1656
    %v1658 = vpop.f32.mrf.mxu0
    %v1659 = vadd.f32 %v37, %v1658
    %1660 = vmatmul.bf16.gmra.mxu0 %v1631
    %v1661 = vpop.f32.mrf.mxu0
    %v1662 = vadd.f32 %v38, %v1661
    %v1663 = vpop.f32.mrf.mxu0
    %1664 = vdwg.mxu0
    %v1665 = vsel %vm367, %v1652, -inf
    %1666 = vmax.xlane.f32.xlu0 %v1665
    %v1667 = vpop.xlane.xlu0 %1666
    %v1668 = vsel %vm367, %v1654, -inf
    %1669 = vmax.xlane.f32.xlu0 %v1668
    %v1670 = vpop.xlane.xlu0 %1669
    %v1671 = vsel %vm367, %v1657, -inf
    %1672 = vmax.xlane.f32.xlu0 %v1671
    %v1673 = vpop.xlane.xlu0 %1672
    %v1674 = vsel %vm367, %v1659, -inf
    %1675 = vmax.xlane.f32.xlu0 %v1674
    %v1676 = vpop.xlane.xlu0 %1675
    %v1677 = vsel %vm367, %v1662, -inf
    %1678 = vmax.xlane.f32.xlu0 %v1677
    %v1679 = vpop.xlane.xlu0 %1678
    %v1680 = vsub.f32 %v1652, %v1667
    %v1681 = vsub.f32 %v1654, %v1670
    %v1682 = vsub.f32 %v1657, %v1673
    %v1683 = vsub.f32 %v1659, %v1676
    %v1684 = vsub.f32 %v1662, %v1679
    %v1685 = vmul.f32 %v1680, 1.442695
    %v1686 = vpow.pop %v1685
    %v1687 = vmul.f32 %v1681, 1.442695
    %v1688 = vpow.pop %v1687
    %v1689 = vmul.f32 %v1682, 1.442695
    %v1690 = vpow.pop %v1689
    %v1691 = vmul.f32 %v1683, 1.442695
    %v1692 = vpow.pop %v1691
    %v1693 = vmul.f32 %v1684, 1.442695
    %v1694 = vpow.pop %v1693
    %v1695 = vsel %vm367, %v1686, 0.0
    %1696 = vadd.xlane.f32.xlu0 %v1695
    %v1697 = vpop.xlane.xlu0 %1696
    %v1698 = vsel %vm367, %v1688, 0.0
    %1699 = vadd.xlane.f32.xlu0 %v1698
    %v1700 = vpop.xlane.xlu0 %1699
    %v1701 = vsel %vm367, %v1690, 0.0
    %1702 = vadd.xlane.f32.xlu0 %v1701
    %v1703 = vpop.xlane.xlu0 %1702
    %v1704 = vsel %vm367, %v1692, 0.0
    %1705 = vadd.xlane.f32.xlu0 %v1704
    %v1706 = vpop.xlane.xlu0 %1705
    %v1707 = vsel %vm367, %v1694, 0.0
    %1708 = vadd.xlane.f32.xlu0 %v1707
    %v1709 = vpop.xlane.xlu0 %1708
    %v1710 = vrcp.pop %v1697
    %v1711 = vrcp.pop %v1700
    %v1712 = vrcp.pop %v1703
    %v1713 = vrcp.pop %v1706
    %v1714 = vrcp.pop %v1709
    %v1715 = vmul.f32 %v1686, %v1710
    %v1716 = vmul.f32 %v1688, %v1711
    %v1717 = vmul.f32 %v1690, %v1712
    %v1718 = vmul.f32 %v1692, %v1713
    %v1719 = vmul.f32 %v1694, %v1714
    %v1720 = vpack.c.bf16 %v1716, %v1715
    %v1721 = vpack.c.bf16 %v1718, %v1717
    %v1722 = vpack.c.bf16 %v1719, %v1719
    %1723 = vrot.lane.b32.xlu0 %v1612, 64
    %v1724 = vpop.permute.xlu0 %1723
    %1725 = vrot.lane.b32.xlu0 %v1613, 64
    %v1726 = vpop.permute.xlu0 %1725
    %1727 = vrot.lane.b32.xlu0 %v1614, 64
    %v1728 = vpop.permute.xlu0 %1727
    %v1732 = vsel %vm367, %v1720, 0
    %v1735 = vsel %vm367, %v1721, 0
    %v1738 = vsel %vm367, %v1722, 0
    %v1741 = vsel %vm443, %v1728, 0
    %1743 = vmatpush.bf16.msra.mxu0 0
    %1744 = vmatpush.bf16.msra.mxu0 0
    %1745 = vmatpush.bf16.msra.mxu0 0
    %1746 = vmatpush.bf16.msra.mxu0 0
    %1747 = vmatpush.bf16.msra.mxu0 0
    %1748 = vmatpush.bf16.msra.mxu0 %v1741
    %1749 = vmatpush.bf16.msra.mxu0 %v1726
    %1750 = vmatpush.bf16.msra.mxu0 %v1724
    %1751 = vmatmul.bf16.gmra.mxu0 %v1732
    %v1752 = vpop.f32.mrf.mxu0
    %v1753 = vadd.f32 0.0, %v1752
    %v1754 = vpop.f32.mrf.mxu0
    %v1755 = vadd.f32 0.0, %v1754
    %1756 = vmatmul.bf16.gmra.mxu0 %v1735
    %v1757 = vpop.f32.mrf.mxu0
    %v1758 = vadd.f32 0.0, %v1757
    %v1759 = vpop.f32.mrf.mxu0
    %v1760 = vadd.f32 0.0, %v1759
    %1761 = vmatmul.bf16.gmra.mxu0 %v1738
    %v1762 = vpop.f32.mrf.mxu0
    %v1763 = vadd.f32 0.0, %v1762
    %v1764 = vpop.f32.mrf.mxu0
    %1765 = vdwg.mxu0
    %1766 = vrot.lane.b32.xlu0 %v1612, 120
    %v1767 = vpop.permute.xlu0 %1766
    %1768 = vrot.lane.b32.xlu0 %v1613, 120
    %v1769 = vpop.permute.xlu0 %1768
    %1770 = vrot.lane.b32.xlu0 %v1614, 120
    %v1771 = vpop.permute.xlu0 %1770
    %1772 = vrot.lane.b32.xlu0 %v1612, 88
    %v1773 = vpop.permute.xlu0 %1772
    %1774 = vrot.lane.b32.xlu0 %v1613, 88
    %v1775 = vpop.permute.xlu0 %1774
    %1776 = vrot.lane.b32.xlu0 %v1614, 88
    %v1777 = vpop.permute.xlu0 %1776
    %v1779 = vsel %vm325, %v1767, 0
    %v1782 = vsel %vm325, %v1769, 0
    %v1785 = vsel %vm325, %v1771, 0
    %v1788 = vsel %vm325, %v1773, 0
    %v1791 = vsel %vm325, %v1775, 0
    %v1794 = vsel %vm325, %v1777, 0
    %1796 = vmatpush.bf16.xpose.msra.mxu0 0
    %1797 = vmatpush.bf16.xpose.msra.mxu0 0
    %1798 = vmatpush.bf16.xpose.msra.mxu0 0
    %1799 = vmatpush.bf16.xpose.msra.mxu0 0
    %1800 = vmatpush.bf16.xpose.msra.mxu0 0
    %1801 = vmatpush.bf16.xpose.msra.mxu0 %v1794
    %1802 = vmatpush.bf16.xpose.msra.mxu0 %v1791
    %1803 = vmatpush.bf16.xpose.msra.mxu0 %v1788
    %1804 = vmatmul.bf16.gmra.mxu0 %v1779
    %v1805 = vpop.f32.mrf.mxu0
    %v1806 = vadd.f32 %v34, %v1805
    %v1807 = vpop.f32.mrf.mxu0
    %v1808 = vadd.f32 %v35, %v1807
    %1809 = vmatmul.bf16.gmra.mxu0 %v1782
    %v1810 = vpop.f32.mrf.mxu0
    %v1811 = vadd.f32 %v36, %v1810
    %v1812 = vpop.f32.mrf.mxu0
    %v1813 = vadd.f32 %v37, %v1812
    %1814 = vmatmul.bf16.gmra.mxu0 %v1785
    %v1815 = vpop.f32.mrf.mxu0
    %v1816 = vadd.f32 %v38, %v1815
    %v1817 = vpop.f32.mrf.mxu0
    %1818 = vdwg.mxu0
    %v1819 = vsel %vm367, %v1806, -inf
    %1820 = vmax.xlane.f32.xlu0 %v1819
    %v1821 = vpop.xlane.xlu0 %1820
    %v1822 = vsel %vm367, %v1808, -inf
    %1823 = vmax.xlane.f32.xlu0 %v1822
    %v1824 = vpop.xlane.xlu0 %1823
    %v1825 = vsel %vm367, %v1811, -inf
    %1826 = vmax.xlane.f32.xlu0 %v1825
    %v1827 = vpop.xlane.xlu0 %1826
    %v1828 = vsel %vm367, %v1813, -inf
    %1829 = vmax.xlane.f32.xlu0 %v1828
    %v1830 = vpop.xlane.xlu0 %1829
    %v1831 = vsel %vm367, %v1816, -inf
    %1832 = vmax.xlane.f32.xlu0 %v1831
    %v1833 = vpop.xlane.xlu0 %1832
    %v1834 = vsub.f32 %v1806, %v1821
    %v1835 = vsub.f32 %v1808, %v1824
    %v1836 = vsub.f32 %v1811, %v1827
    %v1837 = vsub.f32 %v1813, %v1830
    %v1838 = vsub.f32 %v1816, %v1833
    %v1839 = vmul.f32 %v1834, 1.442695
    %v1840 = vpow.pop %v1839
    %v1841 = vmul.f32 %v1835, 1.442695
    %v1842 = vpow.pop %v1841
    %v1843 = vmul.f32 %v1836, 1.442695
    %v1844 = vpow.pop %v1843
    %v1845 = vmul.f32 %v1837, 1.442695
    %v1846 = vpow.pop %v1845
    %v1847 = vmul.f32 %v1838, 1.442695
    %v1848 = vpow.pop %v1847
    %v1849 = vsel %vm367, %v1840, 0.0
    %1850 = vadd.xlane.f32.xlu0 %v1849
    %v1851 = vpop.xlane.xlu0 %1850
    %v1852 = vsel %vm367, %v1842, 0.0
    %1853 = vadd.xlane.f32.xlu0 %v1852
    %v1854 = vpop.xlane.xlu0 %1853
    %v1855 = vsel %vm367, %v1844, 0.0
    %1856 = vadd.xlane.f32.xlu0 %v1855
    %v1857 = vpop.xlane.xlu0 %1856
    %v1858 = vsel %vm367, %v1846, 0.0
    %1859 = vadd.xlane.f32.xlu0 %v1858
    %v1860 = vpop.xlane.xlu0 %1859
    %v1861 = vsel %vm367, %v1848, 0.0
    %1862 = vadd.xlane.f32.xlu0 %v1861
    %v1863 = vpop.xlane.xlu0 %1862
    %v1864 = vrcp.pop %v1851
    %v1865 = vrcp.pop %v1854
    %v1866 = vrcp.pop %v1857
    %v1867 = vrcp.pop %v1860
    %v1868 = vrcp.pop %v1863
    %v1869 = vmul.f32 %v1840, %v1864
    %v1870 = vmul.f32 %v1842, %v1865
    %v1871 = vmul.f32 %v1844, %v1866
    %v1872 = vmul.f32 %v1846, %v1867
    %v1873 = vmul.f32 %v1848, %v1868
    %v1874 = vpack.c.bf16 %v1870, %v1869
    %v1875 = vpack.c.bf16 %v1872, %v1871
    %v1876 = vpack.c.bf16 %v1873, %v1873
    %1877 = vrot.lane.b32.xlu0 %v1612, 56
    %v1878 = vpop.permute.xlu0 %1877
    %1879 = vrot.lane.b32.xlu0 %v1613, 56
    %v1880 = vpop.permute.xlu0 %1879
    %1881 = vrot.lane.b32.xlu0 %v1614, 56
    %v1882 = vpop.permute.xlu0 %1881
    %v1886 = vsel %vm367, %v1874, 0
    %v1889 = vsel %vm367, %v1875, 0
    %v1892 = vsel %vm367, %v1876, 0
    %v1895 = vsel %vm443, %v1882, 0
    %1897 = vmatpush.bf16.msra.mxu0 0
    %1898 = vmatpush.bf16.msra.mxu0 0
    %1899 = vmatpush.bf16.msra.mxu0 0
    %1900 = vmatpush.bf16.msra.mxu0 0
    %1901 = vmatpush.bf16.msra.mxu0 0
    %1902 = vmatpush.bf16.msra.mxu0 %v1895
    %1903 = vmatpush.bf16.msra.mxu0 %v1880
    %1904 = vmatpush.bf16.msra.mxu0 %v1878
    %1905 = vmatmul.bf16.gmra.mxu0 %v1886
    %v1906 = vpop.f32.mrf.mxu0
    %v1907 = vadd.f32 0.0, %v1906
    %v1908 = vpop.f32.mrf.mxu0
    %v1909 = vadd.f32 0.0, %v1908
    %1910 = vmatmul.bf16.gmra.mxu0 %v1889
    %v1911 = vpop.f32.mrf.mxu0
    %v1912 = vadd.f32 0.0, %v1911
    %v1913 = vpop.f32.mrf.mxu0
    %v1914 = vadd.f32 0.0, %v1913
    %1915 = vmatmul.bf16.gmra.mxu0 %v1892
    %v1916 = vpop.f32.mrf.mxu0
    %v1917 = vadd.f32 0.0, %v1916
    %v1918 = vpop.f32.mrf.mxu0
    %1919 = vdwg.mxu0
    %1920 = vrot.lane.b32.xlu0 %v1612, 112
    %v1921 = vpop.permute.xlu0 %1920
    %1922 = vrot.lane.b32.xlu0 %v1613, 112
    %v1923 = vpop.permute.xlu0 %1922
    %1924 = vrot.lane.b32.xlu0 %v1614, 112
    %v1925 = vpop.permute.xlu0 %1924
    %1926 = vrot.lane.b32.xlu0 %v1612, 80
    %v1927 = vpop.permute.xlu0 %1926
    %1928 = vrot.lane.b32.xlu0 %v1613, 80
    %v1929 = vpop.permute.xlu0 %1928
    %1930 = vrot.lane.b32.xlu0 %v1614, 80
    %v1931 = vpop.permute.xlu0 %1930
    %v1933 = vsel %vm325, %v1921, 0
    %v1936 = vsel %vm325, %v1923, 0
    %v1939 = vsel %vm325, %v1925, 0
    %v1942 = vsel %vm325, %v1927, 0
    %v1945 = vsel %vm325, %v1929, 0
    %v1948 = vsel %vm325, %v1931, 0
    %1950 = vmatpush.bf16.xpose.msra.mxu0 0
    %1951 = vmatpush.bf16.xpose.msra.mxu0 0
    %1952 = vmatpush.bf16.xpose.msra.mxu0 0
    %1953 = vmatpush.bf16.xpose.msra.mxu0 0
    %1954 = vmatpush.bf16.xpose.msra.mxu0 0
    %1955 = vmatpush.bf16.xpose.msra.mxu0 %v1948
    %1956 = vmatpush.bf16.xpose.msra.mxu0 %v1945
    %1957 = vmatpush.bf16.xpose.msra.mxu0 %v1942
    %1958 = vmatmul.bf16.gmra.mxu0 %v1933
    %v1959 = vpop.f32.mrf.mxu0
    %v1960 = vadd.f32 %v34, %v1959
    %v1961 = vpop.f32.mrf.mxu0
    %v1962 = vadd.f32 %v35, %v1961
    %1963 = vmatmul.bf16.gmra.mxu0 %v1936
    %v1964 = vpop.f32.mrf.mxu0
    %v1965 = vadd.f32 %v36, %v1964
    %v1966 = vpop.f32.mrf.mxu0
    %v1967 = vadd.f32 %v37, %v1966
    %1968 = vmatmul.bf16.gmra.mxu0 %v1939
    %v1969 = vpop.f32.mrf.mxu0
    %v1970 = vadd.f32 %v38, %v1969
    %v1971 = vpop.f32.mrf.mxu0
    %1972 = vdwg.mxu0
    %v1973 = vsel %vm367, %v1960, -inf
    %1974 = vmax.xlane.f32.xlu0 %v1973
    %v1975 = vpop.xlane.xlu0 %1974
    %v1976 = vsel %vm367, %v1962, -inf
    %1977 = vmax.xlane.f32.xlu0 %v1976
    %v1978 = vpop.xlane.xlu0 %1977
    %v1979 = vsel %vm367, %v1965, -inf
    %1980 = vmax.xlane.f32.xlu0 %v1979
    %v1981 = vpop.xlane.xlu0 %1980
    %v1982 = vsel %vm367, %v1967, -inf
    %1983 = vmax.xlane.f32.xlu0 %v1982
    %v1984 = vpop.xlane.xlu0 %1983
    %v1985 = vsel %vm367, %v1970, -inf
    %1986 = vmax.xlane.f32.xlu0 %v1985
    %v1987 = vpop.xlane.xlu0 %1986
    %v1988 = vsub.f32 %v1960, %v1975
    %v1989 = vsub.f32 %v1962, %v1978
    %v1990 = vsub.f32 %v1965, %v1981
    %v1991 = vsub.f32 %v1967, %v1984
    %v1992 = vsub.f32 %v1970, %v1987
    %v1993 = vmul.f32 %v1988, 1.442695
    %v1994 = vpow.pop %v1993
    %v1995 = vmul.f32 %v1989, 1.442695
    %v1996 = vpow.pop %v1995
    %v1997 = vmul.f32 %v1990, 1.442695
    %v1998 = vpow.pop %v1997
    %v1999 = vmul.f32 %v1991, 1.442695
    %v2000 = vpow.pop %v1999
    %v2001 = vmul.f32 %v1992, 1.442695
    %v2002 = vpow.pop %v2001
    %v2003 = vsel %vm367, %v1994, 0.0
    %2004 = vadd.xlane.f32.xlu0 %v2003
    %v2005 = vpop.xlane.xlu0 %2004
    %v2006 = vsel %vm367, %v1996, 0.0
    %2007 = vadd.xlane.f32.xlu0 %v2006
    %v2008 = vpop.xlane.xlu0 %2007
    %v2009 = vsel %vm367, %v1998, 0.0
    %2010 = vadd.xlane.f32.xlu0 %v2009
    %v2011 = vpop.xlane.xlu0 %2010
    %v2012 = vsel %vm367, %v2000, 0.0
    %2013 = vadd.xlane.f32.xlu0 %v2012
    %v2014 = vpop.xlane.xlu0 %2013
    %v2015 = vsel %vm367, %v2002, 0.0
    %2016 = vadd.xlane.f32.xlu0 %v2015
    %v2017 = vpop.xlane.xlu0 %2016
    %v2018 = vrcp.pop %v2005
    %v2019 = vrcp.pop %v2008
    %v2020 = vrcp.pop %v2011
    %v2021 = vrcp.pop %v2014
    %v2022 = vrcp.pop %v2017
    %v2023 = vmul.f32 %v1994, %v2018
    %v2024 = vmul.f32 %v1996, %v2019
    %v2025 = vmul.f32 %v1998, %v2020
    %v2026 = vmul.f32 %v2000, %v2021
    %v2027 = vmul.f32 %v2002, %v2022
    %v2028 = vpack.c.bf16 %v2024, %v2023
    %v2029 = vpack.c.bf16 %v2026, %v2025
    %v2030 = vpack.c.bf16 %v2027, %v2027
    %2031 = vrot.lane.b32.xlu0 %v1612, 48
    %v2032 = vpop.permute.xlu0 %2031
    %2033 = vrot.lane.b32.xlu0 %v1613, 48
    %v2034 = vpop.permute.xlu0 %2033
    %2035 = vrot.lane.b32.xlu0 %v1614, 48
    %v2036 = vpop.permute.xlu0 %2035
    %v2040 = vsel %vm367, %v2028, 0
    %v2043 = vsel %vm367, %v2029, 0
    %v2046 = vsel %vm367, %v2030, 0
    %v2049 = vsel %vm443, %v2036, 0
    %2051 = vmatpush.bf16.msra.mxu0 0
    %2052 = vmatpush.bf16.msra.mxu0 0
    %2053 = vmatpush.bf16.msra.mxu0 0
    %2054 = vmatpush.bf16.msra.mxu0 0
    %2055 = vmatpush.bf16.msra.mxu0 0
    %2056 = vmatpush.bf16.msra.mxu0 %v2049
    %2057 = vmatpush.bf16.msra.mxu0 %v2034
    %2058 = vmatpush.bf16.msra.mxu0 %v2032
    %2059 = vmatmul.bf16.gmra.mxu0 %v2040
    %v2060 = vpop.f32.mrf.mxu0
    %v2061 = vadd.f32 0.0, %v2060
    %v2062 = vpop.f32.mrf.mxu0
    %v2063 = vadd.f32 0.0, %v2062
    %2064 = vmatmul.bf16.gmra.mxu0 %v2043
    %v2065 = vpop.f32.mrf.mxu0
    %v2066 = vadd.f32 0.0, %v2065
    %v2067 = vpop.f32.mrf.mxu0
    %v2068 = vadd.f32 0.0, %v2067
    %2069 = vmatmul.bf16.gmra.mxu0 %v2046
    %v2070 = vpop.f32.mrf.mxu0
    %v2071 = vadd.f32 0.0, %v2070
    %v2072 = vpop.f32.mrf.mxu0
    %2073 = vdwg.mxu0
    %2074 = vrot.lane.b32.xlu0 %v1612, 104
    %v2075 = vpop.permute.xlu0 %2074
    %2076 = vrot.lane.b32.xlu0 %v1613, 104
    %v2077 = vpop.permute.xlu0 %2076
    %2078 = vrot.lane.b32.xlu0 %v1614, 104
    %v2079 = vpop.permute.xlu0 %2078
    %2080 = vrot.lane.b32.xlu0 %v1612, 72
    %v2081 = vpop.permute.xlu0 %2080
    %2082 = vrot.lane.b32.xlu0 %v1613, 72
    %v2083 = vpop.permute.xlu0 %2082
    %2084 = vrot.lane.b32.xlu0 %v1614, 72
    %v2085 = vpop.permute.xlu0 %2084
    %v2087 = vsel %vm325, %v2075, 0
    %v2090 = vsel %vm325, %v2077, 0
    %v2093 = vsel %vm325, %v2079, 0
    %v2096 = vsel %vm325, %v2081, 0
    %v2099 = vsel %vm325, %v2083, 0
    %v2102 = vsel %vm325, %v2085, 0
    %2104 = vmatpush.bf16.xpose.msra.mxu0 0
    %2105 = vmatpush.bf16.xpose.msra.mxu0 0
    %2106 = vmatpush.bf16.xpose.msra.mxu0 0
    %2107 = vmatpush.bf16.xpose.msra.mxu0 0
    %2108 = vmatpush.bf16.xpose.msra.mxu0 0
    %2109 = vmatpush.bf16.xpose.msra.mxu0 %v2102
    %2110 = vmatpush.bf16.xpose.msra.mxu0 %v2099
    %2111 = vmatpush.bf16.xpose.msra.mxu0 %v2096
    %2112 = vmatmul.bf16.gmra.mxu0 %v2087
    %v2113 = vpop.f32.mrf.mxu0
    %v2114 = vadd.f32 %v34, %v2113
    %v2115 = vpop.f32.mrf.mxu0
    %v2116 = vadd.f32 %v35, %v2115
    %2117 = vmatmul.bf16.gmra.mxu0 %v2090
    %v2118 = vpop.f32.mrf.mxu0
    %v2119 = vadd.f32 %v36, %v2118
    %v2120 = vpop.f32.mrf.mxu0
    %v2121 = vadd.f32 %v37, %v2120
    %2122 = vmatmul.bf16.gmra.mxu0 %v2093
    %v2123 = vpop.f32.mrf.mxu0
    %v2124 = vadd.f32 %v38, %v2123
    %v2125 = vpop.f32.mrf.mxu0
    %2126 = vdwg.mxu0
    %v2127 = vsel %vm367, %v2114, -inf
    %2128 = vmax.xlane.f32.xlu0 %v2127
    %v2129 = vpop.xlane.xlu0 %2128
    %v2130 = vsel %vm367, %v2116, -inf
    %2131 = vmax.xlane.f32.xlu0 %v2130
    %v2132 = vpop.xlane.xlu0 %2131
    %v2133 = vsel %vm367, %v2119, -inf
    %2134 = vmax.xlane.f32.xlu0 %v2133
    %v2135 = vpop.xlane.xlu0 %2134
    %v2136 = vsel %vm367, %v2121, -inf
    %2137 = vmax.xlane.f32.xlu0 %v2136
    %v2138 = vpop.xlane.xlu0 %2137
    %v2139 = vsel %vm367, %v2124, -inf
    %2140 = vmax.xlane.f32.xlu0 %v2139
    %v2141 = vpop.xlane.xlu0 %2140
    %v2142 = vsub.f32 %v2114, %v2129
    %v2143 = vsub.f32 %v2116, %v2132
    %v2144 = vsub.f32 %v2119, %v2135
    %v2145 = vsub.f32 %v2121, %v2138
    %v2146 = vsub.f32 %v2124, %v2141
    %v2147 = vmul.f32 %v2142, 1.442695
    %v2148 = vpow.pop %v2147
    %v2149 = vmul.f32 %v2143, 1.442695
    %v2150 = vpow.pop %v2149
    %v2151 = vmul.f32 %v2144, 1.442695
    %v2152 = vpow.pop %v2151
    %v2153 = vmul.f32 %v2145, 1.442695
    %v2154 = vpow.pop %v2153
    %v2155 = vmul.f32 %v2146, 1.442695
    %v2156 = vpow.pop %v2155
    %v2157 = vsel %vm367, %v2148, 0.0
    %2158 = vadd.xlane.f32.xlu0 %v2157
    %v2159 = vpop.xlane.xlu0 %2158
    %v2160 = vsel %vm367, %v2150, 0.0
    %2161 = vadd.xlane.f32.xlu0 %v2160
    %v2162 = vpop.xlane.xlu0 %2161
    %v2163 = vsel %vm367, %v2152, 0.0
    %2164 = vadd.xlane.f32.xlu0 %v2163
    %v2165 = vpop.xlane.xlu0 %2164
    %v2166 = vsel %vm367, %v2154, 0.0
    %2167 = vadd.xlane.f32.xlu0 %v2166
    %v2168 = vpop.xlane.xlu0 %2167
    %v2169 = vsel %vm367, %v2156, 0.0
    %2170 = vadd.xlane.f32.xlu0 %v2169
    %v2171 = vpop.xlane.xlu0 %2170
    %v2172 = vrcp.pop %v2159
    %v2173 = vrcp.pop %v2162
    %v2174 = vrcp.pop %v2165
    %v2175 = vrcp.pop %v2168
    %v2176 = vrcp.pop %v2171
    %v2177 = vmul.f32 %v2148, %v2172
    %v2178 = vmul.f32 %v2150, %v2173
    %v2179 = vmul.f32 %v2152, %v2174
    %v2180 = vmul.f32 %v2154, %v2175
    %v2181 = vmul.f32 %v2156, %v2176
    %v2182 = vpack.c.bf16 %v2178, %v2177
    %v2183 = vpack.c.bf16 %v2180, %v2179
    %v2184 = vpack.c.bf16 %v2181, %v2181
    %2185 = vrot.lane.b32.xlu0 %v1612, 40
    %v2186 = vpop.permute.xlu0 %2185
    %2187 = vrot.lane.b32.xlu0 %v1613, 40
    %v2188 = vpop.permute.xlu0 %2187
    %2189 = vrot.lane.b32.xlu0 %v1614, 40
    %v2190 = vpop.permute.xlu0 %2189
    %v2194 = vsel %vm367, %v2182, 0
    %v2197 = vsel %vm367, %v2183, 0
    %v2200 = vsel %vm367, %v2184, 0
    %v2203 = vsel %vm443, %v2190, 0
    %2205 = vmatpush.bf16.msra.mxu0 0
    %2206 = vmatpush.bf16.msra.mxu0 0
    %2207 = vmatpush.bf16.msra.mxu0 0
    %2208 = vmatpush.bf16.msra.mxu0 0
    %2209 = vmatpush.bf16.msra.mxu0 0
    %2210 = vmatpush.bf16.msra.mxu0 %v2203
    %2211 = vmatpush.bf16.msra.mxu0 %v2188
    %2212 = vmatpush.bf16.msra.mxu0 %v2186
    %2213 = vmatmul.bf16.gmra.mxu0 %v2194
    %v2214 = vpop.f32.mrf.mxu0
    %v2215 = vadd.f32 0.0, %v2214
    %v2216 = vpop.f32.mrf.mxu0
    %v2217 = vadd.f32 0.0, %v2216
    %2218 = vmatmul.bf16.gmra.mxu0 %v2197
    %v2219 = vpop.f32.mrf.mxu0
    %v2220 = vadd.f32 0.0, %v2219
    %v2221 = vpop.f32.mrf.mxu0
    %v2222 = vadd.f32 0.0, %v2221
    %2223 = vmatmul.bf16.gmra.mxu0 %v2200
    %v2224 = vpop.f32.mrf.mxu0
    %v2225 = vadd.f32 0.0, %v2224
    %v2226 = vpop.f32.mrf.mxu0
    %2227 = vdwg.mxu0
    %2233 = vrot.lane.b32.xlu0 %v1907, 8
    %v2234 = vpop.permute.xlu0 %2233
    %2235 = vrot.lane.b32.xlu0 %v1909, 8
    %v2236 = vpop.permute.xlu0 %2235
    %2237 = vrot.lane.b32.xlu0 %v1912, 8
    %v2238 = vpop.permute.xlu0 %2237
    %2239 = vrot.lane.b32.xlu0 %v1914, 8
    %v2240 = vpop.permute.xlu0 %2239
    %2241 = vrot.lane.b32.xlu0 %v1917, 8
    %v2242 = vpop.permute.xlu0 %2241
    %2253 = vrot.lane.b32.xlu0 %v2061, 16
    %v2254 = vpop.permute.xlu0 %2253
    %2255 = vrot.lane.b32.xlu0 %v2063, 16
    %v2256 = vpop.permute.xlu0 %2255
    %2257 = vrot.lane.b32.xlu0 %v2066, 16
    %v2258 = vpop.permute.xlu0 %2257
    %2259 = vrot.lane.b32.xlu0 %v2068, 16
    %v2260 = vpop.permute.xlu0 %2259
    %2261 = vrot.lane.b32.xlu0 %v2071, 16
    %v2262 = vpop.permute.xlu0 %2261
    %2273 = vrot.lane.b32.xlu0 %v2215, 24
    %v2274 = vpop.permute.xlu0 %2273
    %2275 = vrot.lane.b32.xlu0 %v2217, 24
    %v2276 = vpop.permute.xlu0 %2275
    %2277 = vrot.lane.b32.xlu0 %v2220, 24
    %v2278 = vpop.permute.xlu0 %2277
    %2279 = vrot.lane.b32.xlu0 %v2222, 24
    %v2280 = vpop.permute.xlu0 %2279
    %2281 = vrot.lane.b32.xlu0 %v2225, 24
    %v2282 = vpop.permute.xlu0 %2281
    %v2288 = vsel %vm325, %v1753, %v2234
    %v2289 = vsel %vm325, %v1755, %v2236
    %v2290 = vsel %vm325, %v1758, %v2238
    %v2291 = vsel %vm325, %v1760, %v2240
    %v2292 = vsel %vm325, %v1763, %v2242
    %v2293 = vsel %vm997, %v2288, %v2254
    %v2294 = vsel %vm997, %v2289, %v2256
    %v2295 = vsel %vm997, %v2290, %v2258
    %v2296 = vsel %vm997, %v2291, %v2260
    %v2297 = vsel %vm997, %v2292, %v2262
    %v2298 = vsel %vm1003, %v2293, %v2274
    %v2299 = vsel %vm1003, %v2294, %v2276
    %v2300 = vsel %vm1003, %v2295, %v2278
    %v2301 = vsel %vm1003, %v2296, %v2280
    %v2302 = vsel %vm1003, %v2297, %v2282
    %v2303 = vpack.c.bf16 %v2299, %v2298
    %v2304 = vpack.c.bf16 %v2301, %v2300
    %v2305 = vpack.c.bf16 %v2302, %v2302
    %2306 = vrot.lane.b32.xlu0 %v1576, 32
    %v2307 = vpop.permute.xlu0 %2306
    %2308 = vrot.lane.b32.xlu0 %v1577, 32
    %v2309 = vpop.permute.xlu0 %2308
    %2313 = vrot.lane.b32.xlu0 %v1567, 32
    %v2314 = vpop.permute.xlu0 %2313
    %v2317 = vsel %vm132, %v2303, 0
    %v2320 = vsel %vm132, %v2304, 0
    %v2323 = vsel %vm132, %v2305, 0
    %2325 = vmatpush.bf16.msra.mxu0 0
    %2326 = vmatpush.bf16.msra.mxu0 0
    %2327 = vmatpush.bf16.msra.mxu0 0
    %2328 = vmatpush.bf16.msra.mxu0 0
    %2329 = vmatpush.bf16.msra.mxu0 0
    %2330 = vmatpush.bf16.msra.mxu0 0
    %2331 = vmatpush.bf16.msra.mxu0 %v2309
    %2332 = vmatpush.bf16.msra.mxu0 %v2307
    %2333 = vmatmul.bf16.gmra.mxu0 %v2317
    %v2334 = vpop.f32.mrf.mxu0
    %v2335 = vadd.f32 %v2314, %v2334
    %v2336 = vpop.f32.mrf.mxu0
    %v2337 = vadd.f32 %v2314, %v2336
    %2338 = vmatmul.bf16.gmra.mxu0 %v2320
    %v2339 = vpop.f32.mrf.mxu0
    %v2340 = vadd.f32 %v2314, %v2339
    %v2341 = vpop.f32.mrf.mxu0
    %v2342 = vadd.f32 %v2314, %v2341
    %2343 = vmatmul.bf16.gmra.mxu0 %v2323
    %v2344 = vpop.f32.mrf.mxu0
    %v2345 = vadd.f32 %v2314, %v2344
    %v2346 = vpop.f32.mrf.mxu0
    %2347 = vdwg.mxu0
    %v2348 = vadd.f32 %v1427, %v2335
    %v2349 = vadd.f32 %v1428, %v2337
    %v2350 = vadd.f32 %v1429, %v2340
    %v2351 = vadd.f32 %v1430, %v2342
    %v2352 = vadd.f32 %v1431, %v2345
    %v2353 = vsel %vm132, %v2348, 0.0
    %2354 = vadd.xlane.f32.xlu0 %v2353
    %v2355 = vpop.xlane.xlu0 %2354
    %v2356 = vsel %vm132, %v2349, 0.0
    %2357 = vadd.xlane.f32.xlu0 %v2356
    %v2358 = vpop.xlane.xlu0 %2357
    %v2359 = vsel %vm132, %v2350, 0.0
    %2360 = vadd.xlane.f32.xlu0 %v2359
    %v2361 = vpop.xlane.xlu0 %2360
    %v2362 = vsel %vm132, %v2351, 0.0
    %2363 = vadd.xlane.f32.xlu0 %v2362
    %v2364 = vpop.xlane.xlu0 %2363
    %v2365 = vsel %vm132, %v2352, 0.0
    %2366 = vadd.xlane.f32.xlu0 %v2365
    %v2367 = vpop.xlane.xlu0 %2366
    %v2368 = vmul.f32 %v2355, %v154
    %v2369 = vmul.f32 %v2358, %v154
    %v2370 = vmul.f32 %v2361, %v154
    %v2371 = vmul.f32 %v2364, %v154
    %v2372 = vmul.f32 %v2367, %v154
    %v2373 = vsub.f32 %v2348, %v2368
    %v2374 = vsub.f32 %v2349, %v2369
    %v2375 = vsub.f32 %v2350, %v2370
    %v2376 = vsub.f32 %v2351, %v2371
    %v2377 = vsub.f32 %v2352, %v2372
    %v2378 = vmul.f32 %v2373, %v2373
    %v2379 = vmul.f32 %v2374, %v2374
    %v2380 = vmul.f32 %v2375, %v2375
    %v2381 = vmul.f32 %v2376, %v2376
    %v2382 = vmul.f32 %v2377, %v2377
    %v2383 = vsel %vm132, %v2378, 0.0
    %2384 = vadd.xlane.f32.xlu0 %v2383
    %v2385 = vpop.xlane.xlu0 %2384
    %v2386 = vsel %vm132, %v2379, 0.0
    %2387 = vadd.xlane.f32.xlu0 %v2386
    %v2388 = vpop.xlane.xlu0 %2387
    %v2389 = vsel %vm132, %v2380, 0.0
    %2390 = vadd.xlane.f32.xlu0 %v2389
    %v2391 = vpop.xlane.xlu0 %2390
    %v2392 = vsel %vm132, %v2381, 0.0
    %2393 = vadd.xlane.f32.xlu0 %v2392
    %v2394 = vpop.xlane.xlu0 %2393
    %v2395 = vsel %vm132, %v2382, 0.0
    %2396 = vadd.xlane.f32.xlu0 %v2395
    %v2397 = vpop.xlane.xlu0 %2396
    %v2398 = vmul.f32 %v2385, %v154
    %v2399 = vmul.f32 %v2388, %v154
    %v2400 = vmul.f32 %v2391, %v154
    %v2401 = vmul.f32 %v2394, %v154
    %v2402 = vmul.f32 %v2397, %v154
    %v2403 = vadd.f32 %v2398, 1e-05
    %v2404 = vadd.f32 %v2399, 1e-05
    %v2405 = vadd.f32 %v2400, 1e-05
    %v2406 = vadd.f32 %v2401, 1e-05
    %v2407 = vadd.f32 %v2402, 1e-05
    %v2408 = vrsqrt.pop %v2403
    %v2409 = vmul.f32 %v2408, %v2403
    %v2410 = vmul.f32 %v2409, %v2408
    %v2411 = vmul.f32 0.5, %v2410
    %v2412 = vsub.f32 1.5, %v2411
    %v2413 = vmul.f32 %v2408, %v2412
    %vm2414 = vweird.f32 %v2403
    %vm2415 = vweird.f32 %v2408
    %vm2416 = vmor %vm2414, %vm2415
    %v2417 = vsel %vm2416, %v2408, %v2413
    %v2418 = vrsqrt.pop %v2404
    %v2419 = vmul.f32 %v2418, %v2404
    %v2420 = vmul.f32 %v2419, %v2418
    %v2421 = vmul.f32 0.5, %v2420
    %v2422 = vsub.f32 1.5, %v2421
    %v2423 = vmul.f32 %v2418, %v2422
    %vm2424 = vweird.f32 %v2404
    %vm2425 = vweird.f32 %v2418
    %vm2426 = vmor %vm2424, %vm2425
    %v2427 = vsel %vm2426, %v2418, %v2423
    %v2428 = vrsqrt.pop %v2405
    %v2429 = vmul.f32 %v2428, %v2405
    %v2430 = vmul.f32 %v2429, %v2428
    %v2431 = vmul.f32 0.5, %v2430
    %v2432 = vsub.f32 1.5, %v2431
    %v2433 = vmul.f32 %v2428, %v2432
    %vm2434 = vweird.f32 %v2405
    %vm2435 = vweird.f32 %v2428
    %vm2436 = vmor %vm2434, %vm2435
    %v2437 = vsel %vm2436, %v2428, %v2433
    %v2438 = vrsqrt.pop %v2406
    %v2439 = vmul.f32 %v2438, %v2406
    %v2440 = vmul.f32 %v2439, %v2438
    %v2441 = vmul.f32 0.5, %v2440
    %v2442 = vsub.f32 1.5, %v2441
    %v2443 = vmul.f32 %v2438, %v2442
    %vm2444 = vweird.f32 %v2406
    %vm2445 = vweird.f32 %v2438
    %vm2446 = vmor %vm2444, %vm2445
    %v2447 = vsel %vm2446, %v2438, %v2443
    %v2448 = vrsqrt.pop %v2407
    %v2449 = vmul.f32 %v2448, %v2407
    %v2450 = vmul.f32 %v2449, %v2448
    %v2451 = vmul.f32 0.5, %v2450
    %v2452 = vsub.f32 1.5, %v2451
    %v2453 = vmul.f32 %v2448, %v2452
    %vm2454 = vweird.f32 %v2407
    %vm2455 = vweird.f32 %v2448
    %vm2456 = vmor %vm2454, %vm2455
    %v2457 = vsel %vm2456, %v2448, %v2453
    %v2458 = vmul.f32 %v2373, %v2417
    %v2459 = vmul.f32 %v2374, %v2427
    %v2460 = vmul.f32 %v2375, %v2437
    %v2461 = vmul.f32 %v2376, %v2447
    %v2462 = vmul.f32 %v2377, %v2457
    %2463 = vrot.lane.b32.xlu0 %v1549, 64
    %v2464 = vpop.permute.xlu0 %2463
    %v2466 = vmul.f32 %v2458, %v2464
    %v2467 = vmul.f32 %v2459, %v2464
    %v2468 = vmul.f32 %v2460, %v2464
    %v2469 = vmul.f32 %v2461, %v2464
    %v2470 = vmul.f32 %v2462, %v2464
    %2471 = vrot.lane.b32.xlu0 %v1549, 32
    %v2472 = vpop.permute.xlu0 %2471
    %v2474 = vadd.f32 %v2466, %v2472
    %v2475 = vadd.f32 %v2467, %v2472
    %v2476 = vadd.f32 %v2468, %v2472
    %v2477 = vadd.f32 %v2469, %v2472
    %v2478 = vadd.f32 %v2470, %v2472
    %v2479 = vpack.c.bf16 %v2475, %v2474
    %v2480 = vpack.c.bf16 %v2477, %v2476
    %v2481 = vpack.c.bf16 %v2478, %v2478
    %v2482 = vperm.slane %v1438, 2
    %v2483 = vunpack.c.h.b16 %v1433
    %v2484 = vunpack.c.h.b16 %v1434
    %v2485 = vunpack.c.h.b16 %v1435
    %v2486 = vunpack.c.h.b16 %v1436
    %v2487 = vpack.c.b16 %v2484, %v2483
    %v2488 = vpack.c.b16 %v2486, %v2485
    %v2492 = vsel %vm132, %v2479, 0
    %v2495 = vsel %vm132, %v2480, 0
    %v2498 = vsel %vm132, %v2481, 0
    %2500 = vmatpush.bf16.msra.mxu0 0
    %2501 = vmatpush.bf16.msra.mxu0 0
    %2502 = vmatpush.bf16.msra.mxu0 0
    %2503 = vmatpush.bf16.msra.mxu0 0
    %2504 = vmatpush.bf16.msra.mxu0 0
    %2505 = vmatpush.bf16.msra.mxu0 0
    %2506 = vmatpush.bf16.msra.mxu0 %v2488
    %2507 = vmatpush.bf16.msra.mxu0 %v2487
    %2508 = vmatmul.bf16.gmra.mxu0 %v2492
    %v2509 = vpop.f32.mrf.mxu0
    %v2510 = vadd.f32 %v2482, %v2509
    %v2511 = vpop.f32.mrf.mxu0
    %v2512 = vadd.f32 %v2482, %v2511
    %2513 = vmatmul.bf16.gmra.mxu0 %v2495
    %v2514 = vpop.f32.mrf.mxu0
    %v2515 = vadd.f32 %v2482, %v2514
    %v2516 = vpop.f32.mrf.mxu0
    %v2517 = vadd.f32 %v2482, %v2516
    %2518 = vmatmul.bf16.gmra.mxu0 %v2498
    %v2519 = vpop.f32.mrf.mxu0
    %v2520 = vadd.f32 %v2482, %v2519
    %v2521 = vpop.f32.mrf.mxu0
    %2522 = vdwg.mxu0
    %v2523 = vxor.u32 %v2510, 2147483648
    %v2524 = vxor.u32 %v2512, 2147483648
    %v2525 = vxor.u32 %v2515, 2147483648
    %v2526 = vxor.u32 %v2517, 2147483648
    %v2527 = vxor.u32 %v2520, 2147483648
    %v2528 = vmul.f32 %v2523, 1.442695
    %v2529 = vpow.pop %v2528
    %v2530 = vmul.f32 %v2524, 1.442695
    %v2531 = vpow.pop %v2530
    %v2532 = vmul.f32 %v2525, 1.442695
    %v2533 = vpow.pop %v2532
    %v2534 = vmul.f32 %v2526, 1.442695
    %v2535 = vpow.pop %v2534
    %v2536 = vmul.f32 %v2527, 1.442695
    %v2537 = vpow.pop %v2536
    %v2538 = vadd.f32 %v2529, 1.0
    %v2539 = vadd.f32 %v2531, 1.0
    %v2540 = vadd.f32 %v2533, 1.0
    %v2541 = vadd.f32 %v2535, 1.0
    %v2542 = vadd.f32 %v2537, 1.0
    %v2543 = vrcp.pop %v2538
    %v2544 = vmul.f32 %v2538, %v2543
    %v2545 = vsub.f32 1.0, %v2544
    %v2546 = vmul.f32 %v2543, %v2545
    %v2547 = vadd.f32 %v2543, %v2546
    %vm2548 = vweird.f32 %v2538
    %vm2549 = vweird.f32 %v2543
    %vm2550 = vmor %vm2548, %vm2549
    %v2551 = vsel %vm2550, %v2543, %v2547
    %v2552 = vand.u32 2147483647, %v2538
    %vm2553 = vcmp.eq.f32.partialorder %v2552, 8.507059e+37
    %v2554 = vand.u32 %v2538, 2147483648
    %v2555 = vor.u32 1.1754944e-38, %v2554
    %v2556 = vsel %vm2553, %v2555, %v2551
    %v2557 = vmul.f32 1.0, %v2556
    %v2558 = vrcp.pop %v2539
    %v2559 = vmul.f32 %v2539, %v2558
    %v2560 = vsub.f32 1.0, %v2559
    %v2561 = vmul.f32 %v2558, %v2560
    %v2562 = vadd.f32 %v2558, %v2561
    %vm2563 = vweird.f32 %v2539
    %vm2564 = vweird.f32 %v2558
    %vm2565 = vmor %vm2563, %vm2564
    %v2566 = vsel %vm2565, %v2558, %v2562
    %v2567 = vand.u32 2147483647, %v2539
    %vm2568 = vcmp.eq.f32.partialorder %v2567, 8.507059e+37
    %v2569 = vand.u32 %v2539, 2147483648
    %v2570 = vor.u32 1.1754944e-38, %v2569
    %v2571 = vsel %vm2568, %v2570, %v2566
    %v2572 = vmul.f32 1.0, %v2571
    %v2573 = vrcp.pop %v2540
    %v2574 = vmul.f32 %v2540, %v2573
    %v2575 = vsub.f32 1.0, %v2574
    %v2576 = vmul.f32 %v2573, %v2575
    %v2577 = vadd.f32 %v2573, %v2576
    %vm2578 = vweird.f32 %v2540
    %vm2579 = vweird.f32 %v2573
    %vm2580 = vmor %vm2578, %vm2579
    %v2581 = vsel %vm2580, %v2573, %v2577
    %v2582 = vand.u32 2147483647, %v2540
    %vm2583 = vcmp.eq.f32.partialorder %v2582, 8.507059e+37
    %v2584 = vand.u32 %v2540, 2147483648
    %v2585 = vor.u32 1.1754944e-38, %v2584
    %v2586 = vsel %vm2583, %v2585, %v2581
    %v2587 = vmul.f32 1.0, %v2586
    %v2588 = vrcp.pop %v2541
    %v2589 = vmul.f32 %v2541, %v2588
    %v2590 = vsub.f32 1.0, %v2589
    %v2591 = vmul.f32 %v2588, %v2590
    %v2592 = vadd.f32 %v2588, %v2591
    %vm2593 = vweird.f32 %v2541
    %vm2594 = vweird.f32 %v2588
    %vm2595 = vmor %vm2593, %vm2594
    %v2596 = vsel %vm2595, %v2588, %v2592
    %v2597 = vand.u32 2147483647, %v2541
    %vm2598 = vcmp.eq.f32.partialorder %v2597, 8.507059e+37
    %v2599 = vand.u32 %v2541, 2147483648
    %v2600 = vor.u32 1.1754944e-38, %v2599
    %v2601 = vsel %vm2598, %v2600, %v2596
    %v2602 = vmul.f32 1.0, %v2601
    %v2603 = vrcp.pop %v2542
    %v2604 = vmul.f32 %v2542, %v2603
    %v2605 = vsub.f32 1.0, %v2604
    %v2606 = vmul.f32 %v2603, %v2605
    %v2607 = vadd.f32 %v2603, %v2606
    %vm2608 = vweird.f32 %v2542
    %vm2609 = vweird.f32 %v2603
    %vm2610 = vmor %vm2608, %vm2609
    %v2611 = vsel %vm2610, %v2603, %v2607
    %v2612 = vand.u32 2147483647, %v2542
    %vm2613 = vcmp.eq.f32.partialorder %v2612, 8.507059e+37
    %v2614 = vand.u32 %v2542, 2147483648
    %v2615 = vor.u32 1.1754944e-38, %v2614
    %v2616 = vsel %vm2613, %v2615, %v2611
    %v2617 = vmul.f32 1.0, %v2616
    %v2618 = vmul.f32 %v2510, %v2557
    %v2619 = vmul.f32 %v2512, %v2572
    %v2620 = vmul.f32 %v2515, %v2587
    %v2621 = vmul.f32 %v2517, %v2602
    %v2622 = vmul.f32 %v2520, %v2617
    %2628 = vrot.lane.b32.xlu0 %v2510, 64
    %v2629 = vpop.permute.xlu0 %2628
    %2630 = vrot.lane.b32.xlu0 %v2512, 64
    %v2631 = vpop.permute.xlu0 %2630
    %2632 = vrot.lane.b32.xlu0 %v2515, 64
    %v2633 = vpop.permute.xlu0 %2632
    %2634 = vrot.lane.b32.xlu0 %v2517, 64
    %v2635 = vpop.permute.xlu0 %2634
    %2636 = vrot.lane.b32.xlu0 %v2520, 64
    %v2637 = vpop.permute.xlu0 %2636
    %v2643 = vmul.f32 %v2618, %v2629
    %v2644 = vmul.f32 %v2619, %v2631
    %v2645 = vmul.f32 %v2620, %v2633
    %v2646 = vmul.f32 %v2621, %v2635
    %v2647 = vmul.f32 %v2622, %v2637
    %v2648 = vpack.c.bf16 %v2644, %v2643
    %v2649 = vpack.c.bf16 %v2646, %v2645
    %v2650 = vpack.c.bf16 %v2647, %v2647
    %s2651 = scalar_lea.vmem %s5, 32
    %v2652 = vld [vmem:[%s2651] sm:$0xf]
    %v2653 = vld [vmem:[%s2651 + $0x4] sm:$0xf]
    %v2654 = vld [vmem:[%s2651 + $0x8] sm:$0xf]
    %v2655 = vld [vmem:[%s2651 + $0xc] sm:$0xf]
    %v2656 = vld [vmem:[%s2651 + $0x10] sm:$0xf]
    %v2657 = vld [vmem:[%s2651 + $0x14] sm:$0xf]
    %v2658 = vld [vmem:[%s2651 + $0x18] sm:$0xf]
    %v2659 = vld [vmem:[%s2651 + $0x1c] sm:$0xf]
    %v2668 = vunpack.c.l.b16 %v2652
    %v2669 = vunpack.c.l.b16 %v2653
    %v2670 = vunpack.c.l.b16 %v2654
    %v2671 = vunpack.c.l.b16 %v2655
    %v2672 = vunpack.c.l.b16 %v2656
    %v2673 = vunpack.c.l.b16 %v2657
    %v2674 = vunpack.c.l.b16 %v2658
    %v2675 = vunpack.c.l.b16 %v2659
    %v2676 = vpack.c.b16 %v2669, %v2668
    %v2677 = vpack.c.b16 %v2671, %v2670
    %v2678 = vpack.c.b16 %v2673, %v2672
    %v2679 = vpack.c.b16 %v2675, %v2674
    %v2685 = vsel %vm94, %v2648, 0
    %v2688 = vsel %vm94, %v2649, 0
    %v2691 = vsel %vm94, %v2650, 0
    %2693 = vmatpush.bf16.msra.mxu0 0
    %2694 = vmatpush.bf16.msra.mxu0 0
    %2695 = vmatpush.bf16.msra.mxu0 0
    %2696 = vmatpush.bf16.msra.mxu0 0
    %2697 = vmatpush.bf16.msra.mxu0 %v2679
    %2698 = vmatpush.bf16.msra.mxu0 %v2678
    %2699 = vmatpush.bf16.msra.mxu0 %v2677
    %2700 = vmatpush.bf16.msra.mxu0 %v2676
    %2701 = vmatmul.bf16.gmra.mxu0 %v2685
    %v2702 = vpop.f32.mrf.mxu0
    %v2703 = vpop.f32.mrf.mxu0
    %2704 = vmatmul.bf16.gmra.mxu0 %v2688
    %v2705 = vpop.f32.mrf.mxu0
    %v2706 = vpop.f32.mrf.mxu0
    %2707 = vmatmul.bf16.gmra.mxu0 %v2691
    %v2708 = vpop.f32.mrf.mxu0
    %v2709 = vadd.f32 0.0, %v2708
    %v2710 = vpop.f32.mrf.mxu0
    %2711 = vdwg.mxu0
    %v2712 = vadd.f32 %v2352, %v2709
    %v2713 = vperm.slane %v1438, 3
    %v2714 = vadd.f32 %v2712, %v2713
    %v2715 = vld [vmem:[%s8] sm:$0x1]
    %v2716 = vsel %vm132, %v2714, 0.0
    %2717 = vadd.xlane.f32.xlu0 %v2716
    %v2718 = vpop.xlane.xlu0 %2717
    %v2719 = vmul.f32 %v2718, %v154
    %v2720 = vsub.f32 %v2714, %v2719
    %v2721 = vmul.f32 %v2720, %v2720
    %v2722 = vsel %vm132, %v2721, 0.0
    %2723 = vadd.xlane.f32.xlu0 %v2722
    %v2724 = vpop.xlane.xlu0 %2723
    %v2725 = vmul.f32 %v2724, %v154
    %v2726 = vadd.f32 %v2725, 1e-05
    %v2727 = vrsqrt.pop %v2726
    %v2728 = vmul.f32 %v2727, %v2726
    %v2729 = vmul.f32 %v2728, %v2727
    %v2730 = vmul.f32 0.5, %v2729
    %v2731 = vsub.f32 1.5, %v2730
    %v2732 = vmul.f32 %v2727, %v2731
    %vm2733 = vweird.f32 %v2726
    %vm2734 = vweird.f32 %v2727
    %vm2735 = vmor %vm2733, %vm2734
    %v2736 = vsel %vm2735, %v2727, %v2732
    %v2737 = vmul.f32 %v2720, %v2736
    %v2739 = vperm.slane %v2715, 0
    %v2741 = vmul.f32 %v2737, %v2739
    %2742 = vrot.lane.b32.xlu0 %v2739, 96
    %v2743 = vpop.permute.xlu0 %2742
    %v2745 = vadd.f32 %v2741, %v2743
    %v2746 = vpack.c.bf16 %v2745, %v2745
    %v2747 = vld [vmem:[%s7] sm:$0xf]
    %v2748 = vld [vmem:[%s7 + $0x4] sm:$0xf]
    %v2749 = vld [vmem:[%s7 + $0x8] sm:$0xf]
    %v2750 = vld [vmem:[%s7 + $0xc] sm:$0xf]
    %v2755 = vunpack.c.l.b16 %v2747
    %v2756 = vunpack.c.l.b16 %v2748
    %v2757 = vunpack.c.l.b16 %v2749
    %v2758 = vunpack.c.l.b16 %v2750
    %v2759 = vpack.c.b16 %v2756, %v2755
    %v2760 = vpack.c.b16 %v2758, %v2757
    %2763 = vrot.lane.b32.xlu0 %v2739, 64
    %v2764 = vpop.permute.xlu0 %2763
    %v2767 = vsel %vm132, %v2746, 0
    %2769 = vmatpush.bf16.msra.mxu0 0
    %2770 = vmatpush.bf16.msra.mxu0 0
    %2771 = vmatpush.bf16.msra.mxu0 0
    %2772 = vmatpush.bf16.msra.mxu0 0
    %2773 = vmatpush.bf16.msra.mxu0 0
    %2774 = vmatpush.bf16.msra.mxu0 0
    %2775 = vmatpush.bf16.msra.mxu0 %v2760
    %2776 = vmatpush.bf16.msra.mxu0 %v2759
    %2777 = vmatmul.bf16.gmra.mxu0 %v2767
    %v2778 = vpop.f32.mrf.mxu0
    %v2779 = vadd.f32 %v2764, %v2778
    %v2780 = vpop.f32.mrf.mxu0
    %2781 = vdwg.mxu0
    %2782 = vst.msk [vmem:[#allocation2] sm:$0xff] %vm325, %v2779
    // Predicated region
    $region38: #{forward.1} parent=1 // pred_check
      _
    $region39: #{forward.1} parent=1 // pred_check_branch
      %2784 = sbr.rel (0) target = $region41
    $region40: #{forward.1} parent=1 // pred_region
      %2786 = vsyncadd [#allocation3], 0
      %s2788 = sshll.u32 [#allocation2], 4
      %s2789 = int_to_ptr.vmem [resolvable:$true] %s2788
      %s2790 = sshll.u32 %s9, 4
      %s2791 = int_to_ptr.hbm [resolvable:$true] %s2790
      %2793 = dma.vmem_to_hbm [thread:$0]  %s2789, 128, %s2791, [#allocation3]
    $region41: #{forward.1} parent=1 // pred_fallthru
      _
    // Predicated region
    $region42: #{forward.1} parent=1 // pred_check
      _
    $region43: #{forward.1} parent=1 // pred_check_branch
      %2795 = sbr.rel (0) target = $region45
    $region44: #{forward.1} parent=1 // pred_region
      %2797 = dma.done [#allocation3], 128
    $region45: #{forward.1} parent=1 // pred_fallthru
      _
    %2798 = vsyncpa [#allocation3], 1

</llo_original>
